<compile_context>
chip_gen: v7x
topology: tpu7x:2x2x1
jax: 0.10.0
libtpu: 0.0.40
codegen_flags: <defaults>
</compile_context>

<pallas_src>
import functools
import math

import jax
import jax.numpy as jnp
from jax.experimental import pallas as pl
from jax.experimental.pallas import tpu as pltpu


# ----------------------------------------------------------------------------
# Kernel: one grid step = (batch b, encoder layer l).
# ----------------------------------------------------------------------------
def _transformer_kernel(xf_ref, w1c_ref, b1c_ref, pw2_ref, pb2_ref,
                        clspos_ref, postok_ref,
                        wqkv_ref, bqkv_ref, wo_ref, bo_ref,
                        n1w_ref, n1b_ref, w1_ref, b1_ref, w2_ref, b2_ref,
                        n2w_ref, n2b_ref, clfw_ref, clfb_ref,
                        o_ref,
                        x_scr,
                        *, T, E, nhead, num_layers, S1p):
    l = pl.program_id(1)
    S1 = T + 1
    hd = E // nhead
    scale = 1.0 / math.sqrt(hd)

    # ---- layer 0: patch embedding (conv folded) + [cls; tokens] + positional embedding ---
    @pl.when(l == 0)
    def _patch_embed():
        xb = xf_ref[0]                                                   # (T, IN*D) bf16
        h = jnp.dot(xb, w1c_ref[...],
                    preferred_element_type=jnp.float32) + b1c_ref[...]
        h = jnp.maximum(h, 0.0)
        tok = jnp.dot(h.astype(jnp.bfloat16), pw2_ref[...],
                      preferred_element_type=jnp.float32) + pb2_ref[...]
        tok = tok + postok_ref[...]                                       # + pos[1:]
        x_scr[pl.ds(0, 1), :] = clspos_ref[...]                           # cls + pos[0]
        x_scr[pl.ds(1, T), :] = tok
        if S1p > S1:                                                      # zero the pad rows
            x_scr[pl.ds(S1, S1p - S1), :] = jnp.zeros((S1p - S1, E), jnp.float32)

    x = x_scr[...]                                                        # (S1p, E) f32

    # ---- self-attention (packed QKV, heads merged via concat; padded keys masked) --------
    qkv = jnp.dot(x.astype(jnp.bfloat16), wqkv_ref[0],
                  preferred_element_type=jnp.float32) + bqkv_ref[0]       # (S1p, 3E)

    if S1p > S1:
        col = jax.lax.broadcasted_iota(jnp.int32, (S1p, S1p), 1)
        kbias = jnp.where(col < S1, 0.0, -1e30)                           # mask pad keys
    else:
        kbias = None

    heads = []
    for hh in range(nhead):
        qh = qkv[:, hh * hd:(hh + 1) * hd] * scale                        # (S1p, hd)
        kh = qkv[:, E + hh * hd:E + (hh + 1) * hd]
        vh = qkv[:, 2 * E + hh * hd:2 * E + (hh + 1) * hd]
        s = jnp.dot(qh, kh.T, preferred_element_type=jnp.float32)         # (S1p, S1p)
        if kbias is not None:
            s = s + kbias
        s = s - jnp.max(s, axis=-1, keepdims=True)
        p = jnp.exp(s)
        p = p / jnp.sum(p, axis=-1, keepdims=True)                        # exact softmax
        heads.append(jnp.dot(p, vh, preferred_element_type=jnp.float32))
    attn = jnp.concatenate(heads, axis=-1)                                # (S1p, E)

    # ---- output projection + residual + LayerNorm1 ----------------------------------------
    sa = jnp.dot(attn.astype(jnp.bfloat16), wo_ref[0],
                 preferred_element_type=jnp.float32) + bo_ref[0]
    y = x + sa
    mu = jnp.mean(y, axis=-1, keepdims=True)
    var = jnp.mean((y - mu) ** 2, axis=-1, keepdims=True)
    y = (y - mu) * jax.lax.rsqrt(var + 1e-5) * n1w_ref[0] + n1b_ref[0]

    # ---- feed-forward + residual + LayerNorm2 ---------------------------------------------
    ffh = jnp.dot(y.astype(jnp.bfloat16), w1_ref[0],
                  preferred_element_type=jnp.float32) + b1_ref[0]
    ffh = jnp.maximum(ffh, 0.0)
    ff = jnp.dot(ffh.astype(jnp.bfloat16), w2_ref[0],
                 preferred_element_type=jnp.float32) + b2_ref[0]
    z = y + ff
    mu2 = jnp.mean(z, axis=-1, keepdims=True)
    var2 = jnp.mean((z - mu2) ** 2, axis=-1, keepdims=True)
    x_new = (z - mu2) * jax.lax.rsqrt(var2 + 1e-5) * n2w_ref[0] + n2b_ref[0]

    x_scr[...] = x_new                                                    # carry to next layer

    # ---- last layer: classifier on the cls row --------------------------------------------
    @pl.when(l == num_layers - 1)
    def _classifier():
        cls_vec = x_new[0:1, :]                                           # (1, E)
        logits = jnp.dot(cls_vec.astype(jnp.bfloat16), clfw_ref[...],
                         preferred_element_type=jnp.float32) + clfb_ref[...]
        o_ref[0] = logits


# ----------------------------------------------------------------------------
# Wrapper: conv folding, bf16 weight casts, layer-streamed pallas_call.
# ----------------------------------------------------------------------------
def transformer_forward(x, params, nhead):
    B, IN, T, C, H, W = x.shape
    D = C * H * W
    ID = IN * D
    E = params['cls_token'].shape[-1]
    D4 = params['pw1'].shape[1]
    L = params['wqkv'].shape[0]
    n_cls = params['clf_w'].shape[1]
    S1 = T + 1
    S1p = ((S1 + 7) // 8) * 8            # pad sequence rows to a sublane multiple

    # (B, IN, T, C, H, W) -> (B, T, IN*C*H*W), channels-last; bf16 halves input DMA.
    xf = jnp.transpose(x, (0, 2, 1, 3, 4, 5)).reshape(B, T, ID).astype(jnp.bfloat16)

    # Fold the 1x1x1 conv (channel mix over IN) into the first patch-embed matmul.
    w1c = (params['conv_w'].reshape(IN, 1, 1) * params['pw1'][None, :, :]).reshape(ID, D4)
    b1c = params['conv_b'][0, 0] * jnp.sum(params['pw1'], axis=0, keepdims=True) + params['pb1']

    # Positional tables passed once (no batch broadcast): cls+pos[0] and pos[1:].
    clspos = params['cls_token'][0] + params['pos_embed'][:, 0, :]        # (1, E)
    postok = params['pos_embed'][0, 1:S1, :]                              # (T, E)

    bf16 = jnp.bfloat16
    inputs = [
        xf,
        w1c.astype(bf16), b1c, params['pw2'].astype(bf16), params['pb2'],
        clspos, postok,
        params['wqkv'].astype(bf16), params['bqkv'],
        params['wo'].astype(bf16), params['bo'],
        params['n1w'], params['n1b'],
        params['w1'].astype(bf16), params['b1'],
        params['w2'].astype(bf16), params['b2'],
        params['n2w'], params['n2b'],
        params['clf_w'].astype(bf16), params['clf_b'],
    ]

    def full_spec(a):
        zeros = (0,) * a.ndim
        return pl.BlockSpec(a.shape, lambda b, l, _z=zeros: _z)

    def layer_spec(a):
        zeros = (0,) * (a.ndim - 1)
        return pl.BlockSpec((1,) + a.shape[1:], lambda b, l, _z=zeros: (l,) + _z)

    in_specs = [
        pl.BlockSpec((1, T, ID), lambda b, l: (b, 0, 0)),                 # xf: per-batch block
        full_spec(inputs[1]), full_spec(inputs[2]),                       # patch-embed weights
        full_spec(inputs[3]), full_spec(inputs[4]),
        full_spec(inputs[5]), full_spec(inputs[6]),                       # cls/pos tables
        layer_spec(inputs[7]), layer_spec(inputs[8]),                     # wqkv / bqkv
        layer_spec(inputs[9]), layer_spec(inputs[10]),                    # wo / bo
        layer_spec(inputs[11]), layer_spec(inputs[12]),                   # ln1
        layer_spec(inputs[13]), layer_spec(inputs[14]),                   # w1 / b1
        layer_spec(inputs[15]), layer_spec(inputs[16]),                   # w2 / b2
        layer_spec(inputs[17]), layer_spec(inputs[18]),                   # ln2
        full_spec(inputs[19]), full_spec(inputs[20]),                     # classifier
    ]

    kernel = functools.partial(_transformer_kernel, T=T, E=E, nhead=nhead,
                               num_layers=L, S1p=S1p)

    out = pl.pallas_call(
        kernel,
        out_shape=jax.ShapeDtypeStruct((B, 1, n_cls), jnp.float32),
        grid=(B, L),
        in_specs=in_specs,
        out_specs=pl.BlockSpec((1, 1, n_cls), lambda b, l: (b, 0, 0)),
        scratch_shapes=[pltpu.VMEM((S1p, E), jnp.float32)],               # running sequence
        compiler_params=pltpu.CompilerParams(
            dimension_semantics=("parallel", "arbitrary")),
    )(*inputs)
    return out[:, 0, :]


# ----------------------------------------------------------------------------
# Deterministic parameter init (shapes follow the PyTorch module's __init__).
# Linear weights are stored pre-transposed as (fan_in, fan_out); per-layer
# weights are stacked along a leading num_layers axis; Wq/Wk/Wv are packed.
# ----------------------------------------------------------------------------
def init_params(key, *, input_dim, in_channels, seq_len, embed_dim, nhead,
                num_layers, num_classes, ffn_dim=2048):
    keys = jax.random.split(key, 6 + num_layers)

    def linear(kk, fan_in, fan_out):
        lim = 1.0 / math.sqrt(fan_in)
        kw, kb = jax.random.split(kk)
        w = jax.random.uniform(kw, (fan_in, fan_out), jnp.float32, -lim, lim)
        b = jax.random.uniform(kb, (1, fan_out), jnp.float32, -lim, lim)
        return w, b

    clim = 1.0 / math.sqrt(in_channels)
    conv_w = jax.random.uniform(keys[0], (1, in_channels), jnp.float32, -clim, clim)
    conv_b = jax.random.uniform(jax.random.fold_in(keys[0], 1), (1, 1), jnp.float32, -clim, clim)
    pw1, pb1 = linear(keys[1], input_dim, input_dim // 4)
    pw2, pb2 = linear(keys[2], input_dim // 4, embed_dim)

    val = math.sqrt(6.0 / float(embed_dim))
    cls_token = jax.random.uniform(keys[3], (1, 1, embed_dim), jnp.float32, -val, val)
    pos_embed = jax.random.uniform(keys[4], (1, seq_len + 1, embed_dim), jnp.float32, -val, val)

    names = ['wqkv', 'bqkv', 'wo', 'bo', 'n1w', 'n1b', 'w1', 'b1', 'w2', 'b2', 'n2w', 'n2b']
    per_layer = {k: [] for k in names}
    for li in range(num_layers):
        kl = jax.random.split(keys[5 + li], 6)
        wq, bq = linear(kl[0], embed_dim, embed_dim)
        wk, bk = linear(kl[1], embed_dim, embed_dim)
        wv, bv = linear(kl[2], embed_dim, embed_dim)
        wo, bo = linear(kl[3], embed_dim, embed_dim)
        w1, b1 = linear(kl[4], embed_dim, ffn_dim)
        w2, b2 = linear(kl[5], ffn_dim, embed_dim)
        per_layer['wqkv'].append(jnp.concatenate([wq, wk, wv], axis=1))   # packed in-proj
        per_layer['bqkv'].append(jnp.concatenate([bq, bk, bv], axis=1))
        per_layer['wo'].append(wo); per_layer['bo'].append(bo)
        per_layer['n1w'].append(jnp.ones((1, embed_dim), jnp.float32))
        per_layer['n1b'].append(jnp.zeros((1, embed_dim), jnp.float32))
        per_layer['w1'].append(w1); per_layer['b1'].append(b1)
        per_layer['w2'].append(w2); per_layer['b2'].append(b2)
        per_layer['n2w'].append(jnp.ones((1, embed_dim), jnp.float32))
        per_layer['n2b'].append(jnp.zeros((1, embed_dim), jnp.float32))

    clf_w, clf_b = linear(keys[5 + num_layers], embed_dim, num_classes)

    params = dict(conv_w=conv_w, conv_b=conv_b, pw1=pw1, pb1=pb1, pw2=pw2, pb2=pb2,
                  cls_token=cls_token, pos_embed=pos_embed, clf_w=clf_w, clf_b=clf_b)
    for k in names:
        params[k] = jnp.stack(per_layer[k], axis=0)
    return params


if __name__ == "__main__":
    # Small shapes consistent with the module:
    #   x: (batch, inputs, time, ch, h, w); input_dim = ch*h*w; time == seq_len
    B, IN, T, C, H, W = 2, 3, 8, 2, 4, 4
    input_dim = C * H * W                    # 32
    embed_dim, nhead, num_layers, num_classes = 32, 4, 2, 5

    key = jax.random.PRNGKey(0)
    pkey, xkey = jax.random.split(key)
    params = init_params(pkey, input_dim=input_dim, in_channels=IN, seq_len=T,
                         embed_dim=embed_dim, nhead=nhead,
                         num_layers=num_layers, num_classes=num_classes)
    x = jax.random.normal(xkey, (B, IN, T, C, H, W), jnp.float32)

    fwd = jax.jit(functools.partial(transformer_forward, nhead=nhead))
    logits = fwd(x, params)
    jax.block_until_ready(logits)
    assert logits.shape == (B, num_classes)
    assert bool(jnp.all(jnp.isfinite(logits)))
    # TODO(synk): dropout (p=0.1 in nn.TransformerEncoderLayer) is modeled as identity (eval mode).
    print("KERNEL_OK")
</pallas_src>

<mosaic_0001>
module attributes {stable_mosaic.version = 11 : i64} {
  func.func @_transformer_kernel(%arg0: i32, %arg1: i32, %arg2: memref<1x8x96xbf16, #tpu.memory_space<vmem>>, %arg3: memref<96x8xbf16, #tpu.memory_space<vmem>>, %arg4: memref<1x8xf32, #tpu.memory_space<vmem>>, %arg5: memref<8x32xbf16, #tpu.memory_space<vmem>>, %arg6: memref<1x32xf32, #tpu.memory_space<vmem>>, %arg7: memref<1x32xf32, #tpu.memory_space<vmem>>, %arg8: memref<8x32xf32, #tpu.memory_space<vmem>>, %arg9: memref<1x32x96xbf16, #tpu.memory_space<vmem>>, %arg10: memref<1x1x96xf32, #tpu.memory_space<vmem>>, %arg11: memref<1x32x32xbf16, #tpu.memory_space<vmem>>, %arg12: memref<1x1x32xf32, #tpu.memory_space<vmem>>, %arg13: memref<1x1x32xf32, #tpu.memory_space<vmem>>, %arg14: memref<1x1x32xf32, #tpu.memory_space<vmem>>, %arg15: memref<1x32x2048xbf16, #tpu.memory_space<vmem>>, %arg16: memref<1x1x2048xf32, #tpu.memory_space<vmem>>, %arg17: memref<1x2048x32xbf16, #tpu.memory_space<vmem>>, %arg18: memref<1x1x32xf32, #tpu.memory_space<vmem>>, %arg19: memref<1x1x32xf32, #tpu.memory_space<vmem>>, %arg20: memref<1x1x32xf32, #tpu.memory_space<vmem>>, %arg21: memref<32x5xbf16, #tpu.memory_space<vmem>>, %arg22: memref<1x5xf32, #tpu.memory_space<vmem>>, %arg23: memref<1x1x5xf32, #tpu.memory_space<vmem>>, %arg24: memref<16x32xf32, #tpu.memory_space<vmem>>) attributes {dimension_semantics = [#tpu.dimension_semantics<parallel>, #tpu.dimension_semantics<arbitrary>], iteration_bounds = array<i64: 2, 2>, scalar_prefetch = 0 : i64, scratch_operands = 1 : i64, tpu.core_type = #tpu.core_type<tc>, window_params = [{transform_indices = @transform_0, window_bounds = array<i64: 1, 8, 96>}, {pipeline_mode = #tpu.pipeline_mode<synchronous>, transform_indices = @transform_1, window_bounds = array<i64: 96, 8>}, {pipeline_mode = #tpu.pipeline_mode<synchronous>, transform_indices = @transform_2, window_bounds = array<i64: 1, 8>}, {pipeline_mode = #tpu.pipeline_mode<synchronous>, transform_indices = @transform_3, window_bounds = array<i64: 8, 32>}, {pipeline_mode = #tpu.pipeline_mode<synchronous>, transform_indices = @transform_4, window_bounds = array<i64: 1, 32>}, {pipeline_mode = #tpu.pipeline_mode<synchronous>, transform_indices = @transform_5, window_bounds = array<i64: 1, 32>}, {pipeline_mode = #tpu.pipeline_mode<synchronous>, transform_indices = @transform_6, window_bounds = array<i64: 8, 32>}, {transform_indices = @transform_7, window_bounds = array<i64: 1, 32, 96>}, {transform_indices = @transform_8, window_bounds = array<i64: 1, 1, 96>}, {transform_indices = @transform_9, window_bounds = array<i64: 1, 32, 32>}, {transform_indices = @transform_10, window_bounds = array<i64: 1, 1, 32>}, {transform_indices = @transform_11, window_bounds = array<i64: 1, 1, 32>}, {transform_indices = @transform_12, window_bounds = array<i64: 1, 1, 32>}, {transform_indices = @transform_13, window_bounds = array<i64: 1, 32, 2048>}, {transform_indices = @transform_14, window_bounds = array<i64: 1, 1, 2048>}, {transform_indices = @transform_15, window_bounds = array<i64: 1, 2048, 32>}, {transform_indices = @transform_16, window_bounds = array<i64: 1, 1, 32>}, {transform_indices = @transform_17, window_bounds = array<i64: 1, 1, 32>}, {transform_indices = @transform_18, window_bounds = array<i64: 1, 1, 32>}, {pipeline_mode = #tpu.pipeline_mode<synchronous>, transform_indices = @transform_19, window_bounds = array<i64: 32, 5>}, {pipeline_mode = #tpu.pipeline_mode<synchronous>, transform_indices = @transform_20, window_bounds = array<i64: 1, 5>}, {transform_indices = @transform_21, window_bounds = array<i64: 1, 1, 5>}]} {
    %c0_i32 = arith.constant 0 : i32
    %0 = arith.cmpi eq, %arg1, %c0_i32 : i32
    %1 = arith.extui %0 : i1 to i32
    %c0_i32_0 = arith.constant 0 : i32
    %2 = arith.cmpi ne, %1, %c0_i32_0 : i32
    scf.if %2 {
      %c0_77 = arith.constant 0 : index
      %c0_78 = arith.constant 0 : index
      %c0_79 = arith.constant 0 : index
      %175 = vector.load %arg2[%c0_77, %c0_78, %c0_79] : memref<1x8x96xbf16, #tpu.memory_space<vmem>>, vector<1x8x96xbf16>
      %176 = vector.shape_cast %175 : vector<1x8x96xbf16> to vector<8x96xbf16>
      %c0_80 = arith.constant 0 : index
      %c0_81 = arith.constant 0 : index
      %177 = vector.load %arg3[%c0_80, %c0_81] : memref<96x8xbf16, #tpu.memory_space<vmem>>, vector<96x8xbf16>
      %cst_82 = arith.constant dense<0.000000e+00> : vector<8x8xf32>
      %178 = tpu.matmul %176, %177, %cst_82 {dimension_numbers = #tpu.dot_dimension_numbers<[1], [0], [0], [1], [0, 0, 1, 1], [], []>} : vector<8x96xbf16>, vector<96x8xbf16>, vector<8x8xf32> -> vector<8x8xf32>
      %c0_83 = arith.constant 0 : index
      %c0_84 = arith.constant 0 : index
      %179 = vector.load %arg4[%c0_83, %c0_84] : memref<1x8xf32, #tpu.memory_space<vmem>>, vector<1x8xf32>
      %180 = vector.broadcast %179 : vector<1x8xf32> to vector<8x8xf32>
      %181 = arith.addf %178, %180 : vector<8x8xf32>
      %cst_85 = arith.constant 0.000000e+00 : f32
      %182 = vector.broadcast %cst_85 : f32 to vector<8x8xf32>
      %183 = arith.maximumf %181, %182 : vector<8x8xf32>
      %184 = arith.truncf %183 : vector<8x8xf32> to vector<8x8xbf16>
      %c0_86 = arith.constant 0 : index
      %c0_87 = arith.constant 0 : index
      %185 = vector.load %arg5[%c0_86, %c0_87] : memref<8x32xbf16, #tpu.memory_space<vmem>>, vector<8x32xbf16>
      %cst_88 = arith.constant dense<0.000000e+00> : vector<8x32xf32>
      %186 = tpu.matmul %184, %185, %cst_88 {dimension_numbers = #tpu.dot_dimension_numbers<[1], [0], [0], [1], [0, 0, 1, 1], [], []>} : vector<8x8xbf16>, vector<8x32xbf16>, vector<8x32xf32> -> vector<8x32xf32>
      %c0_89 = arith.constant 0 : index
      %c0_90 = arith.constant 0 : index
      %187 = vector.load %arg6[%c0_89, %c0_90] : memref<1x32xf32, #tpu.memory_space<vmem>>, vector<1x32xf32>
      %188 = vector.broadcast %187 : vector<1x32xf32> to vector<8x32xf32>
      %189 = arith.addf %186, %188 : vector<8x32xf32>
      %c0_91 = arith.constant 0 : index
      %c0_92 = arith.constant 0 : index
      %190 = vector.load %arg8[%c0_91, %c0_92] : memref<8x32xf32, #tpu.memory_space<vmem>>, vector<8x32xf32>
      %191 = arith.addf %189, %190 : vector<8x32xf32>
      %c0_93 = arith.constant 0 : index
      %c0_94 = arith.constant 0 : index
      %192 = vector.load %arg7[%c0_93, %c0_94] : memref<1x32xf32, #tpu.memory_space<vmem>>, vector<1x32xf32>
      %c0_95 = arith.constant 0 : index
      %c0_96 = arith.constant 0 : index
      %193 = vector.load %arg24[%c0_95, %c0_96] : memref<16x32xf32, #tpu.memory_space<vmem>>, vector<1x32xf32>
      tpu.vector_store %arg24[%c0_95, %c0_96], %192 {strides = array<i32>} : memref<16x32xf32, #tpu.memory_space<vmem>>, vector<1x32xf32>,
      %c1 = arith.constant 1 : index
      %c0_97 = arith.constant 0 : index
      %194 = vector.load %arg24[%c1, %c0_97] : memref<16x32xf32, #tpu.memory_space<vmem>>, vector<8x32xf32>
      tpu.vector_store %arg24[%c1, %c0_97], %191 {strides = array<i32>} : memref<16x32xf32, #tpu.memory_space<vmem>>, vector<8x32xf32>,
      %cst_98 = arith.constant 0.000000e+00 : f32
      %195 = vector.broadcast %cst_98 : f32 to vector<7x32xf32>
      %c9 = arith.constant 9 : index
      %c0_99 = arith.constant 0 : index
      %196 = vector.load %arg24[%c9, %c0_99] : memref<16x32xf32, #tpu.memory_space<vmem>>, vector<7x32xf32>
      tpu.vector_store %arg24[%c9, %c0_99], %195 {strides = array<i32>} : memref<16x32xf32, #tpu.memory_space<vmem>>, vector<7x32xf32>,
    } else {
    }
    %c0 = arith.constant 0 : index
    %c0_1 = arith.constant 0 : index
    %3 = vector.load %arg24[%c0, %c0_1] : memref<16x32xf32, #tpu.memory_space<vmem>>, vector<16x32xf32>
    %4 = arith.truncf %3 : vector<16x32xf32> to vector<16x32xbf16>
    %c0_2 = arith.constant 0 : index
    %c0_3 = arith.constant 0 : index
    %c0_4 = arith.constant 0 : index
    %5 = vector.load %arg9[%c0_2, %c0_3, %c0_4] : memref<1x32x96xbf16, #tpu.memory_space<vmem>>, vector<1x32x96xbf16>
    %6 = vector.shape_cast %5 : vector<1x32x96xbf16> to vector<32x96xbf16>
    %cst = arith.constant dense<0.000000e+00> : vector<16x96xf32>
    %7 = tpu.matmul %4, %6, %cst {dimension_numbers = #tpu.dot_dimension_numbers<[1], [0], [0], [1], [0, 0, 1, 1], [], []>} : vector<16x32xbf16>, vector<32x96xbf16>, vector<16x96xf32> -> vector<16x96xf32>
    %c0_5 = arith.constant 0 : index
    %c0_6 = arith.constant 0 : index
    %c0_7 = arith.constant 0 : index
    %8 = vector.load %arg10[%c0_5, %c0_6, %c0_7] : memref<1x1x96xf32, #tpu.memory_space<vmem>>, vector<1x1x96xf32>
    %9 = vector.shape_cast %8 : vector<1x1x96xf32> to vector<1x96xf32>
    %10 = vector.broadcast %9 : vector<1x96xf32> to vector<16x96xf32>
    %11 = arith.addf %7, %10 : vector<16x96xf32>
    %12 = tpu.iota {dimensions = array<i32: 1>} : vector<16x16xi32>
    %c9_i32 = arith.constant 9 : i32
    %13 = vector.broadcast %c9_i32 : i32 to vector<16x16xi32>
    %14 = arith.cmpi slt, %12, %13 : vector<16x16xi32>
    %cst_8 = arith.constant 0.000000e+00 : f32
    %cst_9 = arith.constant -1.000000e+30 : f32
    %15 = vector.broadcast %cst_8 : f32 to vector<16x16xf32>
    %16 = vector.broadcast %cst_9 : f32 to vector<16x16xf32>
    %17 = arith.select %14, %15, %16 : vector<16x16xi1>, vector<16x16xf32>
    %18 = vector.extract_strided_slice %11 {offsets = [0, 0], sizes = [16, 8], strides = [1, 1]} : vector<16x96xf32> to vector<16x8xf32>
    %cst_10 = arith.constant 0.353553385 : f32
    %19 = vector.broadcast %cst_10 : f32 to vector<16x8xf32>
    %20 = arith.mulf %18, %19 : vector<16x8xf32>
    %21 = vector.extract_strided_slice %11 {offsets = [0, 32], sizes = [16, 8], strides = [1, 1]} : vector<16x96xf32> to vector<16x8xf32>
    %22 = vector.extract_strided_slice %11 {offsets = [0, 64], sizes = [16, 8], strides = [1, 1]} : vector<16x96xf32> to vector<16x8xf32>
    %23 = tpu.transpose %21, [1, 0] : vector<16x8xf32> -> vector<8x16xf32>
    %cst_11 = arith.constant dense<0.000000e+00> : vector<16x16xf32>
    %24 = tpu.matmul %20, %23, %cst_11 {dimension_numbers = #tpu.dot_dimension_numbers<[1], [0], [0], [1], [0, 0, 1, 1], [], []>} : vector<16x8xf32>, vector<8x16xf32>, vector<16x16xf32> -> vector<16x16xf32>
    %25 = arith.addf %24, %17 : vector<16x16xf32>
    %cst_12 = arith.constant dense<0xFF800000> : vector<16xf32>
    %26 = vector.multi_reduction <maximumf>, %25, %cst_12 [1] : vector<16x16xf32> to vector<16xf32>
    %27 = vector.shape_cast %26 : vector<16xf32> to vector<16x1xf32>
    %28 = vector.broadcast %27 : vector<16x1xf32> to vector<16x16xf32>
    %29 = arith.subf %25, %28 : vector<16x16xf32>
    %30 = math.exp %29 : vector<16x16xf32>
    %cst_13 = arith.constant dense<0.000000e+00> : vector<16xf32>
    %31 = vector.multi_reduction <add>, %30, %cst_13 [1] : vector<16x16xf32> to vector<16xf32>
    %32 = vector.shape_cast %31 : vector<16xf32> to vector<16x1xf32>
    %33 = vector.broadcast %32 : vector<16x1xf32> to vector<16x16xf32>
    %34 = arith.divf %30, %33 : vector<16x16xf32>
    %cst_14 = arith.constant dense<0.000000e+00> : vector<16x8xf32>
    %35 = tpu.matmul %34, %22, %cst_14 {dimension_numbers = #tpu.dot_dimension_numbers<[1], [0], [0], [1], [0, 0, 1, 1], [], []>} : vector<16x16xf32>, vector<16x8xf32>, vector<16x8xf32> -> vector<16x8xf32>
    %36 = vector.extract_strided_slice %11 {offsets = [0, 8], sizes = [16, 8], strides = [1, 1]} : vector<16x96xf32> to vector<16x8xf32>
    %cst_15 = arith.constant 0.353553385 : f32
    %37 = vector.broadcast %cst_15 : f32 to vector<16x8xf32>
    %38 = arith.mulf %36, %37 : vector<16x8xf32>
    %39 = vector.extract_strided_slice %11 {offsets = [0, 40], sizes = [16, 8], strides = [1, 1]} : vector<16x96xf32> to vector<16x8xf32>
    %40 = vector.extract_strided_slice %11 {offsets = [0, 72], sizes = [16, 8], strides = [1, 1]} : vector<16x96xf32> to vector<16x8xf32>
    %41 = tpu.transpose %39, [1, 0] : vector<16x8xf32> -> vector<8x16xf32>
    %cst_16 = arith.constant dense<0.000000e+00> : vector<16x16xf32>
    %42 = tpu.matmul %38, %41, %cst_16 {dimension_numbers = #tpu.dot_dimension_numbers<[1], [0], [0], [1], [0, 0, 1, 1], [], []>} : vector<16x8xf32>, vector<8x16xf32>, vector<16x16xf32> -> vector<16x16xf32>
    %43 = arith.addf %42, %17 : vector<16x16xf32>
    %cst_17 = arith.constant dense<0xFF800000> : vector<16xf32>
    %44 = vector.multi_reduction <maximumf>, %43, %cst_17 [1] : vector<16x16xf32> to vector<16xf32>
    %45 = vector.shape_cast %44 : vector<16xf32> to vector<16x1xf32>
    %46 = vector.broadcast %45 : vector<16x1xf32> to vector<16x16xf32>
    %47 = arith.subf %43, %46 : vector<16x16xf32>
    %48 = math.exp %47 : vector<16x16xf32>
    %cst_18 = arith.constant dense<0.000000e+00> : vector<16xf32>
    %49 = vector.multi_reduction <add>, %48, %cst_18 [1] : vector<16x16xf32> to vector<16xf32>
    %50 = vector.shape_cast %49 : vector<16xf32> to vector<16x1xf32>
    %51 = vector.broadcast %50 : vector<16x1xf32> to vector<16x16xf32>
    %52 = arith.divf %48, %51 : vector<16x16xf32>
    %cst_19 = arith.constant dense<0.000000e+00> : vector<16x8xf32>
    %53 = tpu.matmul %52, %40, %cst_19 {dimension_numbers = #tpu.dot_dimension_numbers<[1], [0], [0], [1], [0, 0, 1, 1], [], []>} : vector<16x16xf32>, vector<16x8xf32>, vector<16x8xf32> -> vector<16x8xf32>
    %54 = vector.extract_strided_slice %11 {offsets = [0, 16], sizes = [16, 8], strides = [1, 1]} : vector<16x96xf32> to vector<16x8xf32>
    %cst_20 = arith.constant 0.353553385 : f32
    %55 = vector.broadcast %cst_20 : f32 to vector<16x8xf32>
    %56 = arith.mulf %54, %55 : vector<16x8xf32>
    %57 = vector.extract_strided_slice %11 {offsets = [0, 48], sizes = [16, 8], strides = [1, 1]} : vector<16x96xf32> to vector<16x8xf32>
    %58 = vector.extract_strided_slice %11 {offsets = [0, 80], sizes = [16, 8], strides = [1, 1]} : vector<16x96xf32> to vector<16x8xf32>
    %59 = tpu.transpose %57, [1, 0] : vector<16x8xf32> -> vector<8x16xf32>
    %cst_21 = arith.constant dense<0.000000e+00> : vector<16x16xf32>
    %60 = tpu.matmul %56, %59, %cst_21 {dimension_numbers = #tpu.dot_dimension_numbers<[1], [0], [0], [1], [0, 0, 1, 1], [], []>} : vector<16x8xf32>, vector<8x16xf32>, vector<16x16xf32> -> vector<16x16xf32>
    %61 = arith.addf %60, %17 : vector<16x16xf32>
    %cst_22 = arith.constant dense<0xFF800000> : vector<16xf32>
    %62 = vector.multi_reduction <maximumf>, %61, %cst_22 [1] : vector<16x16xf32> to vector<16xf32>
    %63 = vector.shape_cast %62 : vector<16xf32> to vector<16x1xf32>
    %64 = vector.broadcast %63 : vector<16x1xf32> to vector<16x16xf32>
    %65 = arith.subf %61, %64 : vector<16x16xf32>
    %66 = math.exp %65 : vector<16x16xf32>
    %cst_23 = arith.constant dense<0.000000e+00> : vector<16xf32>
    %67 = vector.multi_reduction <add>, %66, %cst_23 [1] : vector<16x16xf32> to vector<16xf32>
    %68 = vector.shape_cast %67 : vector<16xf32> to vector<16x1xf32>
    %69 = vector.broadcast %68 : vector<16x1xf32> to vector<16x16xf32>
    %70 = arith.divf %66, %69 : vector<16x16xf32>
    %cst_24 = arith.constant dense<0.000000e+00> : vector<16x8xf32>
    %71 = tpu.matmul %70, %58, %cst_24 {dimension_numbers = #tpu.dot_dimension_numbers<[1], [0], [0], [1], [0, 0, 1, 1], [], []>} : vector<16x16xf32>, vector<16x8xf32>, vector<16x8xf32> -> vector<16x8xf32>
    %72 = vector.extract_strided_slice %11 {offsets = [0, 24], sizes = [16, 8], strides = [1, 1]} : vector<16x96xf32> to vector<16x8xf32>
    %cst_25 = arith.constant 0.353553385 : f32
    %73 = vector.broadcast %cst_25 : f32 to vector<16x8xf32>
    %74 = arith.mulf %72, %73 : vector<16x8xf32>
    %75 = vector.extract_strided_slice %11 {offsets = [0, 56], sizes = [16, 8], strides = [1, 1]} : vector<16x96xf32> to vector<16x8xf32>
    %76 = vector.extract_strided_slice %11 {offsets = [0, 88], sizes = [16, 8], strides = [1, 1]} : vector<16x96xf32> to vector<16x8xf32>
    %77 = tpu.transpose %75, [1, 0] : vector<16x8xf32> -> vector<8x16xf32>
    %cst_26 = arith.constant dense<0.000000e+00> : vector<16x16xf32>
    %78 = tpu.matmul %74, %77, %cst_26 {dimension_numbers = #tpu.dot_dimension_numbers<[1], [0], [0], [1], [0, 0, 1, 1], [], []>} : vector<16x8xf32>, vector<8x16xf32>, vector<16x16xf32> -> vector<16x16xf32>
    %79 = arith.addf %78, %17 : vector<16x16xf32>
    %cst_27 = arith.constant dense<0xFF800000> : vector<16xf32>
    %80 = vector.multi_reduction <maximumf>, %79, %cst_27 [1] : vector<16x16xf32> to vector<16xf32>
    %81 = vector.shape_cast %80 : vector<16xf32> to vector<16x1xf32>
    %82 = vector.broadcast %81 : vector<16x1xf32> to vector<16x16xf32>
    %83 = arith.subf %79, %82 : vector<16x16xf32>
    %84 = math.exp %83 : vector<16x16xf32>
    %cst_28 = arith.constant dense<0.000000e+00> : vector<16xf32>
    %85 = vector.multi_reduction <add>, %84, %cst_28 [1] : vector<16x16xf32> to vector<16xf32>
    %86 = vector.shape_cast %85 : vector<16xf32> to vector<16x1xf32>
    %87 = vector.broadcast %86 : vector<16x1xf32> to vector<16x16xf32>
    %88 = arith.divf %84, %87 : vector<16x16xf32>
    %cst_29 = arith.constant dense<0.000000e+00> : vector<16x8xf32>
    %89 = tpu.matmul %88, %76, %cst_29 {dimension_numbers = #tpu.dot_dimension_numbers<[1], [0], [0], [1], [0, 0, 1, 1], [], []>} : vector<16x16xf32>, vector<16x8xf32>, vector<16x8xf32> -> vector<16x8xf32>
    %90 = tpu.concatenate %35, %53, %71, %89 in 1 : vector<16x8xf32>, vector<16x8xf32>, vector<16x8xf32>, vector<16x8xf32> -> vector<16x32xf32>
    %91 = arith.truncf %90 : vector<16x32xf32> to vector<16x32xbf16>
    %c0_30 = arith.constant 0 : index
    %c0_31 = arith.constant 0 : index
    %c0_32 = arith.constant 0 : index
    %92 = vector.load %arg11[%c0_30, %c0_31, %c0_32] : memref<1x32x32xbf16, #tpu.memory_space<vmem>>, vector<1x32x32xbf16>
    %93 = vector.shape_cast %92 : vector<1x32x32xbf16> to vector<32x32xbf16>
    %cst_33 = arith.constant dense<0.000000e+00> : vector<16x32xf32>
    %94 = tpu.matmul %91, %93, %cst_33 {dimension_numbers = #tpu.dot_dimension_numbers<[1], [0], [0], [1], [0, 0, 1, 1], [], []>} : vector<16x32xbf16>, vector<32x32xbf16>, vector<16x32xf32> -> vector<16x32xf32>
    %c0_34 = arith.constant 0 : index
    %c0_35 = arith.constant 0 : index
    %c0_36 = arith.constant 0 : index
    %95 = vector.load %arg12[%c0_34, %c0_35, %c0_36] : memref<1x1x32xf32, #tpu.memory_space<vmem>>, vector<1x1x32xf32>
    %96 = vector.shape_cast %95 : vector<1x1x32xf32> to vector<1x32xf32>
    %97 = vector.broadcast %96 : vector<1x32xf32> to vector<16x32xf32>
    %98 = arith.addf %94, %97 : vector<16x32xf32>
    %99 = arith.addf %3, %98 : vector<16x32xf32>
    %cst_37 = arith.constant dense<0.000000e+00> : vector<16xf32>
    %100 = vector.multi_reduction <add>, %99, %cst_37 [1] : vector<16x32xf32> to vector<16xf32>
    %101 = vector.shape_cast %100 : vector<16xf32> to vector<16x1xf32>
    %cst_38 = arith.constant 3.200000e+01 : f32
    %102 = vector.broadcast %cst_38 : f32 to vector<16x1xf32>
    %103 = arith.divf %101, %102 : vector<16x1xf32>
    %104 = vector.broadcast %103 : vector<16x1xf32> to vector<16x32xf32>
    %105 = arith.subf %99, %104 : vector<16x32xf32>
    %106 = arith.mulf %105, %105 : vector<16x32xf32>
    %cst_39 = arith.constant dense<0.000000e+00> : vector<16xf32>
    %107 = vector.multi_reduction <add>, %106, %cst_39 [1] : vector<16x32xf32> to vector<16xf32>
    %108 = vector.shape_cast %107 : vector<16xf32> to vector<16x1xf32>
    %cst_40 = arith.constant 3.200000e+01 : f32
    %109 = vector.broadcast %cst_40 : f32 to vector<16x1xf32>
    %110 = arith.divf %108, %109 : vector<16x1xf32>
    %111 = vector.broadcast %103 : vector<16x1xf32> to vector<16x32xf32>
    %112 = arith.subf %99, %111 : vector<16x32xf32>
    %cst_41 = arith.constant 9.99999974E-6 : f32
    %113 = vector.broadcast %cst_41 : f32 to vector<16x1xf32>
    %114 = arith.addf %110, %113 : vector<16x1xf32>
    %115 = math.rsqrt %114 : vector<16x1xf32>
    %116 = vector.broadcast %115 : vector<16x1xf32> to vector<16x32xf32>
    %117 = arith.mulf %112, %116 : vector<16x32xf32>
    %c0_42 = arith.constant 0 : index
    %c0_43 = arith.constant 0 : index
    %c0_44 = arith.constant 0 : index
    %118 = vector.load %arg13[%c0_42, %c0_43, %c0_44] : memref<1x1x32xf32, #tpu.memory_space<vmem>>, vector<1x1x32xf32>
    %119 = vector.shape_cast %118 : vector<1x1x32xf32> to vector<1x32xf32>
    %120 = vector.broadcast %119 : vector<1x32xf32> to vector<16x32xf32>
    %121 = arith.mulf %117, %120 : vector<16x32xf32>
    %c0_45 = arith.constant 0 : index
    %c0_46 = arith.constant 0 : index
    %c0_47 = arith.constant 0 : index
    %122 = vector.load %arg14[%c0_45, %c0_46, %c0_47] : memref<1x1x32xf32, #tpu.memory_space<vmem>>, vector<1x1x32xf32>
    %123 = vector.shape_cast %122 : vector<1x1x32xf32> to vector<1x32xf32>
    %124 = vector.broadcast %123 : vector<1x32xf32> to vector<16x32xf32>
    %125 = arith.addf %121, %124 : vector<16x32xf32>
    %126 = arith.truncf %125 : vector<16x32xf32> to vector<16x32xbf16>
    %c0_48 = arith.constant 0 : index
    %c0_49 = arith.constant 0 : index
    %c0_50 = arith.constant 0 : index
    %127 = vector.load %arg15[%c0_48, %c0_49, %c0_50] : memref<1x32x2048xbf16, #tpu.memory_space<vmem>>, vector<1x32x2048xbf16>
    %128 = vector.shape_cast %127 : vector<1x32x2048xbf16> to vector<32x2048xbf16>
    %cst_51 = arith.constant dense<0.000000e+00> : vector<16x2048xf32>
    %129 = tpu.matmul %126, %128, %cst_51 {dimension_numbers = #tpu.dot_dimension_numbers<[1], [0], [0], [1], [0, 0, 1, 1], [], []>} : vector<16x32xbf16>, vector<32x2048xbf16>, vector<16x2048xf32> -> vector<16x2048xf32>
    %c0_52 = arith.constant 0 : index
    %c0_53 = arith.constant 0 : index
    %c0_54 = arith.constant 0 : index
    %130 = vector.load %arg16[%c0_52, %c0_53, %c0_54] : memref<1x1x2048xf32, #tpu.memory_space<vmem>>, vector<1x1x2048xf32>
    %131 = vector.shape_cast %130 : vector<1x1x2048xf32> to vector<1x2048xf32>
    %132 = vector.broadcast %131 : vector<1x2048xf32> to vector<16x2048xf32>
    %133 = arith.addf %129, %132 : vector<16x2048xf32>
    %cst_55 = arith.constant 0.000000e+00 : f32
    %134 = vector.broadcast %cst_55 : f32 to vector<16x2048xf32>
    %135 = arith.maximumf %133, %134 : vector<16x2048xf32>
    %136 = arith.truncf %135 : vector<16x2048xf32> to vector<16x2048xbf16>
    %c0_56 = arith.constant 0 : index
    %c0_57 = arith.constant 0 : index
    %c0_58 = arith.constant 0 : index
    %137 = vector.load %arg17[%c0_56, %c0_57, %c0_58] : memref<1x2048x32xbf16, #tpu.memory_space<vmem>>, vector<1x2048x32xbf16>
    %138 = vector.shape_cast %137 : vector<1x2048x32xbf16> to vector<2048x32xbf16>
    %cst_59 = arith.constant dense<0.000000e+00> : vector<16x32xf32>
    %139 = tpu.matmul %136, %138, %cst_59 {dimension_numbers = #tpu.dot_dimension_numbers<[1], [0], [0], [1], [0, 0, 1, 1], [], []>} : vector<16x2048xbf16>, vector<2048x32xbf16>, vector<16x32xf32> -> vector<16x32xf32>
    %c0_60 = arith.constant 0 : index
    %c0_61 = arith.constant 0 : index
    %c0_62 = arith.constant 0 : index
    %140 = vector.load %arg18[%c0_60, %c0_61, %c0_62] : memref<1x1x32xf32, #tpu.memory_space<vmem>>, vector<1x1x32xf32>
    %141 = vector.shape_cast %140 : vector<1x1x32xf32> to vector<1x32xf32>
    %142 = vector.broadcast %141 : vector<1x32xf32> to vector<16x32xf32>
    %143 = arith.addf %139, %142 : vector<16x32xf32>
    %144 = arith.addf %125, %143 : vector<16x32xf32>
    %cst_63 = arith.constant dense<0.000000e+00> : vector<16xf32>
    %145 = vector.multi_reduction <add>, %144, %cst_63 [1] : vector<16x32xf32> to vector<16xf32>
    %146 = vector.shape_cast %145 : vector<16xf32> to vector<16x1xf32>
    %cst_64 = arith.constant 3.200000e+01 : f32
    %147 = vector.broadcast %cst_64 : f32 to vector<16x1xf32>
    %148 = arith.divf %146, %147 : vector<16x1xf32>
    %149 = vector.broadcast %148 : vector<16x1xf32> to vector<16x32xf32>
    %150 = arith.subf %144, %149 : vector<16x32xf32>
    %151 = arith.mulf %150, %150 : vector<16x32xf32>
    %cst_65 = arith.constant dense<0.000000e+00> : vector<16xf32>
    %152 = vector.multi_reduction <add>, %151, %cst_65 [1] : vector<16x32xf32> to vector<16xf32>
    %153 = vector.shape_cast %152 : vector<16xf32> to vector<16x1xf32>
    %cst_66 = arith.constant 3.200000e+01 : f32
    %154 = vector.broadcast %cst_66 : f32 to vector<16x1xf32>
    %155 = arith.divf %153, %154 : vector<16x1xf32>
    %156 = vector.broadcast %148 : vector<16x1xf32> to vector<16x32xf32>
    %157 = arith.subf %144, %156 : vector<16x32xf32>
    %cst_67 = arith.constant 9.99999974E-6 : f32
    %158 = vector.broadcast %cst_67 : f32 to vector<16x1xf32>
    %159 = arith.addf %155, %158 : vector<16x1xf32>
    %160 = math.rsqrt %159 : vector<16x1xf32>
    %161 = vector.broadcast %160 : vector<16x1xf32> to vector<16x32xf32>
    %162 = arith.mulf %157, %161 : vector<16x32xf32>
    %c0_68 = arith.constant 0 : index
    %c0_69 = arith.constant 0 : index
    %c0_70 = arith.constant 0 : index
    %163 = vector.load %arg19[%c0_68, %c0_69, %c0_70] : memref<1x1x32xf32, #tpu.memory_space<vmem>>, vector<1x1x32xf32>
    %164 = vector.shape_cast %163 : vector<1x1x32xf32> to vector<1x32xf32>
    %165 = vector.broadcast %164 : vector<1x32xf32> to vector<16x32xf32>
    %166 = arith.mulf %162, %165 : vector<16x32xf32>
    %c0_71 = arith.constant 0 : index
    %c0_72 = arith.constant 0 : index
    %c0_73 = arith.constant 0 : index
    %167 = vector.load %arg20[%c0_71, %c0_72, %c0_73] : memref<1x1x32xf32, #tpu.memory_space<vmem>>, vector<1x1x32xf32>
    %168 = vector.shape_cast %167 : vector<1x1x32xf32> to vector<1x32xf32>
    %169 = vector.broadcast %168 : vector<1x32xf32> to vector<16x32xf32>
    %170 = arith.addf %166, %169 : vector<16x32xf32>
    %c0_74 = arith.constant 0 : index
    %c0_75 = arith.constant 0 : index
    %171 = vector.load %arg24[%c0_74, %c0_75] : memref<16x32xf32, #tpu.memory_space<vmem>>, vector<16x32xf32>
    tpu.vector_store %arg24[%c0_74, %c0_75], %170 {strides = array<i32>} : memref<16x32xf32, #tpu.memory_space<vmem>>, vector<16x32xf32>,
    %c1_i32 = arith.constant 1 : i32
    %172 = arith.cmpi eq, %arg1, %c1_i32 : i32
    %173 = arith.extui %172 : i1 to i32
    %c0_i32_76 = arith.constant 0 : i32
    %174 = arith.cmpi ne, %173, %c0_i32_76 : i32
    scf.if %174 {
      %175 = vector.extract_strided_slice %170 {offsets = [0, 0], sizes = [1, 32], strides = [1, 1]} : vector<16x32xf32> to vector<1x32xf32>
      %176 = arith.truncf %175 : vector<1x32xf32> to vector<1x32xbf16>
      %c0_77 = arith.constant 0 : index
      %c0_78 = arith.constant 0 : index
      %177 = vector.load %arg21[%c0_77, %c0_78] : memref<32x5xbf16, #tpu.memory_space<vmem>>, vector<32x5xbf16>
      %cst_79 = arith.constant dense<0.000000e+00> : vector<1x5xf32>
      %178 = tpu.matmul %176, %177, %cst_79 {dimension_numbers = #tpu.dot_dimension_numbers<[1], [0], [0], [1], [0, 0, 1, 1], [], []>} : vector<1x32xbf16>, vector<32x5xbf16>, vector<1x5xf32> -> vector<1x5xf32>
      %c0_80 = arith.constant 0 : index
      %c0_81 = arith.constant 0 : index
      %179 = vector.load %arg22[%c0_80, %c0_81] : memref<1x5xf32, #tpu.memory_space<vmem>>, vector<1x5xf32>
      %180 = arith.addf %178, %179 : vector<1x5xf32>
      %c0_82 = arith.constant 0 : index
      %c0_83 = arith.constant 0 : index
      %c0_84 = arith.constant 0 : index
      %181 = vector.load %arg23[%c0_82, %c0_83, %c0_84] : memref<1x1x5xf32, #tpu.memory_space<vmem>>, vector<1x1x5xf32>
      %182 = vector.shape_cast %181 : vector<1x1x5xf32> to vector<1x5xf32>
      %183 = vector.shape_cast %180 : vector<1x5xf32> to vector<1x1x5xf32>
      tpu.vector_store %arg23[%c0_82, %c0_83, %c0_84], %183 {strides = array<i32>} : memref<1x1x5xf32, #tpu.memory_space<vmem>>, vector<1x1x5xf32>,
    } else {
    }
    return
  }
  func.func @transform_0(%arg0: i32, %arg1: i32) -> (i32, i32, i32) {
    %c0_i32 = arith.constant 0 : i32
    %c0_i32_0 = arith.constant 0 : i32
    %c0_i32_1 = arith.constant 0 : i32
    return %arg0, %c0_i32, %c0_i32_0 : i32, i32, i32
  }
  func.func @transform_1(%arg0: i32, %arg1: i32) -> (i32, i32) {
    %c0_i32 = arith.constant 0 : i32
    %c0_i32_0 = arith.constant 0 : i32
    %c0_i32_1 = arith.constant 0 : i32
    return %c0_i32, %c0_i32_0 : i32, i32
  }
  func.func @transform_2(%arg0: i32, %arg1: i32) -> (i32, i32) {
    %c0_i32 = arith.constant 0 : i32
    %c0_i32_0 = arith.constant 0 : i32
    %c0_i32_1 = arith.constant 0 : i32
    return %c0_i32, %c0_i32_0 : i32, i32
  }
  func.func @transform_3(%arg0: i32, %arg1: i32) -> (i32, i32) {
    %c0_i32 = arith.constant 0 : i32
    %c0_i32_0 = arith.constant 0 : i32
    %c0_i32_1 = arith.constant 0 : i32
    return %c0_i32, %c0_i32_0 : i32, i32
  }
  func.func @transform_4(%arg0: i32, %arg1: i32) -> (i32, i32) {
    %c0_i32 = arith.constant 0 : i32
    %c0_i32_0 = arith.constant 0 : i32
    %c0_i32_1 = arith.constant 0 : i32
    return %c0_i32, %c0_i32_0 : i32, i32
  }
  func.func @transform_5(%arg0: i32, %arg1: i32) -> (i32, i32) {
    %c0_i32 = arith.constant 0 : i32
    %c0_i32_0 = arith.constant 0 : i32
    %c0_i32_1 = arith.constant 0 : i32
    return %c0_i32, %c0_i32_0 : i32, i32
  }
  func.func @transform_6(%arg0: i32, %arg1: i32) -> (i32, i32) {
    %c0_i32 = arith.constant 0 : i32
    %c0_i32_0 = arith.constant 0 : i32
    %c0_i32_1 = arith.constant 0 : i32
    return %c0_i32, %c0_i32_0 : i32, i32
  }
  func.func @transform_7(%arg0: i32, %arg1: i32) -> (i32, i32, i32) {
    %c0_i32 = arith.constant 0 : i32
    %c0_i32_0 = arith.constant 0 : i32
    %c0_i32_1 = arith.constant 0 : i32
    return %arg1, %c0_i32, %c0_i32_0 : i32, i32, i32
  }
  func.func @transform_8(%arg0: i32, %arg1: i32) -> (i32, i32, i32) {
    %c0_i32 = arith.constant 0 : i32
    %c0_i32_0 = arith.constant 0 : i32
    %c0_i32_1 = arith.constant 0 : i32
    return %arg1, %c0_i32, %c0_i32_0 : i32, i32, i32
  }
  func.func @transform_9(%arg0: i32, %arg1: i32) -> (i32, i32, i32) {
    %c0_i32 = arith.constant 0 : i32
    %c0_i32_0 = arith.constant 0 : i32
    %c0_i32_1 = arith.constant 0 : i32
    return %arg1, %c0_i32, %c0_i32_0 : i32, i32, i32
  }
  func.func @transform_10(%arg0: i32, %arg1: i32) -> (i32, i32, i32) {
    %c0_i32 = arith.constant 0 : i32
    %c0_i32_0 = arith.constant 0 : i32
    %c0_i32_1 = arith.constant 0 : i32
    return %arg1, %c0_i32, %c0_i32_0 : i32, i32, i32
  }
  func.func @transform_11(%arg0: i32, %arg1: i32) -> (i32, i32, i32) {
    %c0_i32 = arith.constant 0 : i32
    %c0_i32_0 = arith.constant 0 : i32
    %c0_i32_1 = arith.constant 0 : i32
    return %arg1, %c0_i32, %c0_i32_0 : i32, i32, i32
  }
  func.func @transform_12(%arg0: i32, %arg1: i32) -> (i32, i32, i32) {
    %c0_i32 = arith.constant 0 : i32
    %c0_i32_0 = arith.constant 0 : i32
    %c0_i32_1 = arith.constant 0 : i32
    return %arg1, %c0_i32, %c0_i32_0 : i32, i32, i32
  }
  func.func @transform_13(%arg0: i32, %arg1: i32) -> (i32, i32, i32) {
    %c0_i32 = arith.constant 0 : i32
    %c0_i32_0 = arith.constant 0 : i32
    %c0_i32_1 = arith.constant 0 : i32
    return %arg1, %c0_i32, %c0_i32_0 : i32, i32, i32
  }
  func.func @transform_14(%arg0: i32, %arg1: i32) -> (i32, i32, i32) {
    %c0_i32 = arith.constant 0 : i32
    %c0_i32_0 = arith.constant 0 : i32
    %c0_i32_1 = arith.constant 0 : i32
    return %arg1, %c0_i32, %c0_i32_0 : i32, i32, i32
  }
  func.func @transform_15(%arg0: i32, %arg1: i32) -> (i32, i32, i32) {
    %c0_i32 = arith.constant 0 : i32
    %c0_i32_0 = arith.constant 0 : i32
    %c0_i32_1 = arith.constant 0 : i32
    return %arg1, %c0_i32, %c0_i32_0 : i32, i32, i32
  }
  func.func @transform_16(%arg0: i32, %arg1: i32) -> (i32, i32, i32) {
    %c0_i32 = arith.constant 0 : i32
    %c0_i32_0 = arith.constant 0 : i32
    %c0_i32_1 = arith.constant 0 : i32
    return %arg1, %c0_i32, %c0_i32_0 : i32, i32, i32
  }
  func.func @transform_17(%arg0: i32, %arg1: i32) -> (i32, i32, i32) {
    %c0_i32 = arith.constant 0 : i32
    %c0_i32_0 = arith.constant 0 : i32
    %c0_i32_1 = arith.constant 0 : i32
    return %arg1, %c0_i32, %c0_i32_0 : i32, i32, i32
  }
  func.func @transform_18(%arg0: i32, %arg1: i32) -> (i32, i32, i32) {
    %c0_i32 = arith.constant 0 : i32
    %c0_i32_0 = arith.constant 0 : i32
    %c0_i32_1 = arith.constant 0 : i32
    return %arg1, %c0_i32, %c0_i32_0 : i32, i32, i32
  }
  func.func @transform_19(%arg0: i32, %arg1: i32) -> (i32, i32) {
    %c0_i32 = arith.constant 0 : i32
    %c0_i32_0 = arith.constant 0 : i32
    %c0_i32_1 = arith.constant 0 : i32
    return %c0_i32, %c0_i32_0 : i32, i32
  }
  func.func @transform_20(%arg0: i32, %arg1: i32) -> (i32, i32) {
    %c0_i32 = arith.constant 0 : i32
    %c0_i32_0 = arith.constant 0 : i32
    %c0_i32_1 = arith.constant 0 : i32
    return %c0_i32, %c0_i32_0 : i32, i32
  }
  func.func @transform_21(%arg0: i32, %arg1: i32) -> (i32, i32, i32) {
    %c0_i32 = arith.constant 0 : i32
    %c0_i32_0 = arith.constant 0 : i32
    %c0_i32_1 = arith.constant 0 : i32
    return %arg0, %c0_i32, %c0_i32_0 : i32, i32, i32
  }
}

</mosaic_0001>

<llo_original>
// kernel: transformer_forward.1
$region0: #{transformer_forward.1}
  #allocation0 [shape = 'u32[]', space=smem, size = 0x4, offset = 0x4, fixed_abs, tag = 'smem constant byte address 0x4 - core index']
  #allocation1 [shape = 'u32[144,128]{1,0:T(1,128)}', space=vmem, size = 0x12000, scoped, tag = 'internal scratch']
  #allocation2 [shape = 'f32[16,32]{1,0:T(8,128)}', space=vmem, size = 0x2000, scoped, tag = 'scratch operand']
  %s0 = inlined_call_operand.vmem [shape: bf16[2,8,96], index: 0, kind: input, shape index: {}]
  %s1 = inlined_call_operand.vmem [shape: bf16[96,8], index: 1, kind: input, shape index: {}]
  %s2 = inlined_call_operand.vmem [shape: f32[1,8], index: 2, kind: input, shape index: {}]
  %s3 = inlined_call_operand.vmem [shape: bf16[8,32], index: 3, kind: input, shape index: {}]
  %s4 = inlined_call_operand.vmem [shape: f32[1,32], index: 4, kind: input, shape index: {}]
  %s5 = inlined_call_operand.vmem [shape: f32[1,32], index: 5, kind: input, shape index: {}]
  %s6 = inlined_call_operand.vmem [shape: f32[8,32], index: 6, kind: input, shape index: {}]
  %s7 = inlined_call_operand.vmem [shape: bf16[2,32,96], index: 7, kind: input, shape index: {}]
  %s8 = inlined_call_operand.vmem [shape: f32[2,1,96], index: 8, kind: input, shape index: {}]
  %s9 = inlined_call_operand.vmem [shape: bf16[2,32,32], index: 9, kind: input, shape index: {}]
  %s10 = inlined_call_operand.vmem [shape: f32[2,1,32], index: 10, kind: input, shape index: {}]
  %s11 = inlined_call_operand.vmem [shape: f32[2,1,32], index: 11, kind: input, shape index: {}]
  %s12 = inlined_call_operand.vmem [shape: f32[2,1,32], index: 12, kind: input, shape index: {}]
  %s13 = inlined_call_operand.vmem [shape: bf16[2,32,2048], index: 13, kind: input, shape index: {}]
  %s14 = inlined_call_operand.vmem [shape: f32[2,1,2048], index: 14, kind: input, shape index: {}]
  %s15 = inlined_call_operand.vmem [shape: bf16[2,2048,32], index: 15, kind: input, shape index: {}]
  %s16 = inlined_call_operand.vmem [shape: f32[2,1,32], index: 16, kind: input, shape index: {}]
  %s17 = inlined_call_operand.vmem [shape: f32[2,1,32], index: 17, kind: input, shape index: {}]
  %s18 = inlined_call_operand.vmem [shape: f32[2,1,32], index: 18, kind: input, shape index: {}]
  %s19 = inlined_call_operand.vmem [shape: bf16[32,5], index: 19, kind: input, shape index: {}]
  %s20 = inlined_call_operand.vmem [shape: f32[1,5], index: 20, kind: input, shape index: {}]
  %s21 = inlined_call_operand.hbm [shape: f32[2,1,5], index: 21, kind: output, shape index: {}]
  %s22 = sld [smem:[#allocation0]]
  $region125: #{transformer_forward.1} parent=0
    _
  %s24 = ssub.s32 1, %s22
  %s25 = scalar_select 0, %s24, %s22
  $region1: #{transformer_forward.1} parent=0
    #allocation3 [shape = 'u8[1024]{0}', space=vmem, size = 0x400, scoped, tag = 'output window, operand 0']
    #allocation4 [shape = 's32[2]{0}', space=sflag, size = 0x8, scoped, tag = 'scoped memory for transformer_forward.1']
    %26 = vsyncpa [#allocation4], 0
    %s27 = scalar_lea.sflag [#allocation4], 1
    %28 = vsyncpa %s27, 0
    loop: start=0, step=1, limit=6
    $region2: #{transformer_forward.1} parent=1 // loop_pre_header
      _
    $region3: #{transformer_forward.1} parent=1 // loop_header
      %s30 = sphi 0, %s34
      %p31 = scmp.ge.s32.totalorder %s30, 6
      %s37 = sphi 0, %s49
      %s38 = sphi 0, %s45
      %s39 = sphi 0, %s37
      %s40 = sphi 0, %s38
      %s41 = sphi 0, %s39
      %s42 = sphi 0, %s40
      %s52 = sphi 0, %s54
      %s55 = sphi 0, %s52
      %s56 = sphi 0, %s55
      %s72 = sphi 0, %s56
      %s76 = sphi 0, %s76
      %s78 = sphi 0, %s76
      %s79 = sphi 0, %s78
      %s93 = sphi 0, %s79
      %s97 = sphi 0, %s97
      %s99 = sphi 0, %s97
      %s100 = sphi 0, %s99
      %s114 = sphi 0, %s100
      %s118 = sphi 0, %s118
      %s120 = sphi 0, %s118
      %s121 = sphi 0, %s120
      %s135 = sphi 0, %s121
      %s139 = sphi 0, %s139
      %s141 = sphi 0, %s139
      %s142 = sphi 0, %s141
      %s156 = sphi 0, %s142
      %s160 = sphi 0, %s160
      %s162 = sphi 0, %s160
      %s163 = sphi 0, %s162
      %s177 = sphi 0, %s163
      %s181 = sphi 0, %s181
      %s183 = sphi 0, %s181
      %s184 = sphi 0, %s183
      %s198 = sphi 0, %s184
      %s204 = sphi 0, %s206
      %s207 = sphi 0, %s204
      %s208 = sphi 0, %s207
      %s224 = sphi 0, %s208
      %s230 = sphi 0, %s232
      %s233 = sphi 0, %s230
      %s234 = sphi 0, %s233
      %s250 = sphi 0, %s234
      %s256 = sphi 0, %s258
      %s259 = sphi 0, %s256
      %s260 = sphi 0, %s259
      %s276 = sphi 0, %s260
      %s282 = sphi 0, %s284
      %s285 = sphi 0, %s282
      %s286 = sphi 0, %s285
      %s302 = sphi 0, %s286
      %s308 = sphi 0, %s310
      %s311 = sphi 0, %s308
      %s312 = sphi 0, %s311
      %s328 = sphi 0, %s312
      %s334 = sphi 0, %s336
      %s337 = sphi 0, %s334
      %s338 = sphi 0, %s337
      %s354 = sphi 0, %s338
      %s360 = sphi 0, %s362
      %s363 = sphi 0, %s360
      %s364 = sphi 0, %s363
      %s380 = sphi 0, %s364
      %s386 = sphi 0, %s388
      %s389 = sphi 0, %s386
      %s390 = sphi 0, %s389
      %s406 = sphi 0, %s390
      %s412 = sphi 0, %s414
      %s415 = sphi 0, %s412
      %s416 = sphi 0, %s415
      %s432 = sphi 0, %s416
      %s438 = sphi 0, %s440
      %s441 = sphi 0, %s438
      %s442 = sphi 0, %s441
      %s458 = sphi 0, %s442
      %s464 = sphi 0, %s466
      %s467 = sphi 0, %s464
      %s468 = sphi 0, %s467
      %s484 = sphi 0, %s468
      %s490 = sphi 0, %s492
      %s493 = sphi 0, %s490
      %s494 = sphi 0, %s493
      %s510 = sphi 0, %s494
      %s514 = sphi 0, %s514
      %s516 = sphi 0, %s514
      %s517 = sphi 0, %s516
      %s531 = sphi 0, %s517
      %s535 = sphi 0, %s535
      %s537 = sphi 0, %s535
      %s538 = sphi 0, %s537
      %s552 = sphi 0, %s538
      %s558 = sphi 0, %s560
      %s561 = sphi 0, %s558
      %s562 = sphi 0, %s561
      %s578 = sphi 0, %s562
    $region4: #{transformer_forward.1} parent=1 // loop_header_branch
      %33 = sbr.rel (%p31) target = $region8
    $region5: #{transformer_forward.1} parent=1 // loop_body
      %s35 = ssub.s32 %s30, 1
      %s36 = ssub.s32 %s30, 2
      %s43 = sadd.s32 1, %s38
      %p44 = scmp.ge.s32.totalorder %s43, 2
      %s45 = scalar_select %p44, 0, %s43
      %s46 = sadd.s32 1, %s37
      %s47 = scalar_select %p44, %s46, %s37
      %p48 = scmp.ge.s32.totalorder %s47, 2
      %s49 = scalar_select %p48, 0, %s47
      %s50 = ssub.s32 %s37, %s49
      %p51 = scmp.eq.s32.totalorder %s50, 0
      %s53 = sadd.s32 %s52, 1
      %s54 = scalar_select %p51, %s52, %s53
      %p57 = pneg %p51
      %p58 = scmp.eq.s32.totalorder %s30, 3
      %p59 = por %p57, %p58
      %p60 = scmp.ne.s32.totalorder %s52, %s55
      %p61 = scmp.eq.s32.totalorder %s30, 0
      %p62 = por %p60, %p61
      %p63 = scmp.ne.s32.totalorder %s52, %s55
      %p64 = scmp.eq.s32.totalorder %s35, 3
      %p65 = por %p63, %p64
      %p66 = scmp.ne.s32.totalorder %s55, %s56
      %p67 = scmp.eq.s32.totalorder %s35, 0
      %p68 = por %p66, %p67
      %p69 = scmp.ne.s32.totalorder %s55, %s56
      %p70 = scmp.eq.s32.totalorder %s36, 3
      %p71 = por %p69, %p70
      %p73 = scmp.ne.s32.totalorder %s56, %s72
      %p74 = scmp.eq.s32.totalorder %s36, 0
      %p75 = por %p73, %p74
      %s77 = sadd.s32 %s76, 1
      %p80 = scmp.eq.s32.totalorder %s30, 3
      %p81 = scmp.ne.s32.totalorder %s76, %s78
      %p82 = scmp.eq.s32.totalorder %s30, 0
      %p83 = por %p81, %p82
      %p84 = scmp.ne.s32.totalorder %s76, %s78
      %p85 = scmp.eq.s32.totalorder %s35, 3
      %p86 = por %p84, %p85
      %p87 = scmp.ne.s32.totalorder %s78, %s79
      %p88 = scmp.eq.s32.totalorder %s35, 0
      %p89 = por %p87, %p88
      %p90 = scmp.ne.s32.totalorder %s78, %s79
      %p91 = scmp.eq.s32.totalorder %s36, 3
      %p92 = por %p90, %p91
      %p94 = scmp.ne.s32.totalorder %s79, %s93
      %p95 = scmp.eq.s32.totalorder %s36, 0
      %p96 = por %p94, %p95
      %s98 = sadd.s32 %s97, 1
      %p101 = scmp.eq.s32.totalorder %s30, 3
      %p102 = scmp.ne.s32.totalorder %s97, %s99
      %p103 = scmp.eq.s32.totalorder %s30, 0
      %p104 = por %p102, %p103
      %p105 = scmp.ne.s32.totalorder %s97, %s99
      %p106 = scmp.eq.s32.totalorder %s35, 3
      %p107 = por %p105, %p106
      %p108 = scmp.ne.s32.totalorder %s99, %s100
      %p109 = scmp.eq.s32.totalorder %s35, 0
      %p110 = por %p108, %p109
      %p111 = scmp.ne.s32.totalorder %s99, %s100
      %p112 = scmp.eq.s32.totalorder %s36, 3
      %p113 = por %p111, %p112
      %p115 = scmp.ne.s32.totalorder %s100, %s114
      %p116 = scmp.eq.s32.totalorder %s36, 0
      %p117 = por %p115, %p116
      %s119 = sadd.s32 %s118, 1
      %p122 = scmp.eq.s32.totalorder %s30, 3
      %p123 = scmp.ne.s32.totalorder %s118, %s120
      %p124 = scmp.eq.s32.totalorder %s30, 0
      %p125 = por %p123, %p124
      %p126 = scmp.ne.s32.totalorder %s118, %s120
      %p127 = scmp.eq.s32.totalorder %s35, 3
      %p128 = por %p126, %p127
      %p129 = scmp.ne.s32.totalorder %s120, %s121
      %p130 = scmp.eq.s32.totalorder %s35, 0
      %p131 = por %p129, %p130
      %p132 = scmp.ne.s32.totalorder %s120, %s121
      %p133 = scmp.eq.s32.totalorder %s36, 3
      %p134 = por %p132, %p133
      %p136 = scmp.ne.s32.totalorder %s121, %s135
      %p137 = scmp.eq.s32.totalorder %s36, 0
      %p138 = por %p136, %p137
      %s140 = sadd.s32 %s139, 1
      %p143 = scmp.eq.s32.totalorder %s30, 3
      %p144 = scmp.ne.s32.totalorder %s139, %s141
      %p145 = scmp.eq.s32.totalorder %s30, 0
      %p146 = por %p144, %p145
      %p147 = scmp.ne.s32.totalorder %s139, %s141
      %p148 = scmp.eq.s32.totalorder %s35, 3
      %p149 = por %p147, %p148
      %p150 = scmp.ne.s32.totalorder %s141, %s142
      %p151 = scmp.eq.s32.totalorder %s35, 0
      %p152 = por %p150, %p151
      %p153 = scmp.ne.s32.totalorder %s141, %s142
      %p154 = scmp.eq.s32.totalorder %s36, 3
      %p155 = por %p153, %p154
      %p157 = scmp.ne.s32.totalorder %s142, %s156
      %p158 = scmp.eq.s32.totalorder %s36, 0
      %p159 = por %p157, %p158
      %s161 = sadd.s32 %s160, 1
      %p164 = scmp.eq.s32.totalorder %s30, 3
      %p165 = scmp.ne.s32.totalorder %s160, %s162
      %p166 = scmp.eq.s32.totalorder %s30, 0
      %p167 = por %p165, %p166
      %p168 = scmp.ne.s32.totalorder %s160, %s162
      %p169 = scmp.eq.s32.totalorder %s35, 3
      %p170 = por %p168, %p169
      %p171 = scmp.ne.s32.totalorder %s162, %s163
      %p172 = scmp.eq.s32.totalorder %s35, 0
      %p173 = por %p171, %p172
      %p174 = scmp.ne.s32.totalorder %s162, %s163
      %p175 = scmp.eq.s32.totalorder %s36, 3
      %p176 = por %p174, %p175
      %p178 = scmp.ne.s32.totalorder %s163, %s177
      %p179 = scmp.eq.s32.totalorder %s36, 0
      %p180 = por %p178, %p179
      %s182 = sadd.s32 %s181, 1
      %p185 = scmp.eq.s32.totalorder %s30, 3
      %p186 = scmp.ne.s32.totalorder %s181, %s183
      %p187 = scmp.eq.s32.totalorder %s30, 0
      %p188 = por %p186, %p187
      %p189 = scmp.ne.s32.totalorder %s181, %s183
      %p190 = scmp.eq.s32.totalorder %s35, 3
      %p191 = por %p189, %p190
      %p192 = scmp.ne.s32.totalorder %s183, %s184
      %p193 = scmp.eq.s32.totalorder %s35, 0
      %p194 = por %p192, %p193
      %p195 = scmp.ne.s32.totalorder %s183, %s184
      %p196 = scmp.eq.s32.totalorder %s36, 3
      %p197 = por %p195, %p196
      %p199 = scmp.ne.s32.totalorder %s184, %s198
      %p200 = scmp.eq.s32.totalorder %s36, 0
      %p201 = por %p199, %p200
      %s202 = ssub.s32 %s38, %s45
      %p203 = scmp.eq.s32.totalorder %s202, 0
      %s205 = sadd.s32 %s204, 1
      %s206 = scalar_select %p203, %s204, %s205
      %p209 = pneg %p203
      %p210 = scmp.eq.s32.totalorder %s30, 3
      %p211 = por %p209, %p210
      %p212 = scmp.ne.s32.totalorder %s204, %s207
      %p213 = scmp.eq.s32.totalorder %s30, 0
      %p214 = por %p212, %p213
      %p215 = scmp.ne.s32.totalorder %s204, %s207
      %p216 = scmp.eq.s32.totalorder %s35, 3
      %p217 = por %p215, %p216
      %p218 = scmp.ne.s32.totalorder %s207, %s208
      %p219 = scmp.eq.s32.totalorder %s35, 0
      %p220 = por %p218, %p219
      %p221 = scmp.ne.s32.totalorder %s207, %s208
      %p222 = scmp.eq.s32.totalorder %s36, 3
      %p223 = por %p221, %p222
      %p225 = scmp.ne.s32.totalorder %s208, %s224
      %p226 = scmp.eq.s32.totalorder %s36, 0
      %p227 = por %p225, %p226
      %s228 = ssub.s32 %s38, %s45
      %p229 = scmp.eq.s32.totalorder %s228, 0
      %s231 = sadd.s32 %s230, 1
      %s232 = scalar_select %p229, %s230, %s231
      %p235 = pneg %p229
      %p236 = scmp.eq.s32.totalorder %s30, 3
      %p237 = por %p235, %p236
      %p238 = scmp.ne.s32.totalorder %s230, %s233
      %p239 = scmp.eq.s32.totalorder %s30, 0
      %p240 = por %p238, %p239
      %p241 = scmp.ne.s32.totalorder %s230, %s233
      %p242 = scmp.eq.s32.totalorder %s35, 3
      %p243 = por %p241, %p242
      %p244 = scmp.ne.s32.totalorder %s233, %s234
      %p245 = scmp.eq.s32.totalorder %s35, 0
      %p246 = por %p244, %p245
      %p247 = scmp.ne.s32.totalorder %s233, %s234
      %p248 = scmp.eq.s32.totalorder %s36, 3
      %p249 = por %p247, %p248
      %p251 = scmp.ne.s32.totalorder %s234, %s250
      %p252 = scmp.eq.s32.totalorder %s36, 0
      %p253 = por %p251, %p252
      %s254 = ssub.s32 %s38, %s45
      %p255 = scmp.eq.s32.totalorder %s254, 0
      %s257 = sadd.s32 %s256, 1
      %s258 = scalar_select %p255, %s256, %s257
      %p261 = pneg %p255
      %p262 = scmp.eq.s32.totalorder %s30, 3
      %p263 = por %p261, %p262
      %p264 = scmp.ne.s32.totalorder %s256, %s259
      %p265 = scmp.eq.s32.totalorder %s30, 0
      %p266 = por %p264, %p265
      %p267 = scmp.ne.s32.totalorder %s256, %s259
      %p268 = scmp.eq.s32.totalorder %s35, 3
      %p269 = por %p267, %p268
      %p270 = scmp.ne.s32.totalorder %s259, %s260
      %p271 = scmp.eq.s32.totalorder %s35, 0
      %p272 = por %p270, %p271
      %p273 = scmp.ne.s32.totalorder %s259, %s260
      %p274 = scmp.eq.s32.totalorder %s36, 3
      %p275 = por %p273, %p274
      %p277 = scmp.ne.s32.totalorder %s260, %s276
      %p278 = scmp.eq.s32.totalorder %s36, 0
      %p279 = por %p277, %p278
      %s280 = ssub.s32 %s38, %s45
      %p281 = scmp.eq.s32.totalorder %s280, 0
      %s283 = sadd.s32 %s282, 1
      %s284 = scalar_select %p281, %s282, %s283
      %p287 = pneg %p281
      %p288 = scmp.eq.s32.totalorder %s30, 3
      %p289 = por %p287, %p288
      %p290 = scmp.ne.s32.totalorder %s282, %s285
      %p291 = scmp.eq.s32.totalorder %s30, 0
      %p292 = por %p290, %p291
      %p293 = scmp.ne.s32.totalorder %s282, %s285
      %p294 = scmp.eq.s32.totalorder %s35, 3
      %p295 = por %p293, %p294
      %p296 = scmp.ne.s32.totalorder %s285, %s286
      %p297 = scmp.eq.s32.totalorder %s35, 0
      %p298 = por %p296, %p297
      %p299 = scmp.ne.s32.totalorder %s285, %s286
      %p300 = scmp.eq.s32.totalorder %s36, 3
      %p301 = por %p299, %p300
      %p303 = scmp.ne.s32.totalorder %s286, %s302
      %p304 = scmp.eq.s32.totalorder %s36, 0
      %p305 = por %p303, %p304
      %s306 = ssub.s32 %s38, %s45
      %p307 = scmp.eq.s32.totalorder %s306, 0
      %s309 = sadd.s32 %s308, 1
      %s310 = scalar_select %p307, %s308, %s309
      %p313 = pneg %p307
      %p314 = scmp.eq.s32.totalorder %s30, 3
      %p315 = por %p313, %p314
      %p316 = scmp.ne.s32.totalorder %s308, %s311
      %p317 = scmp.eq.s32.totalorder %s30, 0
      %p318 = por %p316, %p317
      %p319 = scmp.ne.s32.totalorder %s308, %s311
      %p320 = scmp.eq.s32.totalorder %s35, 3
      %p321 = por %p319, %p320
      %p322 = scmp.ne.s32.totalorder %s311, %s312
      %p323 = scmp.eq.s32.totalorder %s35, 0
      %p324 = por %p322, %p323
      %p325 = scmp.ne.s32.totalorder %s311, %s312
      %p326 = scmp.eq.s32.totalorder %s36, 3
      %p327 = por %p325, %p326
      %p329 = scmp.ne.s32.totalorder %s312, %s328
      %p330 = scmp.eq.s32.totalorder %s36, 0
      %p331 = por %p329, %p330
      %s332 = ssub.s32 %s38, %s45
      %p333 = scmp.eq.s32.totalorder %s332, 0
      %s335 = sadd.s32 %s334, 1
      %s336 = scalar_select %p333, %s334, %s335
      %p339 = pneg %p333
      %p340 = scmp.eq.s32.totalorder %s30, 3
      %p341 = por %p339, %p340
      %p342 = scmp.ne.s32.totalorder %s334, %s337
      %p343 = scmp.eq.s32.totalorder %s30, 0
      %p344 = por %p342, %p343
      %p345 = scmp.ne.s32.totalorder %s334, %s337
      %p346 = scmp.eq.s32.totalorder %s35, 3
      %p347 = por %p345, %p346
      %p348 = scmp.ne.s32.totalorder %s337, %s338
      %p349 = scmp.eq.s32.totalorder %s35, 0
      %p350 = por %p348, %p349
      %p351 = scmp.ne.s32.totalorder %s337, %s338
      %p352 = scmp.eq.s32.totalorder %s36, 3
      %p353 = por %p351, %p352
      %p355 = scmp.ne.s32.totalorder %s338, %s354
      %p356 = scmp.eq.s32.totalorder %s36, 0
      %p357 = por %p355, %p356
      %s358 = ssub.s32 %s38, %s45
      %p359 = scmp.eq.s32.totalorder %s358, 0
      %s361 = sadd.s32 %s360, 1
      %s362 = scalar_select %p359, %s360, %s361
      %p365 = pneg %p359
      %p366 = scmp.eq.s32.totalorder %s30, 3
      %p367 = por %p365, %p366
      %p368 = scmp.ne.s32.totalorder %s360, %s363
      %p369 = scmp.eq.s32.totalorder %s30, 0
      %p370 = por %p368, %p369
      %p371 = scmp.ne.s32.totalorder %s360, %s363
      %p372 = scmp.eq.s32.totalorder %s35, 3
      %p373 = por %p371, %p372
      %p374 = scmp.ne.s32.totalorder %s363, %s364
      %p375 = scmp.eq.s32.totalorder %s35, 0
      %p376 = por %p374, %p375
      %p377 = scmp.ne.s32.totalorder %s363, %s364
      %p378 = scmp.eq.s32.totalorder %s36, 3
      %p379 = por %p377, %p378
      %p381 = scmp.ne.s32.totalorder %s364, %s380
      %p382 = scmp.eq.s32.totalorder %s36, 0
      %p383 = por %p381, %p382
      %s384 = ssub.s32 %s38, %s45
      %p385 = scmp.eq.s32.totalorder %s384, 0
      %s387 = sadd.s32 %s386, 1
      %s388 = scalar_select %p385, %s386, %s387
      %p391 = pneg %p385
      %p392 = scmp.eq.s32.totalorder %s30, 3
      %p393 = por %p391, %p392
      %p394 = scmp.ne.s32.totalorder %s386, %s389
      %p395 = scmp.eq.s32.totalorder %s30, 0
      %p396 = por %p394, %p395
      %p397 = scmp.ne.s32.totalorder %s386, %s389
      %p398 = scmp.eq.s32.totalorder %s35, 3
      %p399 = por %p397, %p398
      %p400 = scmp.ne.s32.totalorder %s389, %s390
      %p401 = scmp.eq.s32.totalorder %s35, 0
      %p402 = por %p400, %p401
      %p403 = scmp.ne.s32.totalorder %s389, %s390
      %p404 = scmp.eq.s32.totalorder %s36, 3
      %p405 = por %p403, %p404
      %p407 = scmp.ne.s32.totalorder %s390, %s406
      %p408 = scmp.eq.s32.totalorder %s36, 0
      %p409 = por %p407, %p408
      %s410 = ssub.s32 %s38, %s45
      %p411 = scmp.eq.s32.totalorder %s410, 0
      %s413 = sadd.s32 %s412, 1
      %s414 = scalar_select %p411, %s412, %s413
      %p417 = pneg %p411
      %p418 = scmp.eq.s32.totalorder %s30, 3
      %p419 = por %p417, %p418
      %p420 = scmp.ne.s32.totalorder %s412, %s415
      %p421 = scmp.eq.s32.totalorder %s30, 0
      %p422 = por %p420, %p421
      %p423 = scmp.ne.s32.totalorder %s412, %s415
      %p424 = scmp.eq.s32.totalorder %s35, 3
      %p425 = por %p423, %p424
      %p426 = scmp.ne.s32.totalorder %s415, %s416
      %p427 = scmp.eq.s32.totalorder %s35, 0
      %p428 = por %p426, %p427
      %p429 = scmp.ne.s32.totalorder %s415, %s416
      %p430 = scmp.eq.s32.totalorder %s36, 3
      %p431 = por %p429, %p430
      %p433 = scmp.ne.s32.totalorder %s416, %s432
      %p434 = scmp.eq.s32.totalorder %s36, 0
      %p435 = por %p433, %p434
      %s436 = ssub.s32 %s38, %s45
      %p437 = scmp.eq.s32.totalorder %s436, 0
      %s439 = sadd.s32 %s438, 1
      %s440 = scalar_select %p437, %s438, %s439
      %p443 = pneg %p437
      %p444 = scmp.eq.s32.totalorder %s30, 3
      %p445 = por %p443, %p444
      %p446 = scmp.ne.s32.totalorder %s438, %s441
      %p447 = scmp.eq.s32.totalorder %s30, 0
      %p448 = por %p446, %p447
      %p449 = scmp.ne.s32.totalorder %s438, %s441
      %p450 = scmp.eq.s32.totalorder %s35, 3
      %p451 = por %p449, %p450
      %p452 = scmp.ne.s32.totalorder %s441, %s442
      %p453 = scmp.eq.s32.totalorder %s35, 0
      %p454 = por %p452, %p453
      %p455 = scmp.ne.s32.totalorder %s441, %s442
      %p456 = scmp.eq.s32.totalorder %s36, 3
      %p457 = por %p455, %p456
      %p459 = scmp.ne.s32.totalorder %s442, %s458
      %p460 = scmp.eq.s32.totalorder %s36, 0
      %p461 = por %p459, %p460
      %s462 = ssub.s32 %s38, %s45
      %p463 = scmp.eq.s32.totalorder %s462, 0
      %s465 = sadd.s32 %s464, 1
      %s466 = scalar_select %p463, %s464, %s465
      %p469 = pneg %p463
      %p470 = scmp.eq.s32.totalorder %s30, 3
      %p471 = por %p469, %p470
      %p472 = scmp.ne.s32.totalorder %s464, %s467
      %p473 = scmp.eq.s32.totalorder %s30, 0
      %p474 = por %p472, %p473
      %p475 = scmp.ne.s32.totalorder %s464, %s467
      %p476 = scmp.eq.s32.totalorder %s35, 3
      %p477 = por %p475, %p476
      %p478 = scmp.ne.s32.totalorder %s467, %s468
      %p479 = scmp.eq.s32.totalorder %s35, 0
      %p480 = por %p478, %p479
      %p481 = scmp.ne.s32.totalorder %s467, %s468
      %p482 = scmp.eq.s32.totalorder %s36, 3
      %p483 = por %p481, %p482
      %p485 = scmp.ne.s32.totalorder %s468, %s484
      %p486 = scmp.eq.s32.totalorder %s36, 0
      %p487 = por %p485, %p486
      %s488 = ssub.s32 %s38, %s45
      %p489 = scmp.eq.s32.totalorder %s488, 0
      %s491 = sadd.s32 %s490, 1
      %s492 = scalar_select %p489, %s490, %s491
      %p495 = pneg %p489
      %p496 = scmp.eq.s32.totalorder %s30, 3
      %p497 = por %p495, %p496
      %p498 = scmp.ne.s32.totalorder %s490, %s493
      %p499 = scmp.eq.s32.totalorder %s30, 0
      %p500 = por %p498, %p499
      %p501 = scmp.ne.s32.totalorder %s490, %s493
      %p502 = scmp.eq.s32.totalorder %s35, 3
      %p503 = por %p501, %p502
      %p504 = scmp.ne.s32.totalorder %s493, %s494
      %p505 = scmp.eq.s32.totalorder %s35, 0
      %p506 = por %p504, %p505
      %p507 = scmp.ne.s32.totalorder %s493, %s494
      %p508 = scmp.eq.s32.totalorder %s36, 3
      %p509 = por %p507, %p508
      %p511 = scmp.ne.s32.totalorder %s494, %s510
      %p512 = scmp.eq.s32.totalorder %s36, 0
      %p513 = por %p511, %p512
      %s515 = sadd.s32 %s514, 1
      %p518 = scmp.eq.s32.totalorder %s30, 3
      %p519 = scmp.ne.s32.totalorder %s514, %s516
      %p520 = scmp.eq.s32.totalorder %s30, 0
      %p521 = por %p519, %p520
      %p522 = scmp.ne.s32.totalorder %s514, %s516
      %p523 = scmp.eq.s32.totalorder %s35, 3
      %p524 = por %p522, %p523
      %p525 = scmp.ne.s32.totalorder %s516, %s517
      %p526 = scmp.eq.s32.totalorder %s35, 0
      %p527 = por %p525, %p526
      %p528 = scmp.ne.s32.totalorder %s516, %s517
      %p529 = scmp.eq.s32.totalorder %s36, 3
      %p530 = por %p528, %p529
      %p532 = scmp.ne.s32.totalorder %s517, %s531
      %p533 = scmp.eq.s32.totalorder %s36, 0
      %p534 = por %p532, %p533
      %s536 = sadd.s32 %s535, 1
      %p539 = scmp.eq.s32.totalorder %s30, 3
      %p540 = scmp.ne.s32.totalorder %s535, %s537
      %p541 = scmp.eq.s32.totalorder %s30, 0
      %p542 = por %p540, %p541
      %p543 = scmp.ne.s32.totalorder %s535, %s537
      %p544 = scmp.eq.s32.totalorder %s35, 3
      %p545 = por %p543, %p544
      %p546 = scmp.ne.s32.totalorder %s537, %s538
      %p547 = scmp.eq.s32.totalorder %s35, 0
      %p548 = por %p546, %p547
      %p549 = scmp.ne.s32.totalorder %s537, %s538
      %p550 = scmp.eq.s32.totalorder %s36, 3
      %p551 = por %p549, %p550
      %p553 = scmp.ne.s32.totalorder %s538, %s552
      %p554 = scmp.eq.s32.totalorder %s36, 0
      %p555 = por %p553, %p554
      %s556 = ssub.s32 %s37, %s49
      %p557 = scmp.eq.s32.totalorder %s556, 0
      %s559 = sadd.s32 %s558, 1
      %s560 = scalar_select %p557, %s558, %s559
      %p563 = pneg %p557
      %p564 = scmp.eq.s32.totalorder %s30, 3
      %p565 = por %p563, %p564
      %p566 = scmp.ne.s32.totalorder %s558, %s561
      %p567 = scmp.eq.s32.totalorder %s30, 0
      %p568 = por %p566, %p567
      %p569 = scmp.ne.s32.totalorder %s558, %s561
      %p570 = scmp.eq.s32.totalorder %s35, 3
      %p571 = por %p569, %p570
      %p572 = scmp.ne.s32.totalorder %s561, %s562
      %p573 = scmp.eq.s32.totalorder %s35, 0
      %p574 = por %p572, %p573
      %p575 = scmp.ne.s32.totalorder %s561, %s562
      %p576 = scmp.eq.s32.totalorder %s36, 3
      %p577 = por %p575, %p576
      %p579 = scmp.ne.s32.totalorder %s562, %s578
      %p580 = scmp.eq.s32.totalorder %s36, 0
      %p581 = por %p579, %p580
      %p582 = scmp.le.s32.totalorder 1, %s30
      %p583 = scmp.lt.s32.totalorder %s30, 5
      %p584 = pnand %p582, %p583
      %p585 = pneg %p584
      // Predicated region
      $region9: #{transformer_forward.1} parent=5 // pred_check
        _
      $region10: #{transformer_forward.1} parent=5 // pred_check_branch
        %587 = sbr.rel (%p584) target = $region12
      $region11: #{transformer_forward.1} parent=5 // pred_region
        %s588 = ssub.s32 %s30, 1
        // Predicated region
        $region13: #{transformer_forward.1} parent=11 // pred_check
          %p589 = pneg %p89
        $region14: #{transformer_forward.1} parent=11 // pred_check_branch
          %591 = sbr.rel (%p589) target = $region16
        $region15: #{transformer_forward.1} parent=11 // pred_region
          _
        $region16: #{transformer_forward.1} parent=11 // pred_fallthru
          _
        // Predicated region
        $region17: #{transformer_forward.1} parent=11 // pred_check
          %p592 = pneg %p110
        $region18: #{transformer_forward.1} parent=11 // pred_check_branch
          %594 = sbr.rel (%p592) target = $region20
        $region19: #{transformer_forward.1} parent=11 // pred_region
          _
        $region20: #{transformer_forward.1} parent=11 // pred_fallthru
          _
        // Predicated region
        $region21: #{transformer_forward.1} parent=11 // pred_check
          %p595 = pneg %p131
        $region22: #{transformer_forward.1} parent=11 // pred_check_branch
          %597 = sbr.rel (%p595) target = $region24
        $region23: #{transformer_forward.1} parent=11 // pred_region
          _
        $region24: #{transformer_forward.1} parent=11 // pred_fallthru
          _
        // Predicated region
        $region25: #{transformer_forward.1} parent=11 // pred_check
          %p598 = pneg %p152
        $region26: #{transformer_forward.1} parent=11 // pred_check_branch
          %600 = sbr.rel (%p598) target = $region28
        $region27: #{transformer_forward.1} parent=11 // pred_region
          _
        $region28: #{transformer_forward.1} parent=11 // pred_fallthru
          _
        // Predicated region
        $region29: #{transformer_forward.1} parent=11 // pred_check
          %p601 = pneg %p173
        $region30: #{transformer_forward.1} parent=11 // pred_check_branch
          %603 = sbr.rel (%p601) target = $region32
        $region31: #{transformer_forward.1} parent=11 // pred_region
          _
        $region32: #{transformer_forward.1} parent=11 // pred_fallthru
          _
        // Predicated region
        $region33: #{transformer_forward.1} parent=11 // pred_check
          %p604 = pneg %p194
        $region34: #{transformer_forward.1} parent=11 // pred_check_branch
          %606 = sbr.rel (%p604) target = $region36
        $region35: #{transformer_forward.1} parent=11 // pred_region
          _
        $region36: #{transformer_forward.1} parent=11 // pred_fallthru
          _
        // Predicated region
        $region37: #{transformer_forward.1} parent=11 // pred_check
          %p607 = pneg %p527
        $region38: #{transformer_forward.1} parent=11 // pred_check_branch
          %609 = sbr.rel (%p607) target = $region40
        $region39: #{transformer_forward.1} parent=11 // pred_region
          _
        $region40: #{transformer_forward.1} parent=11 // pred_fallthru
          _
        // Predicated region
        $region41: #{transformer_forward.1} parent=11 // pred_check
          %p610 = pneg %p548
        $region42: #{transformer_forward.1} parent=11 // pred_check_branch
          %612 = sbr.rel (%p610) target = $region44
        $region43: #{transformer_forward.1} parent=11 // pred_region
          _
        $region44: #{transformer_forward.1} parent=11 // pred_fallthru
          _
      $region12: #{transformer_forward.1} parent=5 // pred_fallthru
        _
      %p613 = scmp.lt.s32.totalorder %s30, 4
      // Predicated region
      $region45: #{transformer_forward.1} parent=5 // pred_check
        %p614 = pneg %p613
      $region46: #{transformer_forward.1} parent=5 // pred_check_branch
        %616 = sbr.rel (%p614) target = $region48
      $region47: #{transformer_forward.1} parent=5 // pred_region
        // Predicated region
        $region49: #{transformer_forward.1} parent=47 // pred_check
          %p617 = pneg %p62
        $region50: #{transformer_forward.1} parent=47 // pred_check_branch
          %619 = sbr.rel (%p617) target = $region52
        $region51: #{transformer_forward.1} parent=47 // pred_region
          %p620 = scmp.lt.s32.totalorder %s37, 1
          %s621 = scalar_select %p620, %s37, 1
          %s622 = smul.addr %s621, 4
          %s623 = scalar_lea.vmem %s0, %s622
        $region52: #{transformer_forward.1} parent=47 // pred_fallthru
          _
        // Predicated region
        $region53: #{transformer_forward.1} parent=47 // pred_check
          %p624 = pneg %p214
        $region54: #{transformer_forward.1} parent=47 // pred_check_branch
          %626 = sbr.rel (%p624) target = $region56
        $region55: #{transformer_forward.1} parent=47 // pred_region
          %p627 = scmp.lt.s32.totalorder %s38, 1
          %s628 = scalar_select %p627, %s38, 1
          %s629 = smul.addr %s628, 4
          %s630 = smul.addr %s629, 4
          %s631 = scalar_lea.vmem %s7, %s630
        $region56: #{transformer_forward.1} parent=47 // pred_fallthru
          _
        // Predicated region
        $region57: #{transformer_forward.1} parent=47 // pred_check
          %p632 = pneg %p240
        $region58: #{transformer_forward.1} parent=47 // pred_check_branch
          %634 = sbr.rel (%p632) target = $region60
        $region59: #{transformer_forward.1} parent=47 // pred_region
          %p635 = scmp.lt.s32.totalorder %s38, 1
          %s636 = scalar_select %p635, %s38, 1
          %s637 = scalar_lea.vmem %s8, %s636
        $region60: #{transformer_forward.1} parent=47 // pred_fallthru
          _
        // Predicated region
        $region61: #{transformer_forward.1} parent=47 // pred_check
          %p638 = pneg %p266
        $region62: #{transformer_forward.1} parent=47 // pred_check_branch
          %640 = sbr.rel (%p638) target = $region64
        $region63: #{transformer_forward.1} parent=47 // pred_region
          %p641 = scmp.lt.s32.totalorder %s38, 1
          %s642 = scalar_select %p641, %s38, 1
          %s643 = smul.addr %s642, 4
          %s644 = smul.addr %s643, 4
          %s645 = scalar_lea.vmem %s9, %s644
        $region64: #{transformer_forward.1} parent=47 // pred_fallthru
          _
        // Predicated region
        $region65: #{transformer_forward.1} parent=47 // pred_check
          %p646 = pneg %p292
        $region66: #{transformer_forward.1} parent=47 // pred_check_branch
          %648 = sbr.rel (%p646) target = $region68
        $region67: #{transformer_forward.1} parent=47 // pred_region
          %p649 = scmp.lt.s32.totalorder %s38, 1
          %s650 = scalar_select %p649, %s38, 1
          %s651 = scalar_lea.vmem %s10, %s650
        $region68: #{transformer_forward.1} parent=47 // pred_fallthru
          _
        // Predicated region
        $region69: #{transformer_forward.1} parent=47 // pred_check
          %p652 = pneg %p318
        $region70: #{transformer_forward.1} parent=47 // pred_check_branch
          %654 = sbr.rel (%p652) target = $region72
        $region71: #{transformer_forward.1} parent=47 // pred_region
          %p655 = scmp.lt.s32.totalorder %s38, 1
          %s656 = scalar_select %p655, %s38, 1
          %s657 = scalar_lea.vmem %s11, %s656
        $region72: #{transformer_forward.1} parent=47 // pred_fallthru
          _
        // Predicated region
        $region73: #{transformer_forward.1} parent=47 // pred_check
          %p658 = pneg %p344
        $region74: #{transformer_forward.1} parent=47 // pred_check_branch
          %660 = sbr.rel (%p658) target = $region76
        $region75: #{transformer_forward.1} parent=47 // pred_region
          %p661 = scmp.lt.s32.totalorder %s38, 1
          %s662 = scalar_select %p661, %s38, 1
          %s663 = scalar_lea.vmem %s12, %s662
        $region76: #{transformer_forward.1} parent=47 // pred_fallthru
          _
        // Predicated region
        $region77: #{transformer_forward.1} parent=47 // pred_check
          %p664 = pneg %p370
        $region78: #{transformer_forward.1} parent=47 // pred_check_branch
          %666 = sbr.rel (%p664) target = $region80
        $region79: #{transformer_forward.1} parent=47 // pred_region
          %p667 = scmp.lt.s32.totalorder %s38, 1
          %s668 = scalar_select %p667, %s38, 1
          %s669 = smul.addr %s668, 64
          %s670 = smul.addr %s669, 4
          %s671 = scalar_lea.vmem %s13, %s670
        $region80: #{transformer_forward.1} parent=47 // pred_fallthru
          _
        // Predicated region
        $region81: #{transformer_forward.1} parent=47 // pred_check
          %p672 = pneg %p396
        $region82: #{transformer_forward.1} parent=47 // pred_check_branch
          %674 = sbr.rel (%p672) target = $region84
        $region83: #{transformer_forward.1} parent=47 // pred_region
          %p675 = scmp.lt.s32.totalorder %s38, 1
          %s676 = scalar_select %p675, %s38, 1
          %s677 = smul.addr %s676, 16
          %s678 = scalar_lea.vmem %s14, %s677
        $region84: #{transformer_forward.1} parent=47 // pred_fallthru
          _
        // Predicated region
        $region85: #{transformer_forward.1} parent=47 // pred_check
          %p679 = pneg %p422
        $region86: #{transformer_forward.1} parent=47 // pred_check_branch
          %681 = sbr.rel (%p679) target = $region88
        $region87: #{transformer_forward.1} parent=47 // pred_region
          %p682 = scmp.lt.s32.totalorder %s38, 1
          %s683 = scalar_select %p682, %s38, 1
          %s684 = smul.addr %s683, 256
          %s685 = smul.addr %s684, 4
          %s686 = scalar_lea.vmem %s15, %s685
        $region88: #{transformer_forward.1} parent=47 // pred_fallthru
          _
        // Predicated region
        $region89: #{transformer_forward.1} parent=47 // pred_check
          %p687 = pneg %p448
        $region90: #{transformer_forward.1} parent=47 // pred_check_branch
          %689 = sbr.rel (%p687) target = $region92
        $region91: #{transformer_forward.1} parent=47 // pred_region
          %p690 = scmp.lt.s32.totalorder %s38, 1
          %s691 = scalar_select %p690, %s38, 1
          %s692 = scalar_lea.vmem %s16, %s691
        $region92: #{transformer_forward.1} parent=47 // pred_fallthru
          _
        // Predicated region
        $region93: #{transformer_forward.1} parent=47 // pred_check
          %p693 = pneg %p474
        $region94: #{transformer_forward.1} parent=47 // pred_check_branch
          %695 = sbr.rel (%p693) target = $region96
        $region95: #{transformer_forward.1} parent=47 // pred_region
          %p696 = scmp.lt.s32.totalorder %s38, 1
          %s697 = scalar_select %p696, %s38, 1
          %s698 = scalar_lea.vmem %s17, %s697
        $region96: #{transformer_forward.1} parent=47 // pred_fallthru
          _
        // Predicated region
        $region97: #{transformer_forward.1} parent=47 // pred_check
          %p699 = pneg %p500
        $region98: #{transformer_forward.1} parent=47 // pred_check_branch
          %701 = sbr.rel (%p699) target = $region100
        $region99: #{transformer_forward.1} parent=47 // pred_region
          %p702 = scmp.lt.s32.totalorder %s38, 1
          %s703 = scalar_select %p702, %s38, 1
          %s704 = scalar_lea.vmem %s18, %s703
        $region100: #{transformer_forward.1} parent=47 // pred_fallthru
          _
      $region48: #{transformer_forward.1} parent=5 // pred_fallthru
        _
      %p705 = scmp.le.s32.totalorder 1, %s30
      %p706 = scmp.lt.s32.totalorder %s30, 5
      %p707 = pnand %p705, %p706
      %p708 = pneg %p707
      // Predicated region
      $region101: #{transformer_forward.1} parent=5 // pred_check
        _
      $region102: #{transformer_forward.1} parent=5 // pred_check_branch
        %710 = sbr.rel (%p707) target = $region104
      $region103: #{transformer_forward.1} parent=5 // pred_region
        %s711 = ssub.s32 %s30, 1
        %p712 = scmp.lt.s32.totalorder %s39, 1
        %s713 = scalar_select %p712, %s39, 1
        %s714 = smul.addr %s713, 4
        %s715 = scalar_lea.vmem %s0, %s714
        %p716 = pneg %p68
        %p717 = pneg %p65
        %p718 = pneg %p89
        %p719 = pneg %p86
        %p720 = pneg %p110
        %p721 = pneg %p107
        %p722 = pneg %p131
        %p723 = pneg %p128
        %p724 = pneg %p152
        %p725 = pneg %p149
        %p726 = pneg %p173
        %p727 = pneg %p170
        %p728 = pneg %p194
        %p729 = pneg %p191
        %p730 = scmp.lt.s32.totalorder %s40, 1
        %s731 = scalar_select %p730, %s40, 1
        %s732 = smul.addr %s731, 4
        %s733 = smul.addr %s732, 4
        %s734 = scalar_lea.vmem %s7, %s733
        %p735 = pneg %p220
        %p736 = pneg %p217
        %p737 = scmp.lt.s32.totalorder %s40, 1
        %s738 = scalar_select %p737, %s40, 1
        %s739 = scalar_lea.vmem %s8, %s738
        %p740 = pneg %p246
        %p741 = pneg %p243
        %p742 = scmp.lt.s32.totalorder %s40, 1
        %s743 = scalar_select %p742, %s40, 1
        %s744 = smul.addr %s743, 4
        %s745 = smul.addr %s744, 4
        %s746 = scalar_lea.vmem %s9, %s745
        %p747 = pneg %p272
        %p748 = pneg %p269
        %p749 = scmp.lt.s32.totalorder %s40, 1
        %s750 = scalar_select %p749, %s40, 1
        %s751 = scalar_lea.vmem %s10, %s750
        %p752 = pneg %p298
        %p753 = pneg %p295
        %p754 = scmp.lt.s32.totalorder %s40, 1
        %s755 = scalar_select %p754, %s40, 1
        %s756 = scalar_lea.vmem %s11, %s755
        %p757 = pneg %p324
        %p758 = pneg %p321
        %p759 = scmp.lt.s32.totalorder %s40, 1
        %s760 = scalar_select %p759, %s40, 1
        %s761 = scalar_lea.vmem %s12, %s760
        %p762 = pneg %p350
        %p763 = pneg %p347
        %p764 = scmp.lt.s32.totalorder %s40, 1
        %s765 = scalar_select %p764, %s40, 1
        %s766 = smul.addr %s765, 64
        %s767 = smul.addr %s766, 4
        %s768 = scalar_lea.vmem %s13, %s767
        %p769 = pneg %p376
        %p770 = pneg %p373
        %p771 = scmp.lt.s32.totalorder %s40, 1
        %s772 = scalar_select %p771, %s40, 1
        %s773 = smul.addr %s772, 16
        %s774 = scalar_lea.vmem %s14, %s773
        %p775 = pneg %p402
        %p776 = pneg %p399
        %p777 = scmp.lt.s32.totalorder %s40, 1
        %s778 = scalar_select %p777, %s40, 1
        %s779 = smul.addr %s778, 256
        %s780 = smul.addr %s779, 4
        %s781 = scalar_lea.vmem %s15, %s780
        %p782 = pneg %p428
        %p783 = pneg %p425
        %p784 = scmp.lt.s32.totalorder %s40, 1
        %s785 = scalar_select %p784, %s40, 1
        %s786 = scalar_lea.vmem %s16, %s785
        %p787 = pneg %p454
        %p788 = pneg %p451
        %p789 = scmp.lt.s32.totalorder %s40, 1
        %s790 = scalar_select %p789, %s40, 1
        %s791 = scalar_lea.vmem %s17, %s790
        %p792 = pneg %p480
        %p793 = pneg %p477
        %p794 = scmp.lt.s32.totalorder %s40, 1
        %s795 = scalar_select %p794, %s40, 1
        %s796 = scalar_lea.vmem %s18, %s795
        %p797 = pneg %p506
        %p798 = pneg %p503
        %p799 = pneg %p527
        %p800 = pneg %p524
        %p801 = pneg %p548
        %p802 = pneg %p545
        %p803 = pneg %p574
        %p804 = pneg %p571
        %s805 = sand.u32 %s561, 1
        %s806 = scalar_lea.sflag [#allocation4], %s805
        %s807 = sand.u32 %s561, 1
        %s808 = scalar_lea.vmem [#allocation3], %s807
        %p809 = scmp.lt.s32.totalorder %s39, 1
        %s810 = scalar_select %p809, %s39, 1
        %s811 = smul.addr %s810, 4
        %s812 = scalar_lea.vmem %s0, %s811
        %p813 = scmp.lt.s32.totalorder %s40, 1
        %s814 = scalar_select %p813, %s40, 1
        %s815 = smul.addr %s814, 4
        %s816 = smul.addr %s815, 4
        %s817 = scalar_lea.vmem %s7, %s816
        %p818 = scmp.lt.s32.totalorder %s40, 1
        %s819 = scalar_select %p818, %s40, 1
        %s820 = scalar_lea.vmem %s8, %s819
        %p821 = scmp.lt.s32.totalorder %s40, 1
        %s822 = scalar_select %p821, %s40, 1
        %s823 = smul.addr %s822, 4
        %s824 = smul.addr %s823, 4
        %s825 = scalar_lea.vmem %s9, %s824
        %p826 = scmp.lt.s32.totalorder %s40, 1
        %s827 = scalar_select %p826, %s40, 1
        %s828 = scalar_lea.vmem %s10, %s827
        %p829 = scmp.lt.s32.totalorder %s40, 1
        %s830 = scalar_select %p829, %s40, 1
        %s831 = scalar_lea.vmem %s11, %s830
        %p832 = scmp.lt.s32.totalorder %s40, 1
        %s833 = scalar_select %p832, %s40, 1
        %s834 = scalar_lea.vmem %s12, %s833
        %p835 = scmp.lt.s32.totalorder %s40, 1
        %s836 = scalar_select %p835, %s40, 1
        %s837 = smul.addr %s836, 64
        %s838 = smul.addr %s837, 4
        %s839 = scalar_lea.vmem %s13, %s838
        %p840 = scmp.lt.s32.totalorder %s40, 1
        %s841 = scalar_select %p840, %s40, 1
        %s842 = smul.addr %s841, 16
        %s843 = scalar_lea.vmem %s14, %s842
        %p844 = scmp.lt.s32.totalorder %s40, 1
        %s845 = scalar_select %p844, %s40, 1
        %s846 = smul.addr %s845, 256
        %s847 = smul.addr %s846, 4
        %s848 = scalar_lea.vmem %s15, %s847
        %p849 = scmp.lt.s32.totalorder %s40, 1
        %s850 = scalar_select %p849, %s40, 1
        %s851 = scalar_lea.vmem %s16, %s850
        %p852 = scmp.lt.s32.totalorder %s40, 1
        %s853 = scalar_select %p852, %s40, 1
        %s854 = scalar_lea.vmem %s17, %s853
        %p855 = scmp.lt.s32.totalorder %s40, 1
        %s856 = scalar_select %p855, %s40, 1
        %s857 = scalar_lea.vmem %s18, %s856
        %p859 = scmp.eq.s32.totalorder %s40, 0
        // Predicated region
        $region105: #{transformer_forward.1} parent=103 // pred_check
          %p860 = pneg %p859
        $region106: #{transformer_forward.1} parent=103 // pred_check_branch
          %862 = sbr.rel (%p860) target = $region108
        $region107: #{transformer_forward.1} parent=103 // pred_region
          %v863 = vld [vmem:[%s812] sm:$0xf]
          %v864 = vld [vmem:[%s1] sm:$0xf]
          %v865 = vld [vmem:[%s1 + $0x4] sm:$0xf]
          %v866 = vld [vmem:[%s1 + $0x8] sm:$0xf]
          %v867 = vld [vmem:[%s1 + $0xc] sm:$0xf]
          %v868 = vld [vmem:[%s1 + $0x10] sm:$0xf]
          %v869 = vld [vmem:[%s1 + $0x14] sm:$0xf]
          %v870 = vld [vmem:[%s1 + $0x18] sm:$0xf]
          %v871 = vld [vmem:[%s1 + $0x1c] sm:$0xf]
          %v872 = vld [vmem:[%s1 + $0x20] sm:$0xf]
          %v873 = vld [vmem:[%s1 + $0x24] sm:$0xf]
          %v874 = vld [vmem:[%s1 + $0x28] sm:$0xf]
          %v875 = vld [vmem:[%s1 + $0x2c] sm:$0xf]
          %v876 = vld [vmem:[%s2] sm:$0x1]
          %v878 = vlaneseq
          %v879 = vshrl.u32 %v878, 7
          %v880 = vsub.s32 0, %v879
          %v881 = vrot.slane %v876, %v880
          %v895 = vunpack.c.l.b16 %v864
          %v896 = vunpack.c.l.b16 %v865
          %v897 = vunpack.c.l.b16 %v866
          %v898 = vunpack.c.l.b16 %v867
          %v899 = vunpack.c.l.b16 %v868
          %v900 = vunpack.c.l.b16 %v869
          %v901 = vunpack.c.l.b16 %v870
          %v902 = vunpack.c.l.b16 %v871
          %v903 = vunpack.c.l.b16 %v872
          %v904 = vunpack.c.l.b16 %v873
          %v905 = vunpack.c.l.b16 %v874
          %v906 = vunpack.c.l.b16 %v875
          %v907 = vpack.c.b16 %v896, %v895
          %v908 = vpack.c.b16 %v898, %v897
          %v909 = vpack.c.b16 %v900, %v899
          %v910 = vpack.c.b16 %v902, %v901
          %v911 = vpack.c.b16 %v904, %v903
          %v912 = vpack.c.b16 %v906, %v905
          %vm919 = vcmask 785408
          %v921 = vsel %vm919, %v863, 0
          %923 = vmatprep.subr.bf16.mxu0 0
          %924 = vmatpush1.bf16.msra.mxu0 %v907
          %925 = vmatprep.subr.bf16.mxu0 0
          %926 = vmatpush1.bf16.msra.mxu0 %v908
          %927 = vmatprep.subr.bf16.mxu0 0
          %928 = vmatpush1.bf16.msra.mxu0 %v909
          %929 = vmatprep.subr.bf16.mxu0 0
          %930 = vmatpush1.bf16.msra.mxu0 %v910
          %931 = vmatprep.subr.bf16.mxu0 0
          %932 = vmatpush1.bf16.msra.mxu0 %v911
          %933 = vmatprep.subr.bf16.mxu0 0
          %934 = vmatpush1.bf16.msra.mxu0 %v912
          %935 = vmatprep.subr.bf16.mxu0 0
          %936 = vmatpush1.bf16.msra.mxu0 0
          %937 = vmatprep.subr.bf16.mxu0 0
          %938 = vmatpush1.bf16.msra.mxu0 0
          %939 = vmatprep.subr.bf16.mxu0 0
          %940 = vmatpush1.bf16.msra.mxu0 0
          %941 = vmatprep.subr.bf16.mxu0 0
          %942 = vmatpush1.bf16.msra.mxu0 0
          %943 = vmatprep.subr.bf16.mxu0 0
          %944 = vmatpush1.bf16.msra.mxu0 0
          %945 = vmatprep.subr.bf16.mxu0 0
          %946 = vmatpush1.bf16.msra.mxu0 0
          %947 = vmatprep.subr.bf16.mxu0 0
          %948 = vmatpush1.bf16.msra.mxu0 0
          %949 = vmatprep.subr.bf16.mxu0 0
          %950 = vmatpush1.bf16.msra.mxu0 0
          %951 = vmatprep.subr.bf16.mxu0 0
          %952 = vmatpush1.bf16.msra.mxu0 0
          %953 = vmatprep.subr.bf16.mxu0 0
          %954 = vmatpush1.bf16.msra.mxu0 0
          %955 = vmatprep.mubr.bf16.mxu0 0
          %956 = vmatmul.mubr.bf16.gmra.mrb[0].mxu0 %v921
          %v957 = vpop.f32.mrb[0].mxu0
          %v958 = vadd.f32 %v881, %v957
          %v959 = vpop.f32.mrb[0].mxu0
          %v960 = vpop.f32.mrb[0].mxu0
          %v961 = vpop.f32.mrb[0].mxu0
          %962 = vdwg.mxu0
          %v963 = vmax.f32 %v958, 0.0
          %v964 = vpack.c.bf16 %v963, %v963
          %v965 = vld [vmem:[%s3] sm:$0xf]
          %v966 = vld [vmem:[%s4] sm:$0x1]
          %v968 = vlaneseq
          %v969 = vshrl.u32 %v968, 7
          %v970 = vsub.s32 0, %v969
          %v971 = vrot.slane %v966, %v970
          %vm973 = vcmask 64512
          %v975 = vsel %vm973, %v964, 0
          %vm977 = vcmask 1043456
          %v979 = vsel %vm977, %v965, 0
          %981 = vmatprep.subr.bf16.mxu0 0
          %982 = vmatpush1.bf16.msra.mxu0 %v979
          %983 = vmatprep.subr.bf16.mxu0 0
          %984 = vmatpush1.bf16.msra.mxu0 0
          %985 = vmatprep.subr.bf16.mxu0 0
          %986 = vmatpush1.bf16.msra.mxu0 0
          %987 = vmatprep.subr.bf16.mxu0 0
          %988 = vmatpush1.bf16.msra.mxu0 0
          %989 = vmatprep.subr.bf16.mxu0 0
          %990 = vmatpush1.bf16.msra.mxu0 0
          %991 = vmatprep.subr.bf16.mxu0 0
          %992 = vmatpush1.bf16.msra.mxu0 0
          %993 = vmatprep.subr.bf16.mxu0 0
          %994 = vmatpush1.bf16.msra.mxu0 0
          %995 = vmatprep.subr.bf16.mxu0 0
          %996 = vmatpush1.bf16.msra.mxu0 0
          %997 = vmatprep.subr.bf16.mxu0 0
          %998 = vmatpush1.bf16.msra.mxu0 0
          %999 = vmatprep.subr.bf16.mxu0 0
          %1000 = vmatpush1.bf16.msra.mxu0 0
          %1001 = vmatprep.subr.bf16.mxu0 0
          %1002 = vmatpush1.bf16.msra.mxu0 0
          %1003 = vmatprep.subr.bf16.mxu0 0
          %1004 = vmatpush1.bf16.msra.mxu0 0
          %1005 = vmatprep.subr.bf16.mxu0 0
          %1006 = vmatpush1.bf16.msra.mxu0 0
          %1007 = vmatprep.subr.bf16.mxu0 0
          %1008 = vmatpush1.bf16.msra.mxu0 0
          %1009 = vmatprep.subr.bf16.mxu0 0
          %1010 = vmatpush1.bf16.msra.mxu0 0
          %1011 = vmatprep.subr.bf16.mxu0 0
          %1012 = vmatpush1.bf16.msra.mxu0 0
          %1013 = vmatprep.mubr.bf16.mxu0 0
          %1014 = vmatmul.mubr.bf16.gmra.mrb[0].mxu0 %v975
          %v1015 = vpop.f32.mrb[0].mxu0
          %v1016 = vadd.f32 %v971, %v1015
          %v1017 = vpop.f32.mrb[0].mxu0
          %v1018 = vpop.f32.mrb[0].mxu0
          %v1019 = vpop.f32.mrb[0].mxu0
          %1020 = vdwg.mxu0
          %v1021 = vld [vmem:[%s6] sm:$0xff]
          %v1022 = vadd.f32 %v1016, %v1021
          %v1023 = vld [vmem:[%s5] sm:$0x1]
          %vm1024 = vcmask 253952
          %1025 = vst.msk [vmem:[#allocation2] sm:$0x1] %vm1024, %v1023
          %vm1026 = vcmask 261120
          %1027 = vst.msk [vmem:[#allocation2 + $0x1] sm:$0xff] %vm1026, %v1022
          %vm1028 = vcmask 260096
          %1029 = vst.msk [vmem:[#allocation2 + $0x9] sm:$0x7f] %vm1028, 0.0
        $region108: #{transformer_forward.1} parent=103 // pred_fallthru
          _
        %v1030 = vld [vmem:[#allocation2] sm:$0xff]
        %v1031 = vld [vmem:[#allocation2 + $0x8] sm:$0xff]
        %v1032 = vpack.c.bf16 %v1031, %v1030
        %v1033 = vld [vmem:[%s817] sm:$0xf]
        %v1034 = vld [vmem:[%s817 + $0x4] sm:$0xf]
        %v1035 = vld [vmem:[%s817 + $0x8] sm:$0xf]
        %v1036 = vld [vmem:[%s817 + $0xc] sm:$0xf]
        %v1037 = vld [vmem:[%s820] sm:$0x1]
        %v1039 = vlaneseq
        %v1040 = vshrl.u32 %v1039, 7
        %v1041 = vsub.s32 0, %v1040
        %v1042 = vrot.slane %v1037, %v1041
        %v1048 = vunpack.c.l.b16 %v1033
        %v1049 = vunpack.c.l.b16 %v1034
        %v1050 = vunpack.c.l.b16 %v1035
        %v1051 = vunpack.c.l.b16 %v1036
        %v1052 = vpack.c.b16 %v1049, %v1048
        %v1053 = vpack.c.b16 %v1051, %v1050
        %vm1056 = vcmask 261120
        %v1058 = vsel %vm1056, %v1032, 0
        %1060 = vmatprep.subr.bf16.mxu0 0
        %1061 = vmatpush1.bf16.msra.mxu0 %v1052
        %1062 = vmatprep.subr.bf16.mxu0 0
        %1063 = vmatpush1.bf16.msra.mxu0 %v1053
        %1064 = vmatprep.subr.bf16.mxu0 0
        %1065 = vmatpush1.bf16.msra.mxu0 0
        %1066 = vmatprep.subr.bf16.mxu0 0
        %1067 = vmatpush1.bf16.msra.mxu0 0
        %1068 = vmatprep.subr.bf16.mxu0 0
        %1069 = vmatpush1.bf16.msra.mxu0 0
        %1070 = vmatprep.subr.bf16.mxu0 0
        %1071 = vmatpush1.bf16.msra.mxu0 0
        %1072 = vmatprep.subr.bf16.mxu0 0
        %1073 = vmatpush1.bf16.msra.mxu0 0
        %1074 = vmatprep.subr.bf16.mxu0 0
        %1075 = vmatpush1.bf16.msra.mxu0 0
        %1076 = vmatprep.subr.bf16.mxu0 0
        %1077 = vmatpush1.bf16.msra.mxu0 0
        %1078 = vmatprep.subr.bf16.mxu0 0
        %1079 = vmatpush1.bf16.msra.mxu0 0
        %1080 = vmatprep.subr.bf16.mxu0 0
        %1081 = vmatpush1.bf16.msra.mxu0 0
        %1082 = vmatprep.subr.bf16.mxu0 0
        %1083 = vmatpush1.bf16.msra.mxu0 0
        %1084 = vmatprep.subr.bf16.mxu0 0
        %1085 = vmatpush1.bf16.msra.mxu0 0
        %1086 = vmatprep.subr.bf16.mxu0 0
        %1087 = vmatpush1.bf16.msra.mxu0 0
        %1088 = vmatprep.subr.bf16.mxu0 0
        %1089 = vmatpush1.bf16.msra.mxu0 0
        %1090 = vmatprep.subr.bf16.mxu0 0
        %1091 = vmatpush1.bf16.msra.mxu0 0
        %1092 = vmatprep.mubr.bf16.mxu0 0
        %1093 = vmatmul.mubr.bf16.gmra.mrb[0].mxu0 %v1058
        %v1094 = vpop.f32.mrb[0].mxu0
        %v1095 = vadd.f32 %v1042, %v1094
        %v1096 = vpop.f32.mrb[0].mxu0
        %v1097 = vpop.f32.mrb[0].mxu0
        %v1098 = vadd.f32 %v1042, %v1097
        %v1099 = vpop.f32.mrb[0].mxu0
        %1100 = vdwg.mxu0
        %v1101 = vlaneseq
        %v1102 = vand.u32 %v1101, 127
        %vm1103 = vcmp.lt.s32.totalorder %v1102, 9
        %v1104 = vsel %vm1103, 0.0, -1e+30
        %v1105 = vmul.f32 %v1095, 0.35355338
        %v1106 = vmul.f32 %v1098, 0.35355338
        %1109 = vrot.lane.b32.xlu0 %v1095, 96
        %v1110 = vpop.permute.xlu0 %1109
        %1111 = vrot.lane.b32.xlu0 %v1098, 96
        %v1112 = vpop.permute.xlu0 %1111
        %vm1113 = vcmask 64512
        %v1115 = vsel %vm1113, %v1105, 0
        %v1118 = vsel %vm1113, %v1106, 0
        %v1120 = vsel %vm1113, %v1110, 0
        %v1122 = vsel %vm1113, %v1112, 0
        %1124 = vmatprep.subr.mxu0 0.0
        %1125 = vmatpush1.xpose.msra.mxu0 %v1120
        %1126 = vmatprep.subr.mxu0 0.0
        %1127 = vmatpush1.xpose.msra.mxu0 %v1122
        %1128 = vmatprep.subr.mxu0 0.0
        %1129 = vmatpush1.xpose.msra.mxu0 0.0
        %1130 = vmatprep.subr.mxu0 0.0
        %1131 = vmatpush1.xpose.msra.mxu0 0.0
        %1132 = vmatprep.subr.mxu0 0.0
        %1133 = vmatpush1.xpose.msra.mxu0 0.0
        %1134 = vmatprep.subr.mxu0 0.0
        %1135 = vmatpush1.xpose.msra.mxu0 0.0
        %1136 = vmatprep.subr.mxu0 0.0
        %1137 = vmatpush1.xpose.msra.mxu0 0.0
        %1138 = vmatprep.subr.mxu0 0.0
        %1139 = vmatpush1.xpose.msra.mxu0 0.0
        %1140 = vmatprep.subr.mxu0 0.0
        %1141 = vmatpush1.xpose.msra.mxu0 0.0
        %1142 = vmatprep.subr.mxu0 0.0
        %1143 = vmatpush1.xpose.msra.mxu0 0.0
        %1144 = vmatprep.subr.mxu0 0.0
        %1145 = vmatpush1.xpose.msra.mxu0 0.0
        %1146 = vmatprep.subr.mxu0 0.0
        %1147 = vmatpush1.xpose.msra.mxu0 0.0
        %1148 = vmatprep.subr.mxu0 0.0
        %1149 = vmatpush1.xpose.msra.mxu0 0.0
        %1150 = vmatprep.subr.mxu0 0.0
        %1151 = vmatpush1.xpose.msra.mxu0 0.0
        %1152 = vmatprep.subr.mxu0 0.0
        %1153 = vmatpush1.xpose.msra.mxu0 0.0
        %1154 = vmatprep.subr.mxu0 0.0
        %1155 = vmatpush1.xpose.msra.mxu0 0.0
        %1156 = vmatprep.subr.mxu0 0.0
        %1157 = vmatpush1.xpose.msra.mxu0 0.0
        %1158 = vmatprep.subr.mxu0 0.0
        %1159 = vmatpush1.xpose.msra.mxu0 0.0
        %1160 = vmatprep.subr.mxu0 0.0
        %1161 = vmatpush1.xpose.msra.mxu0 0.0
        %1162 = vmatprep.subr.mxu0 0.0
        %1163 = vmatpush1.xpose.msra.mxu0 0.0
        %1164 = vmatprep.subr.mxu0 0.0
        %1165 = vmatpush1.xpose.msra.mxu0 0.0
        %1166 = vmatprep.subr.mxu0 0.0
        %1167 = vmatpush1.xpose.msra.mxu0 0.0
        %1168 = vmatprep.subr.mxu0 0.0
        %1169 = vmatpush1.xpose.msra.mxu0 0.0
        %1170 = vmatprep.subr.mxu0 0.0
        %1171 = vmatpush1.xpose.msra.mxu0 0.0
        %1172 = vmatprep.subr.mxu0 0.0
        %1173 = vmatpush1.xpose.msra.mxu0 0.0
        %1174 = vmatprep.subr.mxu0 0.0
        %1175 = vmatpush1.xpose.msra.mxu0 0.0
        %1176 = vmatprep.subr.mxu0 0.0
        %1177 = vmatpush1.xpose.msra.mxu0 0.0
        %1178 = vmatprep.subr.mxu0 0.0
        %1179 = vmatpush1.xpose.msra.mxu0 0.0
        %1180 = vmatprep.subr.mxu0 0.0
        %1181 = vmatpush1.xpose.msra.mxu0 0.0
        %1182 = vmatprep.subr.mxu0 0.0
        %1183 = vmatpush1.xpose.msra.mxu0 0.0
        %1184 = vmatprep.subr.mxu0 0.0
        %1185 = vmatpush1.xpose.msra.mxu0 0.0
        %1186 = vmatprep.subr.mxu0 0.0
        %1187 = vmatpush1.xpose.msra.mxu0 0.0
        %1188 = vmatprep.mubr.f32.mxu0 0.0
        %1189 = vmatmul.mubr.f32.gmra.mrb[0].mxu0 %v1115
        %v1190 = vpop.f32.mrb[0].mxu0
        %v1191 = vadd.f32 %v1104, %v1190
        %v1192 = vpop.f32.mrb[0].mxu0
        %1193 = vmatprep.mubr.f32.mxu0 0.0
        %1194 = vmatmul.mubr.f32.gmra.mrb[0].mxu0 %v1118
        %v1195 = vpop.f32.mrb[0].mxu0
        %v1196 = vadd.f32 %v1104, %v1195
        %v1197 = vpop.f32.mrb[0].mxu0
        %1198 = vdwg.mxu0
        %vm1199 = vcmask 130048
        %v1200 = vsel %vm1199, %v1191, -inf
        %1201 = vmax.xlane.f32.xlu0 %v1200
        %v1202 = vpop.xlane.xlu0 %1201
        %v1203 = vsel %vm1199, %v1196, -inf
        %1204 = vmax.xlane.f32.xlu0 %v1203
        %v1205 = vpop.xlane.xlu0 %1204
        %v1206 = vsub.f32 %v1191, %v1202
        %v1207 = vsub.f32 %v1196, %v1205
        %v1208 = vmul.f32 %v1206, 1.442695
        %v1209 = vpow.pop %v1208
        %v1210 = vmul.f32 %v1207, 1.442695
        %v1211 = vpow.pop %v1210
        %v1212 = vsel %vm1199, %v1209, 0.0
        %1213 = vadd.xlane.f32.xlu0 %v1212
        %v1214 = vpop.xlane.xlu0 %1213
        %v1215 = vsel %vm1199, %v1211, 0.0
        %1216 = vadd.xlane.f32.xlu0 %v1215
        %v1217 = vpop.xlane.xlu0 %1216
        %v1218 = vrcp.pop %v1214
        %v1219 = vmul.f32 %v1209, %v1218
        %v1220 = vrcp.pop %v1217
        %v1221 = vmul.f32 %v1211, %v1220
        %1222 = vrot.lane.b32.xlu0 %v1095, 64
        %v1223 = vpop.permute.xlu0 %1222
        %1224 = vrot.lane.b32.xlu0 %v1098, 64
        %v1225 = vpop.permute.xlu0 %1224
        %v1229 = vsel %vm1199, %v1219, 0
        %v1232 = vsel %vm1199, %v1221, 0
        %1234 = vmatprep.subr.mxu0 0.0
        %1235 = vmatpush1.msra.mxu0 %v1223
        %1236 = vmatprep.subr.mxu0 0.0
        %1237 = vmatpush1.msra.mxu0 %v1225
        %1238 = vmatprep.subr.mxu0 0.0
        %1239 = vmatpush1.msra.mxu0 0.0
        %1240 = vmatprep.subr.mxu0 0.0
        %1241 = vmatpush1.msra.mxu0 0.0
        %1242 = vmatprep.subr.mxu0 0.0
        %1243 = vmatpush1.msra.mxu0 0.0
        %1244 = vmatprep.subr.mxu0 0.0
        %1245 = vmatpush1.msra.mxu0 0.0
        %1246 = vmatprep.subr.mxu0 0.0
        %1247 = vmatpush1.msra.mxu0 0.0
        %1248 = vmatprep.subr.mxu0 0.0
        %1249 = vmatpush1.msra.mxu0 0.0
        %1250 = vmatprep.subr.mxu0 0.0
        %1251 = vmatpush1.msra.mxu0 0.0
        %1252 = vmatprep.subr.mxu0 0.0
        %1253 = vmatpush1.msra.mxu0 0.0
        %1254 = vmatprep.subr.mxu0 0.0
        %1255 = vmatpush1.msra.mxu0 0.0
        %1256 = vmatprep.subr.mxu0 0.0
        %1257 = vmatpush1.msra.mxu0 0.0
        %1258 = vmatprep.subr.mxu0 0.0
        %1259 = vmatpush1.msra.mxu0 0.0
        %1260 = vmatprep.subr.mxu0 0.0
        %1261 = vmatpush1.msra.mxu0 0.0
        %1262 = vmatprep.subr.mxu0 0.0
        %1263 = vmatpush1.msra.mxu0 0.0
        %1264 = vmatprep.subr.mxu0 0.0
        %1265 = vmatpush1.msra.mxu0 0.0
        %1266 = vmatprep.subr.mxu0 0.0
        %1267 = vmatpush1.msra.mxu0 0.0
        %1268 = vmatprep.subr.mxu0 0.0
        %1269 = vmatpush1.msra.mxu0 0.0
        %1270 = vmatprep.subr.mxu0 0.0
        %1271 = vmatpush1.msra.mxu0 0.0
        %1272 = vmatprep.subr.mxu0 0.0
        %1273 = vmatpush1.msra.mxu0 0.0
        %1274 = vmatprep.subr.mxu0 0.0
        %1275 = vmatpush1.msra.mxu0 0.0
        %1276 = vmatprep.subr.mxu0 0.0
        %1277 = vmatpush1.msra.mxu0 0.0
        %1278 = vmatprep.subr.mxu0 0.0
        %1279 = vmatpush1.msra.mxu0 0.0
        %1280 = vmatprep.subr.mxu0 0.0
        %1281 = vmatpush1.msra.mxu0 0.0
        %1282 = vmatprep.subr.mxu0 0.0
        %1283 = vmatpush1.msra.mxu0 0.0
        %1284 = vmatprep.subr.mxu0 0.0
        %1285 = vmatpush1.msra.mxu0 0.0
        %1286 = vmatprep.subr.mxu0 0.0
        %1287 = vmatpush1.msra.mxu0 0.0
        %1288 = vmatprep.subr.mxu0 0.0
        %1289 = vmatpush1.msra.mxu0 0.0
        %1290 = vmatprep.subr.mxu0 0.0
        %1291 = vmatpush1.msra.mxu0 0.0
        %1292 = vmatprep.subr.mxu0 0.0
        %1293 = vmatpush1.msra.mxu0 0.0
        %1294 = vmatprep.subr.mxu0 0.0
        %1295 = vmatpush1.msra.mxu0 0.0
        %1296 = vmatprep.subr.mxu0 0.0
        %1297 = vmatpush1.msra.mxu0 0.0
        %1298 = vmatprep.mubr.f32.mxu0 0.0
        %1299 = vmatmul.mubr.f32.gmra.mrb[0].mxu0 %v1229
        %v1300 = vpop.f32.mrb[0].mxu0
        %v1301 = vadd.f32 0.0, %v1300
        %v1302 = vpop.f32.mrb[0].mxu0
        %1303 = vmatprep.mubr.f32.mxu0 0.0
        %1304 = vmatmul.mubr.f32.gmra.mrb[0].mxu0 %v1232
        %v1305 = vpop.f32.mrb[0].mxu0
        %v1306 = vadd.f32 0.0, %v1305
        %v1307 = vpop.f32.mrb[0].mxu0
        %1308 = vdwg.mxu0
        %1309 = vrot.lane.b32.xlu0 %v1105, 120
        %v1310 = vpop.permute.xlu0 %1309
        %1311 = vrot.lane.b32.xlu0 %v1106, 120
        %v1312 = vpop.permute.xlu0 %1311
        %1313 = vrot.lane.b32.xlu0 %v1095, 88
        %v1314 = vpop.permute.xlu0 %1313
        %1315 = vrot.lane.b32.xlu0 %v1098, 88
        %v1316 = vpop.permute.xlu0 %1315
        %v1317 = vsel %vm1113, %v1310, 0
        %v1319 = vsel %vm1113, %v1312, 0
        %v1321 = vsel %vm1113, %v1314, 0
        %v1323 = vsel %vm1113, %v1316, 0
        %1325 = vmatprep.subr.mxu0 0.0
        %1326 = vmatpush1.xpose.msra.mxu0 %v1321
        %1327 = vmatprep.subr.mxu0 0.0
        %1328 = vmatpush1.xpose.msra.mxu0 %v1323
        %1329 = vmatprep.subr.mxu0 0.0
        %1330 = vmatpush1.xpose.msra.mxu0 0.0
        %1331 = vmatprep.subr.mxu0 0.0
        %1332 = vmatpush1.xpose.msra.mxu0 0.0
        %1333 = vmatprep.subr.mxu0 0.0
        %1334 = vmatpush1.xpose.msra.mxu0 0.0
        %1335 = vmatprep.subr.mxu0 0.0
        %1336 = vmatpush1.xpose.msra.mxu0 0.0
        %1337 = vmatprep.subr.mxu0 0.0
        %1338 = vmatpush1.xpose.msra.mxu0 0.0
        %1339 = vmatprep.subr.mxu0 0.0
        %1340 = vmatpush1.xpose.msra.mxu0 0.0
        %1341 = vmatprep.subr.mxu0 0.0
        %1342 = vmatpush1.xpose.msra.mxu0 0.0
        %1343 = vmatprep.subr.mxu0 0.0
        %1344 = vmatpush1.xpose.msra.mxu0 0.0
        %1345 = vmatprep.subr.mxu0 0.0
        %1346 = vmatpush1.xpose.msra.mxu0 0.0
        %1347 = vmatprep.subr.mxu0 0.0
        %1348 = vmatpush1.xpose.msra.mxu0 0.0
        %1349 = vmatprep.subr.mxu0 0.0
        %1350 = vmatpush1.xpose.msra.mxu0 0.0
        %1351 = vmatprep.subr.mxu0 0.0
        %1352 = vmatpush1.xpose.msra.mxu0 0.0
        %1353 = vmatprep.subr.mxu0 0.0
        %1354 = vmatpush1.xpose.msra.mxu0 0.0
        %1355 = vmatprep.subr.mxu0 0.0
        %1356 = vmatpush1.xpose.msra.mxu0 0.0
        %1357 = vmatprep.subr.mxu0 0.0
        %1358 = vmatpush1.xpose.msra.mxu0 0.0
        %1359 = vmatprep.subr.mxu0 0.0
        %1360 = vmatpush1.xpose.msra.mxu0 0.0
        %1361 = vmatprep.subr.mxu0 0.0
        %1362 = vmatpush1.xpose.msra.mxu0 0.0
        %1363 = vmatprep.subr.mxu0 0.0
        %1364 = vmatpush1.xpose.msra.mxu0 0.0
        %1365 = vmatprep.subr.mxu0 0.0
        %1366 = vmatpush1.xpose.msra.mxu0 0.0
        %1367 = vmatprep.subr.mxu0 0.0
        %1368 = vmatpush1.xpose.msra.mxu0 0.0
        %1369 = vmatprep.subr.mxu0 0.0
        %1370 = vmatpush1.xpose.msra.mxu0 0.0
        %1371 = vmatprep.subr.mxu0 0.0
        %1372 = vmatpush1.xpose.msra.mxu0 0.0
        %1373 = vmatprep.subr.mxu0 0.0
        %1374 = vmatpush1.xpose.msra.mxu0 0.0
        %1375 = vmatprep.subr.mxu0 0.0
        %1376 = vmatpush1.xpose.msra.mxu0 0.0
        %1377 = vmatprep.subr.mxu0 0.0
        %1378 = vmatpush1.xpose.msra.mxu0 0.0
        %1379 = vmatprep.subr.mxu0 0.0
        %1380 = vmatpush1.xpose.msra.mxu0 0.0
        %1381 = vmatprep.subr.mxu0 0.0
        %1382 = vmatpush1.xpose.msra.mxu0 0.0
        %1383 = vmatprep.subr.mxu0 0.0
        %1384 = vmatpush1.xpose.msra.mxu0 0.0
        %1385 = vmatprep.subr.mxu0 0.0
        %1386 = vmatpush1.xpose.msra.mxu0 0.0
        %1387 = vmatprep.subr.mxu0 0.0
        %1388 = vmatpush1.xpose.msra.mxu0 0.0
        %1389 = vmatprep.mubr.f32.mxu0 0.0
        %1390 = vmatmul.mubr.f32.gmra.mrb[0].mxu0 %v1317
        %v1391 = vpop.f32.mrb[0].mxu0
        %v1392 = vadd.f32 %v1104, %v1391
        %v1393 = vpop.f32.mrb[0].mxu0
        %1394 = vmatprep.mubr.f32.mxu0 0.0
        %1395 = vmatmul.mubr.f32.gmra.mrb[0].mxu0 %v1319
        %v1396 = vpop.f32.mrb[0].mxu0
        %v1397 = vadd.f32 %v1104, %v1396
        %v1398 = vpop.f32.mrb[0].mxu0
        %1399 = vdwg.mxu0
        %v1400 = vsel %vm1199, %v1392, -inf
        %1401 = vmax.xlane.f32.xlu0 %v1400
        %v1402 = vpop.xlane.xlu0 %1401
        %v1403 = vsel %vm1199, %v1397, -inf
        %1404 = vmax.xlane.f32.xlu0 %v1403
        %v1405 = vpop.xlane.xlu0 %1404
        %v1406 = vsub.f32 %v1392, %v1402
        %v1407 = vsub.f32 %v1397, %v1405
        %v1408 = vmul.f32 %v1406, 1.442695
        %v1409 = vpow.pop %v1408
        %v1410 = vmul.f32 %v1407, 1.442695
        %v1411 = vpow.pop %v1410
        %v1412 = vsel %vm1199, %v1409, 0.0
        %1413 = vadd.xlane.f32.xlu0 %v1412
        %v1414 = vpop.xlane.xlu0 %1413
        %v1415 = vsel %vm1199, %v1411, 0.0
        %1416 = vadd.xlane.f32.xlu0 %v1415
        %v1417 = vpop.xlane.xlu0 %1416
        %v1418 = vrcp.pop %v1414
        %v1419 = vmul.f32 %v1409, %v1418
        %v1420 = vrcp.pop %v1417
        %v1421 = vmul.f32 %v1411, %v1420
        %1422 = vrot.lane.b32.xlu0 %v1095, 56
        %v1423 = vpop.permute.xlu0 %1422
        %1424 = vrot.lane.b32.xlu0 %v1098, 56
        %v1425 = vpop.permute.xlu0 %1424
        %v1429 = vsel %vm1199, %v1419, 0
        %v1432 = vsel %vm1199, %v1421, 0
        %1434 = vmatprep.subr.mxu0 0.0
        %1435 = vmatpush1.msra.mxu0 %v1423
        %1436 = vmatprep.subr.mxu0 0.0
        %1437 = vmatpush1.msra.mxu0 %v1425
        %1438 = vmatprep.subr.mxu0 0.0
        %1439 = vmatpush1.msra.mxu0 0.0
        %1440 = vmatprep.subr.mxu0 0.0
        %1441 = vmatpush1.msra.mxu0 0.0
        %1442 = vmatprep.subr.mxu0 0.0
        %1443 = vmatpush1.msra.mxu0 0.0
        %1444 = vmatprep.subr.mxu0 0.0
        %1445 = vmatpush1.msra.mxu0 0.0
        %1446 = vmatprep.subr.mxu0 0.0
        %1447 = vmatpush1.msra.mxu0 0.0
        %1448 = vmatprep.subr.mxu0 0.0
        %1449 = vmatpush1.msra.mxu0 0.0
        %1450 = vmatprep.subr.mxu0 0.0
        %1451 = vmatpush1.msra.mxu0 0.0
        %1452 = vmatprep.subr.mxu0 0.0
        %1453 = vmatpush1.msra.mxu0 0.0
        %1454 = vmatprep.subr.mxu0 0.0
        %1455 = vmatpush1.msra.mxu0 0.0
        %1456 = vmatprep.subr.mxu0 0.0
        %1457 = vmatpush1.msra.mxu0 0.0
        %1458 = vmatprep.subr.mxu0 0.0
        %1459 = vmatpush1.msra.mxu0 0.0
        %1460 = vmatprep.subr.mxu0 0.0
        %1461 = vmatpush1.msra.mxu0 0.0
        %1462 = vmatprep.subr.mxu0 0.0
        %1463 = vmatpush1.msra.mxu0 0.0
        %1464 = vmatprep.subr.mxu0 0.0
        %1465 = vmatpush1.msra.mxu0 0.0
        %1466 = vmatprep.subr.mxu0 0.0
        %1467 = vmatpush1.msra.mxu0 0.0
        %1468 = vmatprep.subr.mxu0 0.0
        %1469 = vmatpush1.msra.mxu0 0.0
        %1470 = vmatprep.subr.mxu0 0.0
        %1471 = vmatpush1.msra.mxu0 0.0
        %1472 = vmatprep.subr.mxu0 0.0
        %1473 = vmatpush1.msra.mxu0 0.0
        %1474 = vmatprep.subr.mxu0 0.0
        %1475 = vmatpush1.msra.mxu0 0.0
        %1476 = vmatprep.subr.mxu0 0.0
        %1477 = vmatpush1.msra.mxu0 0.0
        %1478 = vmatprep.subr.mxu0 0.0
        %1479 = vmatpush1.msra.mxu0 0.0
        %1480 = vmatprep.subr.mxu0 0.0
        %1481 = vmatpush1.msra.mxu0 0.0
        %1482 = vmatprep.subr.mxu0 0.0
        %1483 = vmatpush1.msra.mxu0 0.0
        %1484 = vmatprep.subr.mxu0 0.0
        %1485 = vmatpush1.msra.mxu0 0.0
        %1486 = vmatprep.subr.mxu0 0.0
        %1487 = vmatpush1.msra.mxu0 0.0
        %1488 = vmatprep.subr.mxu0 0.0
        %1489 = vmatpush1.msra.mxu0 0.0
        %1490 = vmatprep.subr.mxu0 0.0
        %1491 = vmatpush1.msra.mxu0 0.0
        %1492 = vmatprep.subr.mxu0 0.0
        %1493 = vmatpush1.msra.mxu0 0.0
        %1494 = vmatprep.subr.mxu0 0.0
        %1495 = vmatpush1.msra.mxu0 0.0
        %1496 = vmatprep.subr.mxu0 0.0
        %1497 = vmatpush1.msra.mxu0 0.0
        %1498 = vmatprep.mubr.f32.mxu0 0.0
        %1499 = vmatmul.mubr.f32.gmra.mrb[0].mxu0 %v1429
        %v1500 = vpop.f32.mrb[0].mxu0
        %v1501 = vadd.f32 0.0, %v1500
        %v1502 = vpop.f32.mrb[0].mxu0
        %1503 = vmatprep.mubr.f32.mxu0 0.0
        %1504 = vmatmul.mubr.f32.gmra.mrb[0].mxu0 %v1432
        %v1505 = vpop.f32.mrb[0].mxu0
        %v1506 = vadd.f32 0.0, %v1505
        %v1507 = vpop.f32.mrb[0].mxu0
        %1508 = vdwg.mxu0
        %1509 = vrot.lane.b32.xlu0 %v1105, 112
        %v1510 = vpop.permute.xlu0 %1509
        %1511 = vrot.lane.b32.xlu0 %v1106, 112
        %v1512 = vpop.permute.xlu0 %1511
        %1513 = vrot.lane.b32.xlu0 %v1095, 80
        %v1514 = vpop.permute.xlu0 %1513
        %1515 = vrot.lane.b32.xlu0 %v1098, 80
        %v1516 = vpop.permute.xlu0 %1515
        %v1517 = vsel %vm1113, %v1510, 0
        %v1519 = vsel %vm1113, %v1512, 0
        %v1521 = vsel %vm1113, %v1514, 0
        %v1523 = vsel %vm1113, %v1516, 0
        %1525 = vmatprep.subr.mxu0 0.0
        %1526 = vmatpush1.xpose.msra.mxu0 %v1521
        %1527 = vmatprep.subr.mxu0 0.0
        %1528 = vmatpush1.xpose.msra.mxu0 %v1523
        %1529 = vmatprep.subr.mxu0 0.0
        %1530 = vmatpush1.xpose.msra.mxu0 0.0
        %1531 = vmatprep.subr.mxu0 0.0
        %1532 = vmatpush1.xpose.msra.mxu0 0.0
        %1533 = vmatprep.subr.mxu0 0.0
        %1534 = vmatpush1.xpose.msra.mxu0 0.0
        %1535 = vmatprep.subr.mxu0 0.0
        %1536 = vmatpush1.xpose.msra.mxu0 0.0
        %1537 = vmatprep.subr.mxu0 0.0
        %1538 = vmatpush1.xpose.msra.mxu0 0.0
        %1539 = vmatprep.subr.mxu0 0.0
        %1540 = vmatpush1.xpose.msra.mxu0 0.0
        %1541 = vmatprep.subr.mxu0 0.0
        %1542 = vmatpush1.xpose.msra.mxu0 0.0
        %1543 = vmatprep.subr.mxu0 0.0
        %1544 = vmatpush1.xpose.msra.mxu0 0.0
        %1545 = vmatprep.subr.mxu0 0.0
        %1546 = vmatpush1.xpose.msra.mxu0 0.0
        %1547 = vmatprep.subr.mxu0 0.0
        %1548 = vmatpush1.xpose.msra.mxu0 0.0
        %1549 = vmatprep.subr.mxu0 0.0
        %1550 = vmatpush1.xpose.msra.mxu0 0.0
        %1551 = vmatprep.subr.mxu0 0.0
        %1552 = vmatpush1.xpose.msra.mxu0 0.0
        %1553 = vmatprep.subr.mxu0 0.0
        %1554 = vmatpush1.xpose.msra.mxu0 0.0
        %1555 = vmatprep.subr.mxu0 0.0
        %1556 = vmatpush1.xpose.msra.mxu0 0.0
        %1557 = vmatprep.subr.mxu0 0.0
        %1558 = vmatpush1.xpose.msra.mxu0 0.0
        %1559 = vmatprep.subr.mxu0 0.0
        %1560 = vmatpush1.xpose.msra.mxu0 0.0
        %1561 = vmatprep.subr.mxu0 0.0
        %1562 = vmatpush1.xpose.msra.mxu0 0.0
        %1563 = vmatprep.subr.mxu0 0.0
        %1564 = vmatpush1.xpose.msra.mxu0 0.0
        %1565 = vmatprep.subr.mxu0 0.0
        %1566 = vmatpush1.xpose.msra.mxu0 0.0
        %1567 = vmatprep.subr.mxu0 0.0
        %1568 = vmatpush1.xpose.msra.mxu0 0.0
        %1569 = vmatprep.subr.mxu0 0.0
        %1570 = vmatpush1.xpose.msra.mxu0 0.0
        %1571 = vmatprep.subr.mxu0 0.0
        %1572 = vmatpush1.xpose.msra.mxu0 0.0
        %1573 = vmatprep.subr.mxu0 0.0
        %1574 = vmatpush1.xpose.msra.mxu0 0.0
        %1575 = vmatprep.subr.mxu0 0.0
        %1576 = vmatpush1.xpose.msra.mxu0 0.0
        %1577 = vmatprep.subr.mxu0 0.0
        %1578 = vmatpush1.xpose.msra.mxu0 0.0
        %1579 = vmatprep.subr.mxu0 0.0
        %1580 = vmatpush1.xpose.msra.mxu0 0.0
        %1581 = vmatprep.subr.mxu0 0.0
        %1582 = vmatpush1.xpose.msra.mxu0 0.0
        %1583 = vmatprep.subr.mxu0 0.0
        %1584 = vmatpush1.xpose.msra.mxu0 0.0
        %1585 = vmatprep.subr.mxu0 0.0
        %1586 = vmatpush1.xpose.msra.mxu0 0.0
        %1587 = vmatprep.subr.mxu0 0.0
        %1588 = vmatpush1.xpose.msra.mxu0 0.0
        %1589 = vmatprep.mubr.f32.mxu0 0.0
        %1590 = vmatmul.mubr.f32.gmra.mrb[0].mxu0 %v1517
        %v1591 = vpop.f32.mrb[0].mxu0
        %v1592 = vadd.f32 %v1104, %v1591
        %v1593 = vpop.f32.mrb[0].mxu0
        %1594 = vmatprep.mubr.f32.mxu0 0.0
        %1595 = vmatmul.mubr.f32.gmra.mrb[0].mxu0 %v1519
        %v1596 = vpop.f32.mrb[0].mxu0
        %v1597 = vadd.f32 %v1104, %v1596
        %v1598 = vpop.f32.mrb[0].mxu0
        %1599 = vdwg.mxu0
        %v1600 = vsel %vm1199, %v1592, -inf
        %1601 = vmax.xlane.f32.xlu0 %v1600
        %v1602 = vpop.xlane.xlu0 %1601
        %v1603 = vsel %vm1199, %v1597, -inf
        %1604 = vmax.xlane.f32.xlu0 %v1603
        %v1605 = vpop.xlane.xlu0 %1604
        %v1606 = vsub.f32 %v1592, %v1602
        %v1607 = vsub.f32 %v1597, %v1605
        %v1608 = vmul.f32 %v1606, 1.442695
        %v1609 = vpow.pop %v1608
        %v1610 = vmul.f32 %v1607, 1.442695
        %v1611 = vpow.pop %v1610
        %v1612 = vsel %vm1199, %v1609, 0.0
        %1613 = vadd.xlane.f32.xlu0 %v1612
        %v1614 = vpop.xlane.xlu0 %1613
        %v1615 = vsel %vm1199, %v1611, 0.0
        %1616 = vadd.xlane.f32.xlu0 %v1615
        %v1617 = vpop.xlane.xlu0 %1616
        %v1618 = vrcp.pop %v1614
        %v1619 = vmul.f32 %v1609, %v1618
        %v1620 = vrcp.pop %v1617
        %v1621 = vmul.f32 %v1611, %v1620
        %1622 = vrot.lane.b32.xlu0 %v1095, 48
        %v1623 = vpop.permute.xlu0 %1622
        %1624 = vrot.lane.b32.xlu0 %v1098, 48
        %v1625 = vpop.permute.xlu0 %1624
        %v1629 = vsel %vm1199, %v1619, 0
        %v1632 = vsel %vm1199, %v1621, 0
        %1634 = vmatprep.subr.mxu0 0.0
        %1635 = vmatpush1.msra.mxu0 %v1623
        %1636 = vmatprep.subr.mxu0 0.0
        %1637 = vmatpush1.msra.mxu0 %v1625
        %1638 = vmatprep.subr.mxu0 0.0
        %1639 = vmatpush1.msra.mxu0 0.0
        %1640 = vmatprep.subr.mxu0 0.0
        %1641 = vmatpush1.msra.mxu0 0.0
        %1642 = vmatprep.subr.mxu0 0.0
        %1643 = vmatpush1.msra.mxu0 0.0
        %1644 = vmatprep.subr.mxu0 0.0
        %1645 = vmatpush1.msra.mxu0 0.0
        %1646 = vmatprep.subr.mxu0 0.0
        %1647 = vmatpush1.msra.mxu0 0.0
        %1648 = vmatprep.subr.mxu0 0.0
        %1649 = vmatpush1.msra.mxu0 0.0
        %1650 = vmatprep.subr.mxu0 0.0
        %1651 = vmatpush1.msra.mxu0 0.0
        %1652 = vmatprep.subr.mxu0 0.0
        %1653 = vmatpush1.msra.mxu0 0.0
        %1654 = vmatprep.subr.mxu0 0.0
        %1655 = vmatpush1.msra.mxu0 0.0
        %1656 = vmatprep.subr.mxu0 0.0
        %1657 = vmatpush1.msra.mxu0 0.0
        %1658 = vmatprep.subr.mxu0 0.0
        %1659 = vmatpush1.msra.mxu0 0.0
        %1660 = vmatprep.subr.mxu0 0.0
        %1661 = vmatpush1.msra.mxu0 0.0
        %1662 = vmatprep.subr.mxu0 0.0
        %1663 = vmatpush1.msra.mxu0 0.0
        %1664 = vmatprep.subr.mxu0 0.0
        %1665 = vmatpush1.msra.mxu0 0.0
        %1666 = vmatprep.subr.mxu0 0.0
        %1667 = vmatpush1.msra.mxu0 0.0
        %1668 = vmatprep.subr.mxu0 0.0
        %1669 = vmatpush1.msra.mxu0 0.0
        %1670 = vmatprep.subr.mxu0 0.0
        %1671 = vmatpush1.msra.mxu0 0.0
        %1672 = vmatprep.subr.mxu0 0.0
        %1673 = vmatpush1.msra.mxu0 0.0
        %1674 = vmatprep.subr.mxu0 0.0
        %1675 = vmatpush1.msra.mxu0 0.0
        %1676 = vmatprep.subr.mxu0 0.0
        %1677 = vmatpush1.msra.mxu0 0.0
        %1678 = vmatprep.subr.mxu0 0.0
        %1679 = vmatpush1.msra.mxu0 0.0
        %1680 = vmatprep.subr.mxu0 0.0
        %1681 = vmatpush1.msra.mxu0 0.0
        %1682 = vmatprep.subr.mxu0 0.0
        %1683 = vmatpush1.msra.mxu0 0.0
        %1684 = vmatprep.subr.mxu0 0.0
        %1685 = vmatpush1.msra.mxu0 0.0
        %1686 = vmatprep.subr.mxu0 0.0
        %1687 = vmatpush1.msra.mxu0 0.0
        %1688 = vmatprep.subr.mxu0 0.0
        %1689 = vmatpush1.msra.mxu0 0.0
        %1690 = vmatprep.subr.mxu0 0.0
        %1691 = vmatpush1.msra.mxu0 0.0
        %1692 = vmatprep.subr.mxu0 0.0
        %1693 = vmatpush1.msra.mxu0 0.0
        %1694 = vmatprep.subr.mxu0 0.0
        %1695 = vmatpush1.msra.mxu0 0.0
        %1696 = vmatprep.subr.mxu0 0.0
        %1697 = vmatpush1.msra.mxu0 0.0
        %1698 = vmatprep.mubr.f32.mxu0 0.0
        %1699 = vmatmul.mubr.f32.gmra.mrb[0].mxu0 %v1629
        %v1700 = vpop.f32.mrb[0].mxu0
        %v1701 = vadd.f32 0.0, %v1700
        %v1702 = vpop.f32.mrb[0].mxu0
        %1703 = vmatprep.mubr.f32.mxu0 0.0
        %1704 = vmatmul.mubr.f32.gmra.mrb[0].mxu0 %v1632
        %v1705 = vpop.f32.mrb[0].mxu0
        %v1706 = vadd.f32 0.0, %v1705
        %v1707 = vpop.f32.mrb[0].mxu0
        %1708 = vdwg.mxu0
        %1709 = vrot.lane.b32.xlu0 %v1105, 104
        %v1710 = vpop.permute.xlu0 %1709
        %1711 = vrot.lane.b32.xlu0 %v1106, 104
        %v1712 = vpop.permute.xlu0 %1711
        %1713 = vrot.lane.b32.xlu0 %v1095, 72
        %v1714 = vpop.permute.xlu0 %1713
        %1715 = vrot.lane.b32.xlu0 %v1098, 72
        %v1716 = vpop.permute.xlu0 %1715
        %v1717 = vsel %vm1113, %v1710, 0
        %v1719 = vsel %vm1113, %v1712, 0
        %v1721 = vsel %vm1113, %v1714, 0
        %v1723 = vsel %vm1113, %v1716, 0
        %1725 = vmatprep.subr.mxu0 0.0
        %1726 = vmatpush1.xpose.msra.mxu0 %v1721
        %1727 = vmatprep.subr.mxu0 0.0
        %1728 = vmatpush1.xpose.msra.mxu0 %v1723
        %1729 = vmatprep.subr.mxu0 0.0
        %1730 = vmatpush1.xpose.msra.mxu0 0.0
        %1731 = vmatprep.subr.mxu0 0.0
        %1732 = vmatpush1.xpose.msra.mxu0 0.0
        %1733 = vmatprep.subr.mxu0 0.0
        %1734 = vmatpush1.xpose.msra.mxu0 0.0
        %1735 = vmatprep.subr.mxu0 0.0
        %1736 = vmatpush1.xpose.msra.mxu0 0.0
        %1737 = vmatprep.subr.mxu0 0.0
        %1738 = vmatpush1.xpose.msra.mxu0 0.0
        %1739 = vmatprep.subr.mxu0 0.0
        %1740 = vmatpush1.xpose.msra.mxu0 0.0
        %1741 = vmatprep.subr.mxu0 0.0
        %1742 = vmatpush1.xpose.msra.mxu0 0.0
        %1743 = vmatprep.subr.mxu0 0.0
        %1744 = vmatpush1.xpose.msra.mxu0 0.0
        %1745 = vmatprep.subr.mxu0 0.0
        %1746 = vmatpush1.xpose.msra.mxu0 0.0
        %1747 = vmatprep.subr.mxu0 0.0
        %1748 = vmatpush1.xpose.msra.mxu0 0.0
        %1749 = vmatprep.subr.mxu0 0.0
        %1750 = vmatpush1.xpose.msra.mxu0 0.0
        %1751 = vmatprep.subr.mxu0 0.0
        %1752 = vmatpush1.xpose.msra.mxu0 0.0
        %1753 = vmatprep.subr.mxu0 0.0
        %1754 = vmatpush1.xpose.msra.mxu0 0.0
        %1755 = vmatprep.subr.mxu0 0.0
        %1756 = vmatpush1.xpose.msra.mxu0 0.0
        %1757 = vmatprep.subr.mxu0 0.0
        %1758 = vmatpush1.xpose.msra.mxu0 0.0
        %1759 = vmatprep.subr.mxu0 0.0
        %1760 = vmatpush1.xpose.msra.mxu0 0.0
        %1761 = vmatprep.subr.mxu0 0.0
        %1762 = vmatpush1.xpose.msra.mxu0 0.0
        %1763 = vmatprep.subr.mxu0 0.0
        %1764 = vmatpush1.xpose.msra.mxu0 0.0
        %1765 = vmatprep.subr.mxu0 0.0
        %1766 = vmatpush1.xpose.msra.mxu0 0.0
        %1767 = vmatprep.subr.mxu0 0.0
        %1768 = vmatpush1.xpose.msra.mxu0 0.0
        %1769 = vmatprep.subr.mxu0 0.0
        %1770 = vmatpush1.xpose.msra.mxu0 0.0
        %1771 = vmatprep.subr.mxu0 0.0
        %1772 = vmatpush1.xpose.msra.mxu0 0.0
        %1773 = vmatprep.subr.mxu0 0.0
        %1774 = vmatpush1.xpose.msra.mxu0 0.0
        %1775 = vmatprep.subr.mxu0 0.0
        %1776 = vmatpush1.xpose.msra.mxu0 0.0
        %1777 = vmatprep.subr.mxu0 0.0
        %1778 = vmatpush1.xpose.msra.mxu0 0.0
        %1779 = vmatprep.subr.mxu0 0.0
        %1780 = vmatpush1.xpose.msra.mxu0 0.0
        %1781 = vmatprep.subr.mxu0 0.0
        %1782 = vmatpush1.xpose.msra.mxu0 0.0
        %1783 = vmatprep.subr.mxu0 0.0
        %1784 = vmatpush1.xpose.msra.mxu0 0.0
        %1785 = vmatprep.subr.mxu0 0.0
        %1786 = vmatpush1.xpose.msra.mxu0 0.0
        %1787 = vmatprep.subr.mxu0 0.0
        %1788 = vmatpush1.xpose.msra.mxu0 0.0
        %1789 = vmatprep.mubr.f32.mxu0 0.0
        %1790 = vmatmul.mubr.f32.gmra.mrb[0].mxu0 %v1717
        %v1791 = vpop.f32.mrb[0].mxu0
        %v1792 = vadd.f32 %v1104, %v1791
        %v1793 = vpop.f32.mrb[0].mxu0
        %1794 = vmatprep.mubr.f32.mxu0 0.0
        %1795 = vmatmul.mubr.f32.gmra.mrb[0].mxu0 %v1719
        %v1796 = vpop.f32.mrb[0].mxu0
        %v1797 = vadd.f32 %v1104, %v1796
        %v1798 = vpop.f32.mrb[0].mxu0
        %1799 = vdwg.mxu0
        %v1800 = vsel %vm1199, %v1792, -inf
        %1801 = vmax.xlane.f32.xlu0 %v1800
        %v1802 = vpop.xlane.xlu0 %1801
        %v1803 = vsel %vm1199, %v1797, -inf
        %1804 = vmax.xlane.f32.xlu0 %v1803
        %v1805 = vpop.xlane.xlu0 %1804
        %v1806 = vsub.f32 %v1792, %v1802
        %v1807 = vsub.f32 %v1797, %v1805
        %v1808 = vmul.f32 %v1806, 1.442695
        %v1809 = vpow.pop %v1808
        %v1810 = vmul.f32 %v1807, 1.442695
        %v1811 = vpow.pop %v1810
        %v1812 = vsel %vm1199, %v1809, 0.0
        %1813 = vadd.xlane.f32.xlu0 %v1812
        %v1814 = vpop.xlane.xlu0 %1813
        %v1815 = vsel %vm1199, %v1811, 0.0
        %1816 = vadd.xlane.f32.xlu0 %v1815
        %v1817 = vpop.xlane.xlu0 %1816
        %v1818 = vrcp.pop %v1814
        %v1819 = vmul.f32 %v1809, %v1818
        %v1820 = vrcp.pop %v1817
        %v1821 = vmul.f32 %v1811, %v1820
        %1822 = vrot.lane.b32.xlu0 %v1095, 40
        %v1823 = vpop.permute.xlu0 %1822
        %1824 = vrot.lane.b32.xlu0 %v1098, 40
        %v1825 = vpop.permute.xlu0 %1824
        %v1829 = vsel %vm1199, %v1819, 0
        %v1832 = vsel %vm1199, %v1821, 0
        %1834 = vmatprep.subr.mxu0 0.0
        %1835 = vmatpush1.msra.mxu0 %v1823
        %1836 = vmatprep.subr.mxu0 0.0
        %1837 = vmatpush1.msra.mxu0 %v1825
        %1838 = vmatprep.subr.mxu0 0.0
        %1839 = vmatpush1.msra.mxu0 0.0
        %1840 = vmatprep.subr.mxu0 0.0
        %1841 = vmatpush1.msra.mxu0 0.0
        %1842 = vmatprep.subr.mxu0 0.0
        %1843 = vmatpush1.msra.mxu0 0.0
        %1844 = vmatprep.subr.mxu0 0.0
        %1845 = vmatpush1.msra.mxu0 0.0
        %1846 = vmatprep.subr.mxu0 0.0
        %1847 = vmatpush1.msra.mxu0 0.0
        %1848 = vmatprep.subr.mxu0 0.0
        %1849 = vmatpush1.msra.mxu0 0.0
        %1850 = vmatprep.subr.mxu0 0.0
        %1851 = vmatpush1.msra.mxu0 0.0
        %1852 = vmatprep.subr.mxu0 0.0
        %1853 = vmatpush1.msra.mxu0 0.0
        %1854 = vmatprep.subr.mxu0 0.0
        %1855 = vmatpush1.msra.mxu0 0.0
        %1856 = vmatprep.subr.mxu0 0.0
        %1857 = vmatpush1.msra.mxu0 0.0
        %1858 = vmatprep.subr.mxu0 0.0
        %1859 = vmatpush1.msra.mxu0 0.0
        %1860 = vmatprep.subr.mxu0 0.0
        %1861 = vmatpush1.msra.mxu0 0.0
        %1862 = vmatprep.subr.mxu0 0.0
        %1863 = vmatpush1.msra.mxu0 0.0
        %1864 = vmatprep.subr.mxu0 0.0
        %1865 = vmatpush1.msra.mxu0 0.0
        %1866 = vmatprep.subr.mxu0 0.0
        %1867 = vmatpush1.msra.mxu0 0.0
        %1868 = vmatprep.subr.mxu0 0.0
        %1869 = vmatpush1.msra.mxu0 0.0
        %1870 = vmatprep.subr.mxu0 0.0
        %1871 = vmatpush1.msra.mxu0 0.0
        %1872 = vmatprep.subr.mxu0 0.0
        %1873 = vmatpush1.msra.mxu0 0.0
        %1874 = vmatprep.subr.mxu0 0.0
        %1875 = vmatpush1.msra.mxu0 0.0
        %1876 = vmatprep.subr.mxu0 0.0
        %1877 = vmatpush1.msra.mxu0 0.0
        %1878 = vmatprep.subr.mxu0 0.0
        %1879 = vmatpush1.msra.mxu0 0.0
        %1880 = vmatprep.subr.mxu0 0.0
        %1881 = vmatpush1.msra.mxu0 0.0
        %1882 = vmatprep.subr.mxu0 0.0
        %1883 = vmatpush1.msra.mxu0 0.0
        %1884 = vmatprep.subr.mxu0 0.0
        %1885 = vmatpush1.msra.mxu0 0.0
        %1886 = vmatprep.subr.mxu0 0.0
        %1887 = vmatpush1.msra.mxu0 0.0
        %1888 = vmatprep.subr.mxu0 0.0
        %1889 = vmatpush1.msra.mxu0 0.0
        %1890 = vmatprep.subr.mxu0 0.0
        %1891 = vmatpush1.msra.mxu0 0.0
        %1892 = vmatprep.subr.mxu0 0.0
        %1893 = vmatpush1.msra.mxu0 0.0
        %1894 = vmatprep.subr.mxu0 0.0
        %1895 = vmatpush1.msra.mxu0 0.0
        %1896 = vmatprep.subr.mxu0 0.0
        %1897 = vmatpush1.msra.mxu0 0.0
        %1898 = vmatprep.mubr.f32.mxu0 0.0
        %1899 = vmatmul.mubr.f32.gmra.mrb[0].mxu0 %v1829
        %v1900 = vpop.f32.mrb[0].mxu0
        %v1901 = vadd.f32 0.0, %v1900
        %v1902 = vpop.f32.mrb[0].mxu0
        %1903 = vmatprep.mubr.f32.mxu0 0.0
        %1904 = vmatmul.mubr.f32.gmra.mrb[0].mxu0 %v1832
        %v1905 = vpop.f32.mrb[0].mxu0
        %v1906 = vadd.f32 0.0, %v1905
        %v1907 = vpop.f32.mrb[0].mxu0
        %1908 = vdwg.mxu0
        %1911 = vrot.lane.b32.xlu0 %v1501, 8
        %v1912 = vpop.permute.xlu0 %1911
        %1913 = vrot.lane.b32.xlu0 %v1506, 8
        %v1914 = vpop.permute.xlu0 %1913
        %1919 = vrot.lane.b32.xlu0 %v1701, 16
        %v1920 = vpop.permute.xlu0 %1919
        %1921 = vrot.lane.b32.xlu0 %v1706, 16
        %v1922 = vpop.permute.xlu0 %1921
        %1927 = vrot.lane.b32.xlu0 %v1901, 24
        %v1928 = vpop.permute.xlu0 %1927
        %1929 = vrot.lane.b32.xlu0 %v1906, 24
        %v1930 = vpop.permute.xlu0 %1929
        %v1933 = vsel %vm1113, %v1301, %v1912
        %v1934 = vsel %vm1113, %v1306, %v1914
        %v1935 = vsel %vm1199, %v1933, %v1920
        %v1936 = vsel %vm1199, %v1934, %v1922
        %vm1937 = vcmask 195584
        %v1938 = vsel %vm1937, %v1935, %v1928
        %v1939 = vsel %vm1937, %v1936, %v1930
        %v1940 = vpack.c.bf16 %v1939, %v1938
        %v1941 = vld [vmem:[%s825] sm:$0xf]
        %v1942 = vld [vmem:[%s825 + $0x4] sm:$0xf]
        %v1943 = vld [vmem:[%s825 + $0x8] sm:$0xf]
        %v1944 = vld [vmem:[%s825 + $0xc] sm:$0xf]
        %v1945 = vld [vmem:[%s828] sm:$0x1]
        %v1947 = vlaneseq
        %v1948 = vshrl.u32 %v1947, 7
        %v1949 = vsub.s32 0, %v1948
        %v1950 = vrot.slane %v1945, %v1949
        %v1956 = vunpack.c.l.b16 %v1941
        %v1957 = vunpack.c.l.b16 %v1942
        %v1958 = vunpack.c.l.b16 %v1943
        %v1959 = vunpack.c.l.b16 %v1944
        %v1960 = vpack.c.b16 %v1957, %v1956
        %v1961 = vpack.c.b16 %v1959, %v1958
        %v1965 = vsel %vm1056, %v1940, 0
        %1967 = vmatprep.subr.bf16.mxu0 0
        %1968 = vmatpush1.bf16.msra.mxu0 %v1960
        %1969 = vmatprep.subr.bf16.mxu0 0
        %1970 = vmatpush1.bf16.msra.mxu0 %v1961
        %1971 = vmatprep.subr.bf16.mxu0 0
        %1972 = vmatpush1.bf16.msra.mxu0 0
        %1973 = vmatprep.subr.bf16.mxu0 0
        %1974 = vmatpush1.bf16.msra.mxu0 0
        %1975 = vmatprep.subr.bf16.mxu0 0
        %1976 = vmatpush1.bf16.msra.mxu0 0
        %1977 = vmatprep.subr.bf16.mxu0 0
        %1978 = vmatpush1.bf16.msra.mxu0 0
        %1979 = vmatprep.subr.bf16.mxu0 0
        %1980 = vmatpush1.bf16.msra.mxu0 0
        %1981 = vmatprep.subr.bf16.mxu0 0
        %1982 = vmatpush1.bf16.msra.mxu0 0
        %1983 = vmatprep.subr.bf16.mxu0 0
        %1984 = vmatpush1.bf16.msra.mxu0 0
        %1985 = vmatprep.subr.bf16.mxu0 0
        %1986 = vmatpush1.bf16.msra.mxu0 0
        %1987 = vmatprep.subr.bf16.mxu0 0
        %1988 = vmatpush1.bf16.msra.mxu0 0
        %1989 = vmatprep.subr.bf16.mxu0 0
        %1990 = vmatpush1.bf16.msra.mxu0 0
        %1991 = vmatprep.subr.bf16.mxu0 0
        %1992 = vmatpush1.bf16.msra.mxu0 0
        %1993 = vmatprep.subr.bf16.mxu0 0
        %1994 = vmatpush1.bf16.msra.mxu0 0
        %1995 = vmatprep.subr.bf16.mxu0 0
        %1996 = vmatpush1.bf16.msra.mxu0 0
        %1997 = vmatprep.subr.bf16.mxu0 0
        %1998 = vmatpush1.bf16.msra.mxu0 0
        %1999 = vmatprep.mubr.bf16.mxu0 0
        %2000 = vmatmul.mubr.bf16.gmra.mrb[0].mxu0 %v1965
        %v2001 = vpop.f32.mrb[0].mxu0
        %v2002 = vadd.f32 %v1950, %v2001
        %v2003 = vpop.f32.mrb[0].mxu0
        %v2004 = vpop.f32.mrb[0].mxu0
        %v2005 = vadd.f32 %v1950, %v2004
        %v2006 = vpop.f32.mrb[0].mxu0
        %2007 = vdwg.mxu0
        %v2008 = vadd.f32 %v1030, %v2002
        %v2009 = vadd.f32 %v1031, %v2005
        %v2010 = vsel %vm1056, %v2008, 0.0
        %2011 = vadd.xlane.f32.xlu0 %v2010
        %v2012 = vpop.xlane.xlu0 %2011
        %v2013 = vsel %vm1056, %v2009, 0.0
        %2014 = vadd.xlane.f32.xlu0 %v2013
        %v2015 = vpop.xlane.xlu0 %2014
        %v2016 = vrcp.pop 32.0
        %v2017 = vmul.f32 %v2012, %v2016
        %v2018 = vmul.f32 %v2015, %v2016
        %v2019 = vsub.f32 %v2008, %v2017
        %v2020 = vsub.f32 %v2009, %v2018
        %v2021 = vmul.f32 %v2019, %v2019
        %v2022 = vmul.f32 %v2020, %v2020
        %v2023 = vsel %vm1056, %v2021, 0.0
        %2024 = vadd.xlane.f32.xlu0 %v2023
        %v2025 = vpop.xlane.xlu0 %2024
        %v2026 = vsel %vm1056, %v2022, 0.0
        %2027 = vadd.xlane.f32.xlu0 %v2026
        %v2028 = vpop.xlane.xlu0 %2027
        %v2029 = vmul.f32 %v2025, %v2016
        %v2030 = vmul.f32 %v2028, %v2016
        %v2031 = vadd.f32 %v2029, 1e-05
        %v2032 = vadd.f32 %v2030, 1e-05
        %v2033 = vrsqrt.pop %v2031
        %v2034 = vrsqrt.pop %v2032
        %v2035 = vmul.f32 %v2019, %v2033
        %v2036 = vmul.f32 %v2020, %v2034
        %v2037 = vld [vmem:[%s831] sm:$0x1]
        %v2039 = vlaneseq
        %v2040 = vshrl.u32 %v2039, 7
        %v2041 = vsub.s32 0, %v2040
        %v2042 = vrot.slane %v2037, %v2041
        %v2044 = vmul.f32 %v2035, %v2042
        %v2045 = vmul.f32 %v2036, %v2042
        %v2046 = vld [vmem:[%s834] sm:$0x1]
        %v2048 = vlaneseq
        %v2049 = vshrl.u32 %v2048, 7
        %v2050 = vsub.s32 0, %v2049
        %v2051 = vrot.slane %v2046, %v2050
        %v2053 = vadd.f32 %v2044, %v2051
        %v2054 = vadd.f32 %v2045, %v2051
        %v2055 = vpack.c.bf16 %v2054, %v2053
        %v2056 = vld [vmem:[%s839] sm:$0xff]
        %v2057 = vld [vmem:[%s839 + $0x8] sm:$0xff]
        %v2058 = vld [vmem:[%s839 + $0x10] sm:$0xff]
        %v2059 = vld [vmem:[%s839 + $0x18] sm:$0xff]
        %v2060 = vld [vmem:[%s839 + $0x20] sm:$0xff]
        %v2061 = vld [vmem:[%s839 + $0x28] sm:$0xff]
        %v2062 = vld [vmem:[%s839 + $0x30] sm:$0xff]
        %v2063 = vld [vmem:[%s839 + $0x38] sm:$0xff]
        %v2064 = vld [vmem:[%s839 + $0x40] sm:$0xff]
        %v2065 = vld [vmem:[%s839 + $0x48] sm:$0xff]
        %v2066 = vld [vmem:[%s839 + $0x50] sm:$0xff]
        %v2067 = vld [vmem:[%s839 + $0x58] sm:$0xff]
        %v2068 = vld [vmem:[%s839 + $0x60] sm:$0xff]
        %v2069 = vld [vmem:[%s839 + $0x68] sm:$0xff]
        %v2070 = vld [vmem:[%s839 + $0x70] sm:$0xff]
        %v2071 = vld [vmem:[%s839 + $0x78] sm:$0xff]
        %v2072 = vld [vmem:[%s839 + $0x80] sm:$0xff]
        %v2073 = vld [vmem:[%s839 + $0x88] sm:$0xff]
        %v2074 = vld [vmem:[%s839 + $0x90] sm:$0xff]
        %v2075 = vld [vmem:[%s839 + $0x98] sm:$0xff]
        %v2076 = vld [vmem:[%s839 + $0xa0] sm:$0xff]
        %v2077 = vld [vmem:[%s839 + $0xa8] sm:$0xff]
        %v2078 = vld [vmem:[%s839 + $0xb0] sm:$0xff]
        %v2079 = vld [vmem:[%s839 + $0xb8] sm:$0xff]
        %v2080 = vld [vmem:[%s839 + $0xc0] sm:$0xff]
        %v2081 = vld [vmem:[%s839 + $0xc8] sm:$0xff]
        %v2082 = vld [vmem:[%s839 + $0xd0] sm:$0xff]
        %v2083 = vld [vmem:[%s839 + $0xd8] sm:$0xff]
        %v2084 = vld [vmem:[%s839 + $0xe0] sm:$0xff]
        %v2085 = vld [vmem:[%s839 + $0xe8] sm:$0xff]
        %v2086 = vld [vmem:[%s839 + $0xf0] sm:$0xff]
        %v2087 = vld [vmem:[%s839 + $0xf8] sm:$0xff]
        %v2088 = vld [vmem:[%s843] sm:$0xff]
        %v2089 = vld [vmem:[%s843 + $0x8] sm:$0xff]
        %v2092 = vlaneseq
        %v2093 = vshrl.u32 %v2092, 7
        %v2094 = vsub.s32 0, %v2093
        %v2095 = vrot.slane %v2088, %v2094
        %v2096 = vlaneseq
        %v2097 = vshrl.u32 %v2096, 7
        %v2098 = vsub.s32 1, %v2097
        %v2099 = vrot.slane %v2088, %v2098
        %v2100 = vlaneseq
        %v2101 = vshrl.u32 %v2100, 7
        %v2102 = vsub.s32 2, %v2101
        %v2103 = vrot.slane %v2088, %v2102
        %v2104 = vlaneseq
        %v2105 = vshrl.u32 %v2104, 7
        %v2106 = vsub.s32 3, %v2105
        %v2107 = vrot.slane %v2088, %v2106
        %v2108 = vlaneseq
        %v2109 = vshrl.u32 %v2108, 7
        %v2110 = vsub.s32 4, %v2109
        %v2111 = vrot.slane %v2088, %v2110
        %v2112 = vlaneseq
        %v2113 = vshrl.u32 %v2112, 7
        %v2114 = vsub.s32 5, %v2113
        %v2115 = vrot.slane %v2088, %v2114
        %v2116 = vlaneseq
        %v2117 = vshrl.u32 %v2116, 7
        %v2118 = vsub.s32 6, %v2117
        %v2119 = vrot.slane %v2088, %v2118
        %v2120 = vlaneseq
        %v2121 = vshrl.u32 %v2120, 7
        %v2122 = vsub.s32 7, %v2121
        %v2123 = vrot.slane %v2088, %v2122
        %v2124 = vlaneseq
        %v2125 = vshrl.u32 %v2124, 7
        %v2126 = vsub.s32 0, %v2125
        %v2127 = vrot.slane %v2089, %v2126
        %v2128 = vlaneseq
        %v2129 = vshrl.u32 %v2128, 7
        %v2130 = vsub.s32 1, %v2129
        %v2131 = vrot.slane %v2089, %v2130
        %v2132 = vlaneseq
        %v2133 = vshrl.u32 %v2132, 7
        %v2134 = vsub.s32 2, %v2133
        %v2135 = vrot.slane %v2089, %v2134
        %v2136 = vlaneseq
        %v2137 = vshrl.u32 %v2136, 7
        %v2138 = vsub.s32 3, %v2137
        %v2139 = vrot.slane %v2089, %v2138
        %v2140 = vlaneseq
        %v2141 = vshrl.u32 %v2140, 7
        %v2142 = vsub.s32 4, %v2141
        %v2143 = vrot.slane %v2089, %v2142
        %v2144 = vlaneseq
        %v2145 = vshrl.u32 %v2144, 7
        %v2146 = vsub.s32 5, %v2145
        %v2147 = vrot.slane %v2089, %v2146
        %v2148 = vlaneseq
        %v2149 = vshrl.u32 %v2148, 7
        %v2150 = vsub.s32 6, %v2149
        %v2151 = vrot.slane %v2089, %v2150
        %v2152 = vlaneseq
        %v2153 = vshrl.u32 %v2152, 7
        %v2154 = vsub.s32 7, %v2153
        %v2155 = vrot.slane %v2089, %v2154
        %v2204 = vunpack.c.l.b16 %v2056
        %v2205 = vunpack.c.h.b16 %v2056
        %v2206 = vunpack.c.l.b16 %v2057
        %v2207 = vunpack.c.h.b16 %v2057
        %v2208 = vunpack.c.l.b16 %v2058
        %v2209 = vunpack.c.h.b16 %v2058
        %v2210 = vunpack.c.l.b16 %v2059
        %v2211 = vunpack.c.h.b16 %v2059
        %v2212 = vunpack.c.l.b16 %v2060
        %v2213 = vunpack.c.h.b16 %v2060
        %v2214 = vunpack.c.l.b16 %v2061
        %v2215 = vunpack.c.h.b16 %v2061
        %v2216 = vunpack.c.l.b16 %v2062
        %v2217 = vunpack.c.h.b16 %v2062
        %v2218 = vunpack.c.l.b16 %v2063
        %v2219 = vunpack.c.h.b16 %v2063
        %v2220 = vunpack.c.l.b16 %v2064
        %v2221 = vunpack.c.h.b16 %v2064
        %v2222 = vunpack.c.l.b16 %v2065
        %v2223 = vunpack.c.h.b16 %v2065
        %v2224 = vunpack.c.l.b16 %v2066
        %v2225 = vunpack.c.h.b16 %v2066
        %v2226 = vunpack.c.l.b16 %v2067
        %v2227 = vunpack.c.h.b16 %v2067
        %v2228 = vunpack.c.l.b16 %v2068
        %v2229 = vunpack.c.h.b16 %v2068
        %v2230 = vunpack.c.l.b16 %v2069
        %v2231 = vunpack.c.h.b16 %v2069
        %v2232 = vunpack.c.l.b16 %v2070
        %v2233 = vunpack.c.h.b16 %v2070
        %v2234 = vunpack.c.l.b16 %v2071
        %v2235 = vunpack.c.h.b16 %v2071
        %v2236 = vunpack.c.l.b16 %v2072
        %v2237 = vunpack.c.h.b16 %v2072
        %v2238 = vunpack.c.l.b16 %v2073
        %v2239 = vunpack.c.h.b16 %v2073
        %v2240 = vunpack.c.l.b16 %v2074
        %v2241 = vunpack.c.h.b16 %v2074
        %v2242 = vunpack.c.l.b16 %v2075
        %v2243 = vunpack.c.h.b16 %v2075
        %v2244 = vunpack.c.l.b16 %v2076
        %v2245 = vunpack.c.h.b16 %v2076
        %v2246 = vunpack.c.l.b16 %v2077
        %v2247 = vunpack.c.h.b16 %v2077
        %v2248 = vunpack.c.l.b16 %v2078
        %v2249 = vunpack.c.h.b16 %v2078
        %v2250 = vunpack.c.l.b16 %v2079
        %v2251 = vunpack.c.h.b16 %v2079
        %v2252 = vunpack.c.l.b16 %v2080
        %v2253 = vunpack.c.h.b16 %v2080
        %v2254 = vunpack.c.l.b16 %v2081
        %v2255 = vunpack.c.h.b16 %v2081
        %v2256 = vunpack.c.l.b16 %v2082
        %v2257 = vunpack.c.h.b16 %v2082
        %v2258 = vunpack.c.l.b16 %v2083
        %v2259 = vunpack.c.h.b16 %v2083
        %v2260 = vunpack.c.l.b16 %v2084
        %v2261 = vunpack.c.h.b16 %v2084
        %v2262 = vunpack.c.l.b16 %v2085
        %v2263 = vunpack.c.h.b16 %v2085
        %v2264 = vunpack.c.l.b16 %v2086
        %v2265 = vunpack.c.h.b16 %v2086
        %v2266 = vunpack.c.l.b16 %v2087
        %v2267 = vunpack.c.h.b16 %v2087
        %v2268 = vpack.c.b16 %v2220, %v2204
        %v2269 = vpack.c.b16 %v2221, %v2205
        %v2270 = vpack.c.b16 %v2222, %v2206
        %v2271 = vpack.c.b16 %v2223, %v2207
        %v2272 = vpack.c.b16 %v2224, %v2208
        %v2273 = vpack.c.b16 %v2225, %v2209
        %v2274 = vpack.c.b16 %v2226, %v2210
        %v2275 = vpack.c.b16 %v2227, %v2211
        %v2276 = vpack.c.b16 %v2228, %v2212
        %v2277 = vpack.c.b16 %v2229, %v2213
        %v2278 = vpack.c.b16 %v2230, %v2214
        %v2279 = vpack.c.b16 %v2231, %v2215
        %v2280 = vpack.c.b16 %v2232, %v2216
        %v2281 = vpack.c.b16 %v2233, %v2217
        %v2282 = vpack.c.b16 %v2234, %v2218
        %v2283 = vpack.c.b16 %v2235, %v2219
        %v2284 = vpack.c.b16 %v2252, %v2236
        %v2285 = vpack.c.b16 %v2253, %v2237
        %v2286 = vpack.c.b16 %v2254, %v2238
        %v2287 = vpack.c.b16 %v2255, %v2239
        %v2288 = vpack.c.b16 %v2256, %v2240
        %v2289 = vpack.c.b16 %v2257, %v2241
        %v2290 = vpack.c.b16 %v2258, %v2242
        %v2291 = vpack.c.b16 %v2259, %v2243
        %v2292 = vpack.c.b16 %v2260, %v2244
        %v2293 = vpack.c.b16 %v2261, %v2245
        %v2294 = vpack.c.b16 %v2262, %v2246
        %v2295 = vpack.c.b16 %v2263, %v2247
        %v2296 = vpack.c.b16 %v2264, %v2248
        %v2297 = vpack.c.b16 %v2265, %v2249
        %v2298 = vpack.c.b16 %v2266, %v2250
        %v2299 = vpack.c.b16 %v2267, %v2251
        %v2333 = vsel %vm1056, %v2055, 0
        %2335 = vmatprep.subr.bf16.mxu0 %v2269
        %2336 = vmatpush1.bf16.msra.mxu0 %v2268
        %2337 = vmatprep.subr.bf16.mxu0 %v2285
        %2338 = vmatpush1.bf16.msra.mxu0 %v2284
        %2339 = vmatprep.subr.bf16.mxu0 0
        %2340 = vmatpush1.bf16.msra.mxu0 0
        %2341 = vmatprep.subr.bf16.mxu0 0
        %2342 = vmatpush1.bf16.msra.mxu0 0
        %2343 = vmatprep.subr.bf16.mxu0 0
        %2344 = vmatpush1.bf16.msra.mxu0 0
        %2345 = vmatprep.subr.bf16.mxu0 0
        %2346 = vmatpush1.bf16.msra.mxu0 0
        %2347 = vmatprep.subr.bf16.mxu0 0
        %2348 = vmatpush1.bf16.msra.mxu0 0
        %2349 = vmatprep.subr.bf16.mxu0 0
        %2350 = vmatpush1.bf16.msra.mxu0 0
        %2351 = vmatprep.subr.bf16.mxu0 0
        %2352 = vmatpush1.bf16.msra.mxu0 0
        %2353 = vmatprep.subr.bf16.mxu0 0
        %2354 = vmatpush1.bf16.msra.mxu0 0
        %2355 = vmatprep.subr.bf16.mxu0 0
        %2356 = vmatpush1.bf16.msra.mxu0 0
        %2357 = vmatprep.subr.bf16.mxu0 0
        %2358 = vmatpush1.bf16.msra.mxu0 0
        %2359 = vmatprep.subr.bf16.mxu0 0
        %2360 = vmatpush1.bf16.msra.mxu0 0
        %2361 = vmatprep.subr.bf16.mxu0 0
        %2362 = vmatpush1.bf16.msra.mxu0 0
        %2363 = vmatprep.subr.bf16.mxu0 0
        %2364 = vmatpush1.bf16.msra.mxu0 0
        %2365 = vmatprep.subr.bf16.mxu0 0
        %2366 = vmatpush1.bf16.msra.mxu0 0
        %2367 = vmatprep.mubr.bf16.mxu0 0
        %2368 = vmatmul.mubr.bf16.gmra.mrb[0].mxu0 %v2333
        %v2369 = vpop.f32.mrb[0].mxu0
        %v2370 = vadd.f32 %v2095, %v2369
        %v2371 = vpop.f32.mrb[0].mxu0
        %v2372 = vadd.f32 %v2099, %v2371
        %v2373 = vpop.f32.mrb[0].mxu0
        %v2374 = vadd.f32 %v2095, %v2373
        %v2375 = vpop.f32.mrb[0].mxu0
        %v2376 = vadd.f32 %v2099, %v2375
        %2377 = vdwg.mxu0
        %2378 = vmatprep.subr.bf16.mxu0 %v2271
        %2379 = vmatpush1.bf16.msra.mxu0 %v2270
        %2380 = vmatprep.subr.bf16.mxu0 %v2287
        %2381 = vmatpush1.bf16.msra.mxu0 %v2286
        %2382 = vmatprep.subr.bf16.mxu0 0
        %2383 = vmatpush1.bf16.msra.mxu0 0
        %2384 = vmatprep.subr.bf16.mxu0 0
        %2385 = vmatpush1.bf16.msra.mxu0 0
        %2386 = vmatprep.subr.bf16.mxu0 0
        %2387 = vmatpush1.bf16.msra.mxu0 0
        %2388 = vmatprep.subr.bf16.mxu0 0
        %2389 = vmatpush1.bf16.msra.mxu0 0
        %2390 = vmatprep.subr.bf16.mxu0 0
        %2391 = vmatpush1.bf16.msra.mxu0 0
        %2392 = vmatprep.subr.bf16.mxu0 0
        %2393 = vmatpush1.bf16.msra.mxu0 0
        %2394 = vmatprep.subr.bf16.mxu0 0
        %2395 = vmatpush1.bf16.msra.mxu0 0
        %2396 = vmatprep.subr.bf16.mxu0 0
        %2397 = vmatpush1.bf16.msra.mxu0 0
        %2398 = vmatprep.subr.bf16.mxu0 0
        %2399 = vmatpush1.bf16.msra.mxu0 0
        %2400 = vmatprep.subr.bf16.mxu0 0
        %2401 = vmatpush1.bf16.msra.mxu0 0
        %2402 = vmatprep.subr.bf16.mxu0 0
        %2403 = vmatpush1.bf16.msra.mxu0 0
        %2404 = vmatprep.subr.bf16.mxu0 0
        %2405 = vmatpush1.bf16.msra.mxu0 0
        %2406 = vmatprep.subr.bf16.mxu0 0
        %2407 = vmatpush1.bf16.msra.mxu0 0
        %2408 = vmatprep.subr.bf16.mxu0 0
        %2409 = vmatpush1.bf16.msra.mxu0 0
        %2410 = vmatprep.mubr.bf16.mxu0 0
        %2411 = vmatmul.mubr.bf16.gmra.mrb[0].mxu0 %v2333
        %v2412 = vpop.f32.mrb[0].mxu0
        %v2413 = vadd.f32 %v2103, %v2412
        %v2414 = vpop.f32.mrb[0].mxu0
        %v2415 = vadd.f32 %v2107, %v2414
        %v2416 = vpop.f32.mrb[0].mxu0
        %v2417 = vadd.f32 %v2103, %v2416
        %v2418 = vpop.f32.mrb[0].mxu0
        %v2419 = vadd.f32 %v2107, %v2418
        %2420 = vdwg.mxu0
        %2421 = vmatprep.subr.bf16.mxu0 %v2273
        %2422 = vmatpush1.bf16.msra.mxu0 %v2272
        %2423 = vmatprep.subr.bf16.mxu0 %v2289
        %2424 = vmatpush1.bf16.msra.mxu0 %v2288
        %2425 = vmatprep.subr.bf16.mxu0 0
        %2426 = vmatpush1.bf16.msra.mxu0 0
        %2427 = vmatprep.subr.bf16.mxu0 0
        %2428 = vmatpush1.bf16.msra.mxu0 0
        %2429 = vmatprep.subr.bf16.mxu0 0
        %2430 = vmatpush1.bf16.msra.mxu0 0
        %2431 = vmatprep.subr.bf16.mxu0 0
        %2432 = vmatpush1.bf16.msra.mxu0 0
        %2433 = vmatprep.subr.bf16.mxu0 0
        %2434 = vmatpush1.bf16.msra.mxu0 0
        %2435 = vmatprep.subr.bf16.mxu0 0
        %2436 = vmatpush1.bf16.msra.mxu0 0
        %2437 = vmatprep.subr.bf16.mxu0 0
        %2438 = vmatpush1.bf16.msra.mxu0 0
        %2439 = vmatprep.subr.bf16.mxu0 0
        %2440 = vmatpush1.bf16.msra.mxu0 0
        %2441 = vmatprep.subr.bf16.mxu0 0
        %2442 = vmatpush1.bf16.msra.mxu0 0
        %2443 = vmatprep.subr.bf16.mxu0 0
        %2444 = vmatpush1.bf16.msra.mxu0 0
        %2445 = vmatprep.subr.bf16.mxu0 0
        %2446 = vmatpush1.bf16.msra.mxu0 0
        %2447 = vmatprep.subr.bf16.mxu0 0
        %2448 = vmatpush1.bf16.msra.mxu0 0
        %2449 = vmatprep.subr.bf16.mxu0 0
        %2450 = vmatpush1.bf16.msra.mxu0 0
        %2451 = vmatprep.subr.bf16.mxu0 0
        %2452 = vmatpush1.bf16.msra.mxu0 0
        %2453 = vmatprep.mubr.bf16.mxu0 0
        %2454 = vmatmul.mubr.bf16.gmra.mrb[0].mxu0 %v2333
        %v2455 = vpop.f32.mrb[0].mxu0
        %v2456 = vadd.f32 %v2111, %v2455
        %v2457 = vpop.f32.mrb[0].mxu0
        %v2458 = vadd.f32 %v2115, %v2457
        %v2459 = vpop.f32.mrb[0].mxu0
        %v2460 = vadd.f32 %v2111, %v2459
        %v2461 = vpop.f32.mrb[0].mxu0
        %v2462 = vadd.f32 %v2115, %v2461
        %2463 = vdwg.mxu0
        %2464 = vmatprep.subr.bf16.mxu0 %v2275
        %2465 = vmatpush1.bf16.msra.mxu0 %v2274
        %2466 = vmatprep.subr.bf16.mxu0 %v2291
        %2467 = vmatpush1.bf16.msra.mxu0 %v2290
        %2468 = vmatprep.subr.bf16.mxu0 0
        %2469 = vmatpush1.bf16.msra.mxu0 0
        %2470 = vmatprep.subr.bf16.mxu0 0
        %2471 = vmatpush1.bf16.msra.mxu0 0
        %2472 = vmatprep.subr.bf16.mxu0 0
        %2473 = vmatpush1.bf16.msra.mxu0 0
        %2474 = vmatprep.subr.bf16.mxu0 0
        %2475 = vmatpush1.bf16.msra.mxu0 0
        %2476 = vmatprep.subr.bf16.mxu0 0
        %2477 = vmatpush1.bf16.msra.mxu0 0
        %2478 = vmatprep.subr.bf16.mxu0 0
        %2479 = vmatpush1.bf16.msra.mxu0 0
        %2480 = vmatprep.subr.bf16.mxu0 0
        %2481 = vmatpush1.bf16.msra.mxu0 0
        %2482 = vmatprep.subr.bf16.mxu0 0
        %2483 = vmatpush1.bf16.msra.mxu0 0
        %2484 = vmatprep.subr.bf16.mxu0 0
        %2485 = vmatpush1.bf16.msra.mxu0 0
        %2486 = vmatprep.subr.bf16.mxu0 0
        %2487 = vmatpush1.bf16.msra.mxu0 0
        %2488 = vmatprep.subr.bf16.mxu0 0
        %2489 = vmatpush1.bf16.msra.mxu0 0
        %2490 = vmatprep.subr.bf16.mxu0 0
        %2491 = vmatpush1.bf16.msra.mxu0 0
        %2492 = vmatprep.subr.bf16.mxu0 0
        %2493 = vmatpush1.bf16.msra.mxu0 0
        %2494 = vmatprep.subr.bf16.mxu0 0
        %2495 = vmatpush1.bf16.msra.mxu0 0
        %2496 = vmatprep.mubr.bf16.mxu0 0
        %2497 = vmatmul.mubr.bf16.gmra.mrb[0].mxu0 %v2333
        %v2498 = vpop.f32.mrb[0].mxu0
        %v2499 = vadd.f32 %v2119, %v2498
        %v2500 = vpop.f32.mrb[0].mxu0
        %v2501 = vadd.f32 %v2123, %v2500
        %v2502 = vpop.f32.mrb[0].mxu0
        %v2503 = vadd.f32 %v2119, %v2502
        %v2504 = vpop.f32.mrb[0].mxu0
        %v2505 = vadd.f32 %v2123, %v2504
        %2506 = vdwg.mxu0
        %2507 = vmatprep.subr.bf16.mxu0 %v2277
        %2508 = vmatpush1.bf16.msra.mxu0 %v2276
        %2509 = vmatprep.subr.bf16.mxu0 %v2293
        %2510 = vmatpush1.bf16.msra.mxu0 %v2292
        %2511 = vmatprep.subr.bf16.mxu0 0
        %2512 = vmatpush1.bf16.msra.mxu0 0
        %2513 = vmatprep.subr.bf16.mxu0 0
        %2514 = vmatpush1.bf16.msra.mxu0 0
        %2515 = vmatprep.subr.bf16.mxu0 0
        %2516 = vmatpush1.bf16.msra.mxu0 0
        %2517 = vmatprep.subr.bf16.mxu0 0
        %2518 = vmatpush1.bf16.msra.mxu0 0
        %2519 = vmatprep.subr.bf16.mxu0 0
        %2520 = vmatpush1.bf16.msra.mxu0 0
        %2521 = vmatprep.subr.bf16.mxu0 0
        %2522 = vmatpush1.bf16.msra.mxu0 0
        %2523 = vmatprep.subr.bf16.mxu0 0
        %2524 = vmatpush1.bf16.msra.mxu0 0
        %2525 = vmatprep.subr.bf16.mxu0 0
        %2526 = vmatpush1.bf16.msra.mxu0 0
        %2527 = vmatprep.subr.bf16.mxu0 0
        %2528 = vmatpush1.bf16.msra.mxu0 0
        %2529 = vmatprep.subr.bf16.mxu0 0
        %2530 = vmatpush1.bf16.msra.mxu0 0
        %2531 = vmatprep.subr.bf16.mxu0 0
        %2532 = vmatpush1.bf16.msra.mxu0 0
        %2533 = vmatprep.subr.bf16.mxu0 0
        %2534 = vmatpush1.bf16.msra.mxu0 0
        %2535 = vmatprep.subr.bf16.mxu0 0
        %2536 = vmatpush1.bf16.msra.mxu0 0
        %2537 = vmatprep.subr.bf16.mxu0 0
        %2538 = vmatpush1.bf16.msra.mxu0 0
        %2539 = vmatprep.mubr.bf16.mxu0 0
        %2540 = vmatmul.mubr.bf16.gmra.mrb[0].mxu0 %v2333
        %v2541 = vpop.f32.mrb[0].mxu0
        %v2542 = vadd.f32 %v2127, %v2541
        %v2543 = vpop.f32.mrb[0].mxu0
        %v2544 = vadd.f32 %v2131, %v2543
        %v2545 = vpop.f32.mrb[0].mxu0
        %v2546 = vadd.f32 %v2127, %v2545
        %v2547 = vpop.f32.mrb[0].mxu0
        %v2548 = vadd.f32 %v2131, %v2547
        %2549 = vdwg.mxu0
        %2550 = vmatprep.subr.bf16.mxu0 %v2279
        %2551 = vmatpush1.bf16.msra.mxu0 %v2278
        %2552 = vmatprep.subr.bf16.mxu0 %v2295
        %2553 = vmatpush1.bf16.msra.mxu0 %v2294
        %2554 = vmatprep.subr.bf16.mxu0 0
        %2555 = vmatpush1.bf16.msra.mxu0 0
        %2556 = vmatprep.subr.bf16.mxu0 0
        %2557 = vmatpush1.bf16.msra.mxu0 0
        %2558 = vmatprep.subr.bf16.mxu0 0
        %2559 = vmatpush1.bf16.msra.mxu0 0
        %2560 = vmatprep.subr.bf16.mxu0 0
        %2561 = vmatpush1.bf16.msra.mxu0 0
        %2562 = vmatprep.subr.bf16.mxu0 0
        %2563 = vmatpush1.bf16.msra.mxu0 0
        %2564 = vmatprep.subr.bf16.mxu0 0
        %2565 = vmatpush1.bf16.msra.mxu0 0
        %2566 = vmatprep.subr.bf16.mxu0 0
        %2567 = vmatpush1.bf16.msra.mxu0 0
        %2568 = vmatprep.subr.bf16.mxu0 0
        %2569 = vmatpush1.bf16.msra.mxu0 0
        %2570 = vmatprep.subr.bf16.mxu0 0
        %2571 = vmatpush1.bf16.msra.mxu0 0
        %2572 = vmatprep.subr.bf16.mxu0 0
        %2573 = vmatpush1.bf16.msra.mxu0 0
        %2574 = vmatprep.subr.bf16.mxu0 0
        %2575 = vmatpush1.bf16.msra.mxu0 0
        %2576 = vmatprep.subr.bf16.mxu0 0
        %2577 = vmatpush1.bf16.msra.mxu0 0
        %2578 = vmatprep.subr.bf16.mxu0 0
        %2579 = vmatpush1.bf16.msra.mxu0 0
        %2580 = vmatprep.subr.bf16.mxu0 0
        %2581 = vmatpush1.bf16.msra.mxu0 0
        %2582 = vmatprep.mubr.bf16.mxu0 0
        %2583 = vmatmul.mubr.bf16.gmra.mrb[0].mxu0 %v2333
        %v2584 = vpop.f32.mrb[0].mxu0
        %v2585 = vadd.f32 %v2135, %v2584
        %v2586 = vpop.f32.mrb[0].mxu0
        %v2587 = vadd.f32 %v2139, %v2586
        %v2588 = vpop.f32.mrb[0].mxu0
        %v2589 = vadd.f32 %v2135, %v2588
        %v2590 = vpop.f32.mrb[0].mxu0
        %v2591 = vadd.f32 %v2139, %v2590
        %2592 = vdwg.mxu0
        %2593 = vmatprep.subr.bf16.mxu0 %v2281
        %2594 = vmatpush1.bf16.msra.mxu0 %v2280
        %2595 = vmatprep.subr.bf16.mxu0 %v2297
        %2596 = vmatpush1.bf16.msra.mxu0 %v2296
        %2597 = vmatprep.subr.bf16.mxu0 0
        %2598 = vmatpush1.bf16.msra.mxu0 0
        %2599 = vmatprep.subr.bf16.mxu0 0
        %2600 = vmatpush1.bf16.msra.mxu0 0
        %2601 = vmatprep.subr.bf16.mxu0 0
        %2602 = vmatpush1.bf16.msra.mxu0 0
        %2603 = vmatprep.subr.bf16.mxu0 0
        %2604 = vmatpush1.bf16.msra.mxu0 0
        %2605 = vmatprep.subr.bf16.mxu0 0
        %2606 = vmatpush1.bf16.msra.mxu0 0
        %2607 = vmatprep.subr.bf16.mxu0 0
        %2608 = vmatpush1.bf16.msra.mxu0 0
        %2609 = vmatprep.subr.bf16.mxu0 0
        %2610 = vmatpush1.bf16.msra.mxu0 0
        %2611 = vmatprep.subr.bf16.mxu0 0
        %2612 = vmatpush1.bf16.msra.mxu0 0
        %2613 = vmatprep.subr.bf16.mxu0 0
        %2614 = vmatpush1.bf16.msra.mxu0 0
        %2615 = vmatprep.subr.bf16.mxu0 0
        %2616 = vmatpush1.bf16.msra.mxu0 0
        %2617 = vmatprep.subr.bf16.mxu0 0
        %2618 = vmatpush1.bf16.msra.mxu0 0
        %2619 = vmatprep.subr.bf16.mxu0 0
        %2620 = vmatpush1.bf16.msra.mxu0 0
        %2621 = vmatprep.subr.bf16.mxu0 0
        %2622 = vmatpush1.bf16.msra.mxu0 0
        %2623 = vmatprep.subr.bf16.mxu0 0
        %2624 = vmatpush1.bf16.msra.mxu0 0
        %2625 = vmatprep.mubr.bf16.mxu0 0
        %2626 = vmatmul.mubr.bf16.gmra.mrb[0].mxu0 %v2333
        %v2627 = vpop.f32.mrb[0].mxu0
        %v2628 = vadd.f32 %v2143, %v2627
        %v2629 = vpop.f32.mrb[0].mxu0
        %v2630 = vadd.f32 %v2147, %v2629
        %v2631 = vpop.f32.mrb[0].mxu0
        %v2632 = vadd.f32 %v2143, %v2631
        %v2633 = vpop.f32.mrb[0].mxu0
        %v2634 = vadd.f32 %v2147, %v2633
        %2635 = vdwg.mxu0
        %2636 = vmatprep.subr.bf16.mxu0 %v2283
        %2637 = vmatpush1.bf16.msra.mxu0 %v2282
        %2638 = vmatprep.subr.bf16.mxu0 %v2299
        %2639 = vmatpush1.bf16.msra.mxu0 %v2298
        %2640 = vmatprep.subr.bf16.mxu0 0
        %2641 = vmatpush1.bf16.msra.mxu0 0
        %2642 = vmatprep.subr.bf16.mxu0 0
        %2643 = vmatpush1.bf16.msra.mxu0 0
        %2644 = vmatprep.subr.bf16.mxu0 0
        %2645 = vmatpush1.bf16.msra.mxu0 0
        %2646 = vmatprep.subr.bf16.mxu0 0
        %2647 = vmatpush1.bf16.msra.mxu0 0
        %2648 = vmatprep.subr.bf16.mxu0 0
        %2649 = vmatpush1.bf16.msra.mxu0 0
        %2650 = vmatprep.subr.bf16.mxu0 0
        %2651 = vmatpush1.bf16.msra.mxu0 0
        %2652 = vmatprep.subr.bf16.mxu0 0
        %2653 = vmatpush1.bf16.msra.mxu0 0
        %2654 = vmatprep.subr.bf16.mxu0 0
        %2655 = vmatpush1.bf16.msra.mxu0 0
        %2656 = vmatprep.subr.bf16.mxu0 0
        %2657 = vmatpush1.bf16.msra.mxu0 0
        %2658 = vmatprep.subr.bf16.mxu0 0
        %2659 = vmatpush1.bf16.msra.mxu0 0
        %2660 = vmatprep.subr.bf16.mxu0 0
        %2661 = vmatpush1.bf16.msra.mxu0 0
        %2662 = vmatprep.subr.bf16.mxu0 0
        %2663 = vmatpush1.bf16.msra.mxu0 0
        %2664 = vmatprep.subr.bf16.mxu0 0
        %2665 = vmatpush1.bf16.msra.mxu0 0
        %2666 = vmatprep.subr.bf16.mxu0 0
        %2667 = vmatpush1.bf16.msra.mxu0 0
        %2668 = vmatprep.mubr.bf16.mxu0 0
        %2669 = vmatmul.mubr.bf16.gmra.mrb[0].mxu0 %v2333
        %v2670 = vpop.f32.mrb[0].mxu0
        %v2671 = vadd.f32 %v2151, %v2670
        %v2672 = vpop.f32.mrb[0].mxu0
        %v2673 = vadd.f32 %v2155, %v2672
        %v2674 = vpop.f32.mrb[0].mxu0
        %v2675 = vadd.f32 %v2151, %v2674
        %v2676 = vpop.f32.mrb[0].mxu0
        %v2677 = vadd.f32 %v2155, %v2676
        %2678 = vdwg.mxu0
        %v2679 = vmax.f32 %v2370, 0.0
        %v2680 = vmax.f32 %v2372, 0.0
        %v2681 = vmax.f32 %v2413, 0.0
        %v2682 = vmax.f32 %v2415, 0.0
        %v2683 = vmax.f32 %v2456, 0.0
        %v2684 = vmax.f32 %v2458, 0.0
        %v2685 = vmax.f32 %v2499, 0.0
        %v2686 = vmax.f32 %v2501, 0.0
        %v2687 = vmax.f32 %v2542, 0.0
        %v2688 = vmax.f32 %v2544, 0.0
        %v2689 = vmax.f32 %v2585, 0.0
        %v2690 = vmax.f32 %v2587, 0.0
        %v2691 = vmax.f32 %v2628, 0.0
        %v2692 = vmax.f32 %v2630, 0.0
        %v2693 = vmax.f32 %v2671, 0.0
        %v2694 = vmax.f32 %v2673, 0.0
        %v2695 = vmax.f32 %v2374, 0.0
        %v2696 = vmax.f32 %v2376, 0.0
        %v2697 = vmax.f32 %v2417, 0.0
        %v2698 = vmax.f32 %v2419, 0.0
        %v2699 = vmax.f32 %v2460, 0.0
        %v2700 = vmax.f32 %v2462, 0.0
        %v2701 = vmax.f32 %v2503, 0.0
        %v2702 = vmax.f32 %v2505, 0.0
        %v2703 = vmax.f32 %v2546, 0.0
        %v2704 = vmax.f32 %v2548, 0.0
        %v2705 = vmax.f32 %v2589, 0.0
        %v2706 = vmax.f32 %v2591, 0.0
        %v2707 = vmax.f32 %v2632, 0.0
        %v2708 = vmax.f32 %v2634, 0.0
        %v2709 = vmax.f32 %v2675, 0.0
        %v2710 = vmax.f32 %v2677, 0.0
        %v2711 = vpack.c.bf16 %v2695, %v2679
        %v2712 = vpack.c.bf16 %v2696, %v2680
        %v2713 = vpack.c.bf16 %v2697, %v2681
        %v2714 = vpack.c.bf16 %v2698, %v2682
        %v2715 = vpack.c.bf16 %v2699, %v2683
        %v2716 = vpack.c.bf16 %v2700, %v2684
        %v2717 = vpack.c.bf16 %v2701, %v2685
        %v2718 = vpack.c.bf16 %v2702, %v2686
        %v2719 = vpack.c.bf16 %v2703, %v2687
        %v2720 = vpack.c.bf16 %v2704, %v2688
        %v2721 = vpack.c.bf16 %v2705, %v2689
        %v2722 = vpack.c.bf16 %v2706, %v2690
        %v2723 = vpack.c.bf16 %v2707, %v2691
        %v2724 = vpack.c.bf16 %v2708, %v2692
        %v2725 = vpack.c.bf16 %v2709, %v2693
        %v2726 = vpack.c.bf16 %v2710, %v2694
        %v2727 = vld [vmem:[%s848] sm:$0xf]
        %v2728 = vld [vmem:[%s848 + $0x4] sm:$0xf]
        %v2729 = vld [vmem:[%s848 + $0x8] sm:$0xf]
        %v2730 = vld [vmem:[%s848 + $0xc] sm:$0xf]
        %v2731 = vld [vmem:[%s848 + $0x10] sm:$0xf]
        %v2732 = vld [vmem:[%s848 + $0x14] sm:$0xf]
        %v2733 = vld [vmem:[%s848 + $0x18] sm:$0xf]
        %v2734 = vld [vmem:[%s848 + $0x1c] sm:$0xf]
        %v2735 = vld [vmem:[%s848 + $0x20] sm:$0xf]
        %v2736 = vld [vmem:[%s848 + $0x24] sm:$0xf]
        %v2737 = vld [vmem:[%s848 + $0x28] sm:$0xf]
        %v2738 = vld [vmem:[%s848 + $0x2c] sm:$0xf]
        %v2739 = vld [vmem:[%s848 + $0x30] sm:$0xf]
        %v2740 = vld [vmem:[%s848 + $0x34] sm:$0xf]
        %v2741 = vld [vmem:[%s848 + $0x38] sm:$0xf]
        %v2742 = vld [vmem:[%s848 + $0x3c] sm:$0xf]
        %v2743 = vld [vmem:[%s848 + $0x40] sm:$0xf]
        %v2744 = vld [vmem:[%s848 + $0x44] sm:$0xf]
        %v2745 = vld [vmem:[%s848 + $0x48] sm:$0xf]
        %v2746 = vld [vmem:[%s848 + $0x4c] sm:$0xf]
        %v2747 = vld [vmem:[%s848 + $0x50] sm:$0xf]
        %v2748 = vld [vmem:[%s848 + $0x54] sm:$0xf]
        %v2749 = vld [vmem:[%s848 + $0x58] sm:$0xf]
        %v2750 = vld [vmem:[%s848 + $0x5c] sm:$0xf]
        %v2751 = vld [vmem:[%s848 + $0x60] sm:$0xf]
        %v2752 = vld [vmem:[%s848 + $0x64] sm:$0xf]
        %v2753 = vld [vmem:[%s848 + $0x68] sm:$0xf]
        %v2754 = vld [vmem:[%s848 + $0x6c] sm:$0xf]
        %v2755 = vld [vmem:[%s848 + $0x70] sm:$0xf]
        %v2756 = vld [vmem:[%s848 + $0x74] sm:$0xf]
        %v2757 = vld [vmem:[%s848 + $0x78] sm:$0xf]
        %v2758 = vld [vmem:[%s848 + $0x7c] sm:$0xf]
        %v2759 = vld [vmem:[%s848 + $0x80] sm:$0xf]
        %v2760 = vld [vmem:[%s848 + $0x84] sm:$0xf]
        %v2761 = vld [vmem:[%s848 + $0x88] sm:$0xf]
        %v2762 = vld [vmem:[%s848 + $0x8c] sm:$0xf]
        %v2763 = vld [vmem:[%s848 + $0x90] sm:$0xf]
        %v2764 = vld [vmem:[%s848 + $0x94] sm:$0xf]
        %v2765 = vld [vmem:[%s848 + $0x98] sm:$0xf]
        %v2766 = vld [vmem:[%s848 + $0x9c] sm:$0xf]
        %v2767 = vld [vmem:[%s848 + $0xa0] sm:$0xf]
        %v2768 = vld [vmem:[%s848 + $0xa4] sm:$0xf]
        %v2769 = vld [vmem:[%s848 + $0xa8] sm:$0xf]
        %v2770 = vld [vmem:[%s848 + $0xac] sm:$0xf]
        %v2771 = vld [vmem:[%s848 + $0xb0] sm:$0xf]
        %v2772 = vld [vmem:[%s848 + $0xb4] sm:$0xf]
        %v2773 = vld [vmem:[%s848 + $0xb8] sm:$0xf]
        %v2774 = vld [vmem:[%s848 + $0xbc] sm:$0xf]
        %v2775 = vld [vmem:[%s848 + $0xc0] sm:$0xf]
        %v2776 = vld [vmem:[%s848 + $0xc4] sm:$0xf]
        %v2777 = vld [vmem:[%s848 + $0xc8] sm:$0xf]
        %v2778 = vld [vmem:[%s848 + $0xcc] sm:$0xf]
        %v2779 = vld [vmem:[%s848 + $0xd0] sm:$0xf]
        %v2780 = vld [vmem:[%s848 + $0xd4] sm:$0xf]
        %v2781 = vld [vmem:[%s848 + $0xd8] sm:$0xf]
        %v2782 = vld [vmem:[%s848 + $0xdc] sm:$0xf]
        %v2783 = vld [vmem:[%s848 + $0xe0] sm:$0xf]
        %v2784 = vld [vmem:[%s848 + $0xe4] sm:$0xf]
        %v2785 = vld [vmem:[%s848 + $0xe8] sm:$0xf]
        %v2786 = vld [vmem:[%s848 + $0xec] sm:$0xf]
        %v2787 = vld [vmem:[%s848 + $0xf0] sm:$0xf]
        %v2788 = vld [vmem:[%s848 + $0xf4] sm:$0xf]
        %v2789 = vld [vmem:[%s848 + $0xf8] sm:$0xf]
        %v2790 = vld [vmem:[%s848 + $0xfc] sm:$0xf]
        %v2791 = vld [vmem:[%s848 + $0x100] sm:$0xf]
        %v2792 = vld [vmem:[%s848 + $0x104] sm:$0xf]
        %v2793 = vld [vmem:[%s848 + $0x108] sm:$0xf]
        %v2794 = vld [vmem:[%s848 + $0x10c] sm:$0xf]
        %v2795 = vld [vmem:[%s848 + $0x110] sm:$0xf]
        %v2796 = vld [vmem:[%s848 + $0x114] sm:$0xf]
        %v2797 = vld [vmem:[%s848 + $0x118] sm:$0xf]
        %v2798 = vld [vmem:[%s848 + $0x11c] sm:$0xf]
        %v2799 = vld [vmem:[%s848 + $0x120] sm:$0xf]
        %v2800 = vld [vmem:[%s848 + $0x124] sm:$0xf]
        %v2801 = vld [vmem:[%s848 + $0x128] sm:$0xf]
        %v2802 = vld [vmem:[%s848 + $0x12c] sm:$0xf]
        %v2803 = vld [vmem:[%s848 + $0x130] sm:$0xf]
        %v2804 = vld [vmem:[%s848 + $0x134] sm:$0xf]
        %v2805 = vld [vmem:[%s848 + $0x138] sm:$0xf]
        %v2806 = vld [vmem:[%s848 + $0x13c] sm:$0xf]
        %v2807 = vld [vmem:[%s848 + $0x140] sm:$0xf]
        %v2808 = vld [vmem:[%s848 + $0x144] sm:$0xf]
        %v2809 = vld [vmem:[%s848 + $0x148] sm:$0xf]
        %v2810 = vld [vmem:[%s848 + $0x14c] sm:$0xf]
        %v2811 = vld [vmem:[%s848 + $0x150] sm:$0xf]
        %v2812 = vld [vmem:[%s848 + $0x154] sm:$0xf]
        %v2813 = vld [vmem:[%s848 + $0x158] sm:$0xf]
        %v2814 = vld [vmem:[%s848 + $0x15c] sm:$0xf]
        %v2815 = vld [vmem:[%s848 + $0x160] sm:$0xf]
        %v2816 = vld [vmem:[%s848 + $0x164] sm:$0xf]
        %v2817 = vld [vmem:[%s848 + $0x168] sm:$0xf]
        %v2818 = vld [vmem:[%s848 + $0x16c] sm:$0xf]
        %v2819 = vld [vmem:[%s848 + $0x170] sm:$0xf]
        %v2820 = vld [vmem:[%s848 + $0x174] sm:$0xf]
        %v2821 = vld [vmem:[%s848 + $0x178] sm:$0xf]
        %v2822 = vld [vmem:[%s848 + $0x17c] sm:$0xf]
        %v2823 = vld [vmem:[%s848 + $0x180] sm:$0xf]
        %v2824 = vld [vmem:[%s848 + $0x184] sm:$0xf]
        %v2825 = vld [vmem:[%s848 + $0x188] sm:$0xf]
        %v2826 = vld [vmem:[%s848 + $0x18c] sm:$0xf]
        %v2827 = vld [vmem:[%s848 + $0x190] sm:$0xf]
        %v2828 = vld [vmem:[%s848 + $0x194] sm:$0xf]
        %v2829 = vld [vmem:[%s848 + $0x198] sm:$0xf]
        %v2830 = vld [vmem:[%s848 + $0x19c] sm:$0xf]
        %v2831 = vld [vmem:[%s848 + $0x1a0] sm:$0xf]
        %v2832 = vld [vmem:[%s848 + $0x1a4] sm:$0xf]
        %v2833 = vld [vmem:[%s848 + $0x1a8] sm:$0xf]
        %v2834 = vld [vmem:[%s848 + $0x1ac] sm:$0xf]
        %v2835 = vld [vmem:[%s848 + $0x1b0] sm:$0xf]
        %v2836 = vld [vmem:[%s848 + $0x1b4] sm:$0xf]
        %v2837 = vld [vmem:[%s848 + $0x1b8] sm:$0xf]
        %v2838 = vld [vmem:[%s848 + $0x1bc] sm:$0xf]
        %v2839 = vld [vmem:[%s848 + $0x1c0] sm:$0xf]
        %v2840 = vld [vmem:[%s848 + $0x1c4] sm:$0xf]
        %v2841 = vld [vmem:[%s848 + $0x1c8] sm:$0xf]
        %v2842 = vld [vmem:[%s848 + $0x1cc] sm:$0xf]
        %v2843 = vld [vmem:[%s848 + $0x1d0] sm:$0xf]
        %v2844 = vld [vmem:[%s848 + $0x1d4] sm:$0xf]
        %v2845 = vld [vmem:[%s848 + $0x1d8] sm:$0xf]
        %v2846 = vld [vmem:[%s848 + $0x1dc] sm:$0xf]
        %v2847 = vld [vmem:[%s848 + $0x1e0] sm:$0xf]
        %v2848 = vld [vmem:[%s848 + $0x1e4] sm:$0xf]
        %v2849 = vld [vmem:[%s848 + $0x1e8] sm:$0xf]
        %v2850 = vld [vmem:[%s848 + $0x1ec] sm:$0xf]
        %v2851 = vld [vmem:[%s848 + $0x1f0] sm:$0xf]
        %v2852 = vld [vmem:[%s848 + $0x1f4] sm:$0xf]
        %v2853 = vld [vmem:[%s848 + $0x1f8] sm:$0xf]
        %v2854 = vld [vmem:[%s848 + $0x1fc] sm:$0xf]
        %v2855 = vld [vmem:[%s848 + $0x200] sm:$0xf]
        %v2856 = vld [vmem:[%s848 + $0x204] sm:$0xf]
        %v2857 = vld [vmem:[%s848 + $0x208] sm:$0xf]
        %v2858 = vld [vmem:[%s848 + $0x20c] sm:$0xf]
        %v2859 = vld [vmem:[%s848 + $0x210] sm:$0xf]
        %v2860 = vld [vmem:[%s848 + $0x214] sm:$0xf]
        %v2861 = vld [vmem:[%s848 + $0x218] sm:$0xf]
        %v2862 = vld [vmem:[%s848 + $0x21c] sm:$0xf]
        %v2863 = vld [vmem:[%s848 + $0x220] sm:$0xf]
        %v2864 = vld [vmem:[%s848 + $0x224] sm:$0xf]
        %v2865 = vld [vmem:[%s848 + $0x228] sm:$0xf]
        %v2866 = vld [vmem:[%s848 + $0x22c] sm:$0xf]
        %v2867 = vld [vmem:[%s848 + $0x230] sm:$0xf]
        %v2868 = vld [vmem:[%s848 + $0x234] sm:$0xf]
        %v2869 = vld [vmem:[%s848 + $0x238] sm:$0xf]
        %v2870 = vld [vmem:[%s848 + $0x23c] sm:$0xf]
        %v2871 = vld [vmem:[%s848 + $0x240] sm:$0xf]
        %v2872 = vld [vmem:[%s848 + $0x244] sm:$0xf]
        %v2873 = vld [vmem:[%s848 + $0x248] sm:$0xf]
        %v2874 = vld [vmem:[%s848 + $0x24c] sm:$0xf]
        %v2875 = vld [vmem:[%s848 + $0x250] sm:$0xf]
        %v2876 = vld [vmem:[%s848 + $0x254] sm:$0xf]
        %v2877 = vld [vmem:[%s848 + $0x258] sm:$0xf]
        %v2878 = vld [vmem:[%s848 + $0x25c] sm:$0xf]
        %v2879 = vld [vmem:[%s848 + $0x260] sm:$0xf]
        %v2880 = vld [vmem:[%s848 + $0x264] sm:$0xf]
        %v2881 = vld [vmem:[%s848 + $0x268] sm:$0xf]
        %v2882 = vld [vmem:[%s848 + $0x26c] sm:$0xf]
        %v2883 = vld [vmem:[%s848 + $0x270] sm:$0xf]
        %v2884 = vld [vmem:[%s848 + $0x274] sm:$0xf]
        %v2885 = vld [vmem:[%s848 + $0x278] sm:$0xf]
        %v2886 = vld [vmem:[%s848 + $0x27c] sm:$0xf]
        %v2887 = vld [vmem:[%s848 + $0x280] sm:$0xf]
        %v2888 = vld [vmem:[%s848 + $0x284] sm:$0xf]
        %v2889 = vld [vmem:[%s848 + $0x288] sm:$0xf]
        %v2890 = vld [vmem:[%s848 + $0x28c] sm:$0xf]
        %v2891 = vld [vmem:[%s848 + $0x290] sm:$0xf]
        %v2892 = vld [vmem:[%s848 + $0x294] sm:$0xf]
        %v2893 = vld [vmem:[%s848 + $0x298] sm:$0xf]
        %v2894 = vld [vmem:[%s848 + $0x29c] sm:$0xf]
        %v2895 = vld [vmem:[%s848 + $0x2a0] sm:$0xf]
        %v2896 = vld [vmem:[%s848 + $0x2a4] sm:$0xf]
        %v2897 = vld [vmem:[%s848 + $0x2a8] sm:$0xf]
        %v2898 = vld [vmem:[%s848 + $0x2ac] sm:$0xf]
        %v2899 = vld [vmem:[%s848 + $0x2b0] sm:$0xf]
        %v2900 = vld [vmem:[%s848 + $0x2b4] sm:$0xf]
        %v2901 = vld [vmem:[%s848 + $0x2b8] sm:$0xf]
        %v2902 = vld [vmem:[%s848 + $0x2bc] sm:$0xf]
        %v2903 = vld [vmem:[%s848 + $0x2c0] sm:$0xf]
        %v2904 = vld [vmem:[%s848 + $0x2c4] sm:$0xf]
        %v2905 = vld [vmem:[%s848 + $0x2c8] sm:$0xf]
        %v2906 = vld [vmem:[%s848 + $0x2cc] sm:$0xf]
        %v2907 = vld [vmem:[%s848 + $0x2d0] sm:$0xf]
        %v2908 = vld [vmem:[%s848 + $0x2d4] sm:$0xf]
        %v2909 = vld [vmem:[%s848 + $0x2d8] sm:$0xf]
        %v2910 = vld [vmem:[%s848 + $0x2dc] sm:$0xf]
        %v2911 = vld [vmem:[%s848 + $0x2e0] sm:$0xf]
        %v2912 = vld [vmem:[%s848 + $0x2e4] sm:$0xf]
        %v2913 = vld [vmem:[%s848 + $0x2e8] sm:$0xf]
        %v2914 = vld [vmem:[%s848 + $0x2ec] sm:$0xf]
        %v2915 = vld [vmem:[%s848 + $0x2f0] sm:$0xf]
        %v2916 = vld [vmem:[%s848 + $0x2f4] sm:$0xf]
        %v2917 = vld [vmem:[%s848 + $0x2f8] sm:$0xf]
        %v2918 = vld [vmem:[%s848 + $0x2fc] sm:$0xf]
        %v2919 = vld [vmem:[%s848 + $0x300] sm:$0xf]
        %v2920 = vld [vmem:[%s848 + $0x304] sm:$0xf]
        %v2921 = vld [vmem:[%s848 + $0x308] sm:$0xf]
        %v2922 = vld [vmem:[%s848 + $0x30c] sm:$0xf]
        %v2923 = vld [vmem:[%s848 + $0x310] sm:$0xf]
        %v2924 = vld [vmem:[%s848 + $0x314] sm:$0xf]
        %v2925 = vld [vmem:[%s848 + $0x318] sm:$0xf]
        %v2926 = vld [vmem:[%s848 + $0x31c] sm:$0xf]
        %v2927 = vld [vmem:[%s848 + $0x320] sm:$0xf]
        %v2928 = vld [vmem:[%s848 + $0x324] sm:$0xf]
        %v2929 = vld [vmem:[%s848 + $0x328] sm:$0xf]
        %v2930 = vld [vmem:[%s848 + $0x32c] sm:$0xf]
        %v2931 = vld [vmem:[%s848 + $0x330] sm:$0xf]
        %v2932 = vld [vmem:[%s848 + $0x334] sm:$0xf]
        %v2933 = vld [vmem:[%s848 + $0x338] sm:$0xf]
        %v2934 = vld [vmem:[%s848 + $0x33c] sm:$0xf]
        %v2935 = vld [vmem:[%s848 + $0x340] sm:$0xf]
        %v2936 = vld [vmem:[%s848 + $0x344] sm:$0xf]
        %v2937 = vld [vmem:[%s848 + $0x348] sm:$0xf]
        %v2938 = vld [vmem:[%s848 + $0x34c] sm:$0xf]
        %v2939 = vld [vmem:[%s848 + $0x350] sm:$0xf]
        %v2940 = vld [vmem:[%s848 + $0x354] sm:$0xf]
        %v2941 = vld [vmem:[%s848 + $0x358] sm:$0xf]
        %v2942 = vld [vmem:[%s848 + $0x35c] sm:$0xf]
        %v2943 = vld [vmem:[%s848 + $0x360] sm:$0xf]
        %v2944 = vld [vmem:[%s848 + $0x364] sm:$0xf]
        %v2945 = vld [vmem:[%s848 + $0x368] sm:$0xf]
        %v2946 = vld [vmem:[%s848 + $0x36c] sm:$0xf]
        %v2947 = vld [vmem:[%s848 + $0x370] sm:$0xf]
        %v2948 = vld [vmem:[%s848 + $0x374] sm:$0xf]
        %v2949 = vld [vmem:[%s848 + $0x378] sm:$0xf]
        %v2950 = vld [vmem:[%s848 + $0x37c] sm:$0xf]
        %v2951 = vld [vmem:[%s848 + $0x380] sm:$0xf]
        %v2952 = vld [vmem:[%s848 + $0x384] sm:$0xf]
        %v2953 = vld [vmem:[%s848 + $0x388] sm:$0xf]
        %v2954 = vld [vmem:[%s848 + $0x38c] sm:$0xf]
        %v2955 = vld [vmem:[%s848 + $0x390] sm:$0xf]
        %v2956 = vld [vmem:[%s848 + $0x394] sm:$0xf]
        %v2957 = vld [vmem:[%s848 + $0x398] sm:$0xf]
        %v2958 = vld [vmem:[%s848 + $0x39c] sm:$0xf]
        %v2959 = vld [vmem:[%s848 + $0x3a0] sm:$0xf]
        %v2960 = vld [vmem:[%s848 + $0x3a4] sm:$0xf]
        %v2961 = vld [vmem:[%s848 + $0x3a8] sm:$0xf]
        %v2962 = vld [vmem:[%s848 + $0x3ac] sm:$0xf]
        %v2963 = vld [vmem:[%s848 + $0x3b0] sm:$0xf]
        %v2964 = vld [vmem:[%s848 + $0x3b4] sm:$0xf]
        %v2965 = vld [vmem:[%s848 + $0x3b8] sm:$0xf]
        %v2966 = vld [vmem:[%s848 + $0x3bc] sm:$0xf]
        %v2967 = vld [vmem:[%s848 + $0x3c0] sm:$0xf]
        %v2968 = vld [vmem:[%s848 + $0x3c4] sm:$0xf]
        %v2969 = vld [vmem:[%s848 + $0x3c8] sm:$0xf]
        %v2970 = vld [vmem:[%s848 + $0x3cc] sm:$0xf]
        %v2971 = vld [vmem:[%s848 + $0x3d0] sm:$0xf]
        %v2972 = vld [vmem:[%s848 + $0x3d4] sm:$0xf]
        %v2973 = vld [vmem:[%s848 + $0x3d8] sm:$0xf]
        %v2974 = vld [vmem:[%s848 + $0x3dc] sm:$0xf]
        %v2975 = vld [vmem:[%s848 + $0x3e0] sm:$0xf]
        %v2976 = vld [vmem:[%s848 + $0x3e4] sm:$0xf]
        %v2977 = vld [vmem:[%s848 + $0x3e8] sm:$0xf]
        %v2978 = vld [vmem:[%s848 + $0x3ec] sm:$0xf]
        %v2979 = vld [vmem:[%s848 + $0x3f0] sm:$0xf]
        %v2980 = vld [vmem:[%s848 + $0x3f4] sm:$0xf]
        %v2981 = vld [vmem:[%s848 + $0x3f8] sm:$0xf]
        %v2982 = vld [vmem:[%s848 + $0x3fc] sm:$0xf]
        %v2983 = vld [vmem:[%s851] sm:$0x1]
        %v2985 = vlaneseq
        %v2986 = vshrl.u32 %v2985, 7
        %v2987 = vsub.s32 0, %v2986
        %v2988 = vrot.slane %v2983, %v2987
        %v3246 = vunpack.c.l.b16 %v2727
        %v3247 = vunpack.c.l.b16 %v2728
        %v3248 = vunpack.c.l.b16 %v2729
        %v3249 = vunpack.c.l.b16 %v2730
        %v3250 = vunpack.c.l.b16 %v2731
        %v3251 = vunpack.c.l.b16 %v2732
        %v3252 = vunpack.c.l.b16 %v2733
        %v3253 = vunpack.c.l.b16 %v2734
        %v3254 = vunpack.c.l.b16 %v2735
        %v3255 = vunpack.c.l.b16 %v2736
        %v3256 = vunpack.c.l.b16 %v2737
        %v3257 = vunpack.c.l.b16 %v2738
        %v3258 = vunpack.c.l.b16 %v2739
        %v3259 = vunpack.c.l.b16 %v2740
        %v3260 = vunpack.c.l.b16 %v2741
        %v3261 = vunpack.c.l.b16 %v2742
        %v3262 = vunpack.c.l.b16 %v2743
        %v3263 = vunpack.c.l.b16 %v2744
        %v3264 = vunpack.c.l.b16 %v2745
        %v3265 = vunpack.c.l.b16 %v2746
        %v3266 = vunpack.c.l.b16 %v2747
        %v3267 = vunpack.c.l.b16 %v2748
        %v3268 = vunpack.c.l.b16 %v2749
        %v3269 = vunpack.c.l.b16 %v2750
        %v3270 = vunpack.c.l.b16 %v2751
        %v3271 = vunpack.c.l.b16 %v2752
        %v3272 = vunpack.c.l.b16 %v2753
        %v3273 = vunpack.c.l.b16 %v2754
        %v3274 = vunpack.c.l.b16 %v2755
        %v3275 = vunpack.c.l.b16 %v2756
        %v3276 = vunpack.c.l.b16 %v2757
        %v3277 = vunpack.c.l.b16 %v2758
        %v3278 = vunpack.c.l.b16 %v2759
        %v3279 = vunpack.c.l.b16 %v2760
        %v3280 = vunpack.c.l.b16 %v2761
        %v3281 = vunpack.c.l.b16 %v2762
        %v3282 = vunpack.c.l.b16 %v2763
        %v3283 = vunpack.c.l.b16 %v2764
        %v3284 = vunpack.c.l.b16 %v2765
        %v3285 = vunpack.c.l.b16 %v2766
        %v3286 = vunpack.c.l.b16 %v2767
        %v3287 = vunpack.c.l.b16 %v2768
        %v3288 = vunpack.c.l.b16 %v2769
        %v3289 = vunpack.c.l.b16 %v2770
        %v3290 = vunpack.c.l.b16 %v2771
        %v3291 = vunpack.c.l.b16 %v2772
        %v3292 = vunpack.c.l.b16 %v2773
        %v3293 = vunpack.c.l.b16 %v2774
        %v3294 = vunpack.c.l.b16 %v2775
        %v3295 = vunpack.c.l.b16 %v2776
        %v3296 = vunpack.c.l.b16 %v2777
        %v3297 = vunpack.c.l.b16 %v2778
        %v3298 = vunpack.c.l.b16 %v2779
        %v3299 = vunpack.c.l.b16 %v2780
        %v3300 = vunpack.c.l.b16 %v2781
        %v3301 = vunpack.c.l.b16 %v2782
        %v3302 = vunpack.c.l.b16 %v2783
        %v3303 = vunpack.c.l.b16 %v2784
        %v3304 = vunpack.c.l.b16 %v2785
        %v3305 = vunpack.c.l.b16 %v2786
        %v3306 = vunpack.c.l.b16 %v2787
        %v3307 = vunpack.c.l.b16 %v2788
        %v3308 = vunpack.c.l.b16 %v2789
        %v3309 = vunpack.c.l.b16 %v2790
        %v3310 = vunpack.c.l.b16 %v2791
        %v3311 = vunpack.c.l.b16 %v2792
        %v3312 = vunpack.c.l.b16 %v2793
        %v3313 = vunpack.c.l.b16 %v2794
        %v3314 = vunpack.c.l.b16 %v2795
        %v3315 = vunpack.c.l.b16 %v2796
        %v3316 = vunpack.c.l.b16 %v2797
        %v3317 = vunpack.c.l.b16 %v2798
        %v3318 = vunpack.c.l.b16 %v2799
        %v3319 = vunpack.c.l.b16 %v2800
        %v3320 = vunpack.c.l.b16 %v2801
        %v3321 = vunpack.c.l.b16 %v2802
        %v3322 = vunpack.c.l.b16 %v2803
        %v3323 = vunpack.c.l.b16 %v2804
        %v3324 = vunpack.c.l.b16 %v2805
        %v3325 = vunpack.c.l.b16 %v2806
        %v3326 = vunpack.c.l.b16 %v2807
        %v3327 = vunpack.c.l.b16 %v2808
        %v3328 = vunpack.c.l.b16 %v2809
        %v3329 = vunpack.c.l.b16 %v2810
        %v3330 = vunpack.c.l.b16 %v2811
        %v3331 = vunpack.c.l.b16 %v2812
        %v3332 = vunpack.c.l.b16 %v2813
        %v3333 = vunpack.c.l.b16 %v2814
        %v3334 = vunpack.c.l.b16 %v2815
        %v3335 = vunpack.c.l.b16 %v2816
        %v3336 = vunpack.c.l.b16 %v2817
        %v3337 = vunpack.c.l.b16 %v2818
        %v3338 = vunpack.c.l.b16 %v2819
        %v3339 = vunpack.c.l.b16 %v2820
        %v3340 = vunpack.c.l.b16 %v2821
        %v3341 = vunpack.c.l.b16 %v2822
        %v3342 = vunpack.c.l.b16 %v2823
        %v3343 = vunpack.c.l.b16 %v2824
        %v3344 = vunpack.c.l.b16 %v2825
        %v3345 = vunpack.c.l.b16 %v2826
        %v3346 = vunpack.c.l.b16 %v2827
        %v3347 = vunpack.c.l.b16 %v2828
        %v3348 = vunpack.c.l.b16 %v2829
        %v3349 = vunpack.c.l.b16 %v2830
        %v3350 = vunpack.c.l.b16 %v2831
        %v3351 = vunpack.c.l.b16 %v2832
        %v3352 = vunpack.c.l.b16 %v2833
        %v3353 = vunpack.c.l.b16 %v2834
        %v3354 = vunpack.c.l.b16 %v2835
        %v3355 = vunpack.c.l.b16 %v2836
        %v3356 = vunpack.c.l.b16 %v2837
        %v3357 = vunpack.c.l.b16 %v2838
        %v3358 = vunpack.c.l.b16 %v2839
        %v3359 = vunpack.c.l.b16 %v2840
        %v3360 = vunpack.c.l.b16 %v2841
        %v3361 = vunpack.c.l.b16 %v2842
        %v3362 = vunpack.c.l.b16 %v2843
        %v3363 = vunpack.c.l.b16 %v2844
        %v3364 = vunpack.c.l.b16 %v2845
        %v3365 = vunpack.c.l.b16 %v2846
        %v3366 = vunpack.c.l.b16 %v2847
        %v3367 = vunpack.c.l.b16 %v2848
        %v3368 = vunpack.c.l.b16 %v2849
        %v3369 = vunpack.c.l.b16 %v2850
        %v3370 = vunpack.c.l.b16 %v2851
        %v3371 = vunpack.c.l.b16 %v2852
        %v3372 = vunpack.c.l.b16 %v2853
        %v3373 = vunpack.c.l.b16 %v2854
        %v3374 = vunpack.c.l.b16 %v2855
        %v3375 = vunpack.c.l.b16 %v2856
        %v3376 = vunpack.c.l.b16 %v2857
        %v3377 = vunpack.c.l.b16 %v2858
        %v3378 = vunpack.c.l.b16 %v2859
        %v3379 = vunpack.c.l.b16 %v2860
        %v3380 = vunpack.c.l.b16 %v2861
        %v3381 = vunpack.c.l.b16 %v2862
        %v3382 = vunpack.c.l.b16 %v2863
        %v3383 = vunpack.c.l.b16 %v2864
        %v3384 = vunpack.c.l.b16 %v2865
        %v3385 = vunpack.c.l.b16 %v2866
        %v3386 = vunpack.c.l.b16 %v2867
        %v3387 = vunpack.c.l.b16 %v2868
        %v3388 = vunpack.c.l.b16 %v2869
        %v3389 = vunpack.c.l.b16 %v2870
        %v3390 = vunpack.c.l.b16 %v2871
        %v3391 = vunpack.c.l.b16 %v2872
        %v3392 = vunpack.c.l.b16 %v2873
        %v3393 = vunpack.c.l.b16 %v2874
        %v3394 = vunpack.c.l.b16 %v2875
        %v3395 = vunpack.c.l.b16 %v2876
        %v3396 = vunpack.c.l.b16 %v2877
        %v3397 = vunpack.c.l.b16 %v2878
        %v3398 = vunpack.c.l.b16 %v2879
        %v3399 = vunpack.c.l.b16 %v2880
        %v3400 = vunpack.c.l.b16 %v2881
        %v3401 = vunpack.c.l.b16 %v2882
        %v3402 = vunpack.c.l.b16 %v2883
        %v3403 = vunpack.c.l.b16 %v2884
        %v3404 = vunpack.c.l.b16 %v2885
        %v3405 = vunpack.c.l.b16 %v2886
        %v3406 = vunpack.c.l.b16 %v2887
        %v3407 = vunpack.c.l.b16 %v2888
        %v3408 = vunpack.c.l.b16 %v2889
        %v3409 = vunpack.c.l.b16 %v2890
        %v3410 = vunpack.c.l.b16 %v2891
        %v3411 = vunpack.c.l.b16 %v2892
        %v3412 = vunpack.c.l.b16 %v2893
        %v3413 = vunpack.c.l.b16 %v2894
        %v3414 = vunpack.c.l.b16 %v2895
        %v3415 = vunpack.c.l.b16 %v2896
        %v3416 = vunpack.c.l.b16 %v2897
        %v3417 = vunpack.c.l.b16 %v2898
        %v3418 = vunpack.c.l.b16 %v2899
        %v3419 = vunpack.c.l.b16 %v2900
        %v3420 = vunpack.c.l.b16 %v2901
        %v3421 = vunpack.c.l.b16 %v2902
        %v3422 = vunpack.c.l.b16 %v2903
        %v3423 = vunpack.c.l.b16 %v2904
        %v3424 = vunpack.c.l.b16 %v2905
        %v3425 = vunpack.c.l.b16 %v2906
        %v3426 = vunpack.c.l.b16 %v2907
        %v3427 = vunpack.c.l.b16 %v2908
        %v3428 = vunpack.c.l.b16 %v2909
        %v3429 = vunpack.c.l.b16 %v2910
        %v3430 = vunpack.c.l.b16 %v2911
        %v3431 = vunpack.c.l.b16 %v2912
        %v3432 = vunpack.c.l.b16 %v2913
        %v3433 = vunpack.c.l.b16 %v2914
        %v3434 = vunpack.c.l.b16 %v2915
        %v3435 = vunpack.c.l.b16 %v2916
        %v3436 = vunpack.c.l.b16 %v2917
        %v3437 = vunpack.c.l.b16 %v2918
        %v3438 = vunpack.c.l.b16 %v2919
        %v3439 = vunpack.c.l.b16 %v2920
        %v3440 = vunpack.c.l.b16 %v2921
        %v3441 = vunpack.c.l.b16 %v2922
        %v3442 = vunpack.c.l.b16 %v2923
        %v3443 = vunpack.c.l.b16 %v2924
        %v3444 = vunpack.c.l.b16 %v2925
        %v3445 = vunpack.c.l.b16 %v2926
        %v3446 = vunpack.c.l.b16 %v2927
        %v3447 = vunpack.c.l.b16 %v2928
        %v3448 = vunpack.c.l.b16 %v2929
        %v3449 = vunpack.c.l.b16 %v2930
        %v3450 = vunpack.c.l.b16 %v2931
        %v3451 = vunpack.c.l.b16 %v2932
        %v3452 = vunpack.c.l.b16 %v2933
        %v3453 = vunpack.c.l.b16 %v2934
        %v3454 = vunpack.c.l.b16 %v2935
        %v3455 = vunpack.c.l.b16 %v2936
        %v3456 = vunpack.c.l.b16 %v2937
        %v3457 = vunpack.c.l.b16 %v2938
        %v3458 = vunpack.c.l.b16 %v2939
        %v3459 = vunpack.c.l.b16 %v2940
        %v3460 = vunpack.c.l.b16 %v2941
        %v3461 = vunpack.c.l.b16 %v2942
        %v3462 = vunpack.c.l.b16 %v2943
        %v3463 = vunpack.c.l.b16 %v2944
        %v3464 = vunpack.c.l.b16 %v2945
        %v3465 = vunpack.c.l.b16 %v2946
        %v3466 = vunpack.c.l.b16 %v2947
        %v3467 = vunpack.c.l.b16 %v2948
        %v3468 = vunpack.c.l.b16 %v2949
        %v3469 = vunpack.c.l.b16 %v2950
        %v3470 = vunpack.c.l.b16 %v2951
        %v3471 = vunpack.c.l.b16 %v2952
        %v3472 = vunpack.c.l.b16 %v2953
        %v3473 = vunpack.c.l.b16 %v2954
        %v3474 = vunpack.c.l.b16 %v2955
        %v3475 = vunpack.c.l.b16 %v2956
        %v3476 = vunpack.c.l.b16 %v2957
        %v3477 = vunpack.c.l.b16 %v2958
        %v3478 = vunpack.c.l.b16 %v2959
        %v3479 = vunpack.c.l.b16 %v2960
        %v3480 = vunpack.c.l.b16 %v2961
        %v3481 = vunpack.c.l.b16 %v2962
        %v3482 = vunpack.c.l.b16 %v2963
        %v3483 = vunpack.c.l.b16 %v2964
        %v3484 = vunpack.c.l.b16 %v2965
        %v3485 = vunpack.c.l.b16 %v2966
        %v3486 = vunpack.c.l.b16 %v2967
        %v3487 = vunpack.c.l.b16 %v2968
        %v3488 = vunpack.c.l.b16 %v2969
        %v3489 = vunpack.c.l.b16 %v2970
        %v3490 = vunpack.c.l.b16 %v2971
        %v3491 = vunpack.c.l.b16 %v2972
        %v3492 = vunpack.c.l.b16 %v2973
        %v3493 = vunpack.c.l.b16 %v2974
        %v3494 = vunpack.c.l.b16 %v2975
        %v3495 = vunpack.c.l.b16 %v2976
        %v3496 = vunpack.c.l.b16 %v2977
        %v3497 = vunpack.c.l.b16 %v2978
        %v3498 = vunpack.c.l.b16 %v2979
        %v3499 = vunpack.c.l.b16 %v2980
        %v3500 = vunpack.c.l.b16 %v2981
        %v3501 = vunpack.c.l.b16 %v2982
        %v3502 = vpack.c.b16 %v3247, %v3246
        %v3503 = vpack.c.b16 %v3249, %v3248
        %v3504 = vpack.c.b16 %v3251, %v3250
        %v3505 = vpack.c.b16 %v3253, %v3252
        %v3506 = vpack.c.b16 %v3255, %v3254
        %v3507 = vpack.c.b16 %v3257, %v3256
        %v3508 = vpack.c.b16 %v3259, %v3258
        %v3509 = vpack.c.b16 %v3261, %v3260
        %v3510 = vpack.c.b16 %v3263, %v3262
        %v3511 = vpack.c.b16 %v3265, %v3264
        %v3512 = vpack.c.b16 %v3267, %v3266
        %v3513 = vpack.c.b16 %v3269, %v3268
        %v3514 = vpack.c.b16 %v3271, %v3270
        %v3515 = vpack.c.b16 %v3273, %v3272
        %v3516 = vpack.c.b16 %v3275, %v3274
        %v3517 = vpack.c.b16 %v3277, %v3276
        %v3518 = vpack.c.b16 %v3279, %v3278
        %v3519 = vpack.c.b16 %v3281, %v3280
        %v3520 = vpack.c.b16 %v3283, %v3282
        %v3521 = vpack.c.b16 %v3285, %v3284
        %v3522 = vpack.c.b16 %v3287, %v3286
        %v3523 = vpack.c.b16 %v3289, %v3288
        %v3524 = vpack.c.b16 %v3291, %v3290
        %v3525 = vpack.c.b16 %v3293, %v3292
        %v3526 = vpack.c.b16 %v3295, %v3294
        %v3527 = vpack.c.b16 %v3297, %v3296
        %v3528 = vpack.c.b16 %v3299, %v3298
        %v3529 = vpack.c.b16 %v3301, %v3300
        %v3530 = vpack.c.b16 %v3303, %v3302
        %v3531 = vpack.c.b16 %v3305, %v3304
        %v3532 = vpack.c.b16 %v3307, %v3306
        %v3533 = vpack.c.b16 %v3309, %v3308
        %v3534 = vpack.c.b16 %v3311, %v3310
        %v3535 = vpack.c.b16 %v3313, %v3312
        %v3536 = vpack.c.b16 %v3315, %v3314
        %v3537 = vpack.c.b16 %v3317, %v3316
        %v3538 = vpack.c.b16 %v3319, %v3318
        %v3539 = vpack.c.b16 %v3321, %v3320
        %v3540 = vpack.c.b16 %v3323, %v3322
        %v3541 = vpack.c.b16 %v3325, %v3324
        %v3542 = vpack.c.b16 %v3327, %v3326
        %v3543 = vpack.c.b16 %v3329, %v3328
        %v3544 = vpack.c.b16 %v3331, %v3330
        %v3545 = vpack.c.b16 %v3333, %v3332
        %v3546 = vpack.c.b16 %v3335, %v3334
        %v3547 = vpack.c.b16 %v3337, %v3336
        %v3548 = vpack.c.b16 %v3339, %v3338
        %v3549 = vpack.c.b16 %v3341, %v3340
        %v3550 = vpack.c.b16 %v3343, %v3342
        %v3551 = vpack.c.b16 %v3345, %v3344
        %v3552 = vpack.c.b16 %v3347, %v3346
        %v3553 = vpack.c.b16 %v3349, %v3348
        %v3554 = vpack.c.b16 %v3351, %v3350
        %v3555 = vpack.c.b16 %v3353, %v3352
        %v3556 = vpack.c.b16 %v3355, %v3354
        %v3557 = vpack.c.b16 %v3357, %v3356
        %v3558 = vpack.c.b16 %v3359, %v3358
        %v3559 = vpack.c.b16 %v3361, %v3360
        %v3560 = vpack.c.b16 %v3363, %v3362
        %v3561 = vpack.c.b16 %v3365, %v3364
        %v3562 = vpack.c.b16 %v3367, %v3366
        %v3563 = vpack.c.b16 %v3369, %v3368
        %v3564 = vpack.c.b16 %v3371, %v3370
        %v3565 = vpack.c.b16 %v3373, %v3372
        %v3566 = vpack.c.b16 %v3375, %v3374
        %v3567 = vpack.c.b16 %v3377, %v3376
        %v3568 = vpack.c.b16 %v3379, %v3378
        %v3569 = vpack.c.b16 %v3381, %v3380
        %v3570 = vpack.c.b16 %v3383, %v3382
        %v3571 = vpack.c.b16 %v3385, %v3384
        %v3572 = vpack.c.b16 %v3387, %v3386
        %v3573 = vpack.c.b16 %v3389, %v3388
        %v3574 = vpack.c.b16 %v3391, %v3390
        %v3575 = vpack.c.b16 %v3393, %v3392
        %v3576 = vpack.c.b16 %v3395, %v3394
        %v3577 = vpack.c.b16 %v3397, %v3396
        %v3578 = vpack.c.b16 %v3399, %v3398
        %v3579 = vpack.c.b16 %v3401, %v3400
        %v3580 = vpack.c.b16 %v3403, %v3402
        %v3581 = vpack.c.b16 %v3405, %v3404
        %v3582 = vpack.c.b16 %v3407, %v3406
        %v3583 = vpack.c.b16 %v3409, %v3408
        %v3584 = vpack.c.b16 %v3411, %v3410
        %v3585 = vpack.c.b16 %v3413, %v3412
        %v3586 = vpack.c.b16 %v3415, %v3414
        %v3587 = vpack.c.b16 %v3417, %v3416
        %v3588 = vpack.c.b16 %v3419, %v3418
        %v3589 = vpack.c.b16 %v3421, %v3420
        %v3590 = vpack.c.b16 %v3423, %v3422
        %v3591 = vpack.c.b16 %v3425, %v3424
        %v3592 = vpack.c.b16 %v3427, %v3426
        %v3593 = vpack.c.b16 %v3429, %v3428
        %v3594 = vpack.c.b16 %v3431, %v3430
        %v3595 = vpack.c.b16 %v3433, %v3432
        %v3596 = vpack.c.b16 %v3435, %v3434
        %v3597 = vpack.c.b16 %v3437, %v3436
        %v3598 = vpack.c.b16 %v3439, %v3438
        %v3599 = vpack.c.b16 %v3441, %v3440
        %v3600 = vpack.c.b16 %v3443, %v3442
        %v3601 = vpack.c.b16 %v3445, %v3444
        %v3602 = vpack.c.b16 %v3447, %v3446
        %v3603 = vpack.c.b16 %v3449, %v3448
        %v3604 = vpack.c.b16 %v3451, %v3450
        %v3605 = vpack.c.b16 %v3453, %v3452
        %v3606 = vpack.c.b16 %v3455, %v3454
        %v3607 = vpack.c.b16 %v3457, %v3456
        %v3608 = vpack.c.b16 %v3459, %v3458
        %v3609 = vpack.c.b16 %v3461, %v3460
        %v3610 = vpack.c.b16 %v3463, %v3462
        %v3611 = vpack.c.b16 %v3465, %v3464
        %v3612 = vpack.c.b16 %v3467, %v3466
        %v3613 = vpack.c.b16 %v3469, %v3468
        %v3614 = vpack.c.b16 %v3471, %v3470
        %v3615 = vpack.c.b16 %v3473, %v3472
        %v3616 = vpack.c.b16 %v3475, %v3474
        %v3617 = vpack.c.b16 %v3477, %v3476
        %v3618 = vpack.c.b16 %v3479, %v3478
        %v3619 = vpack.c.b16 %v3481, %v3480
        %v3620 = vpack.c.b16 %v3483, %v3482
        %v3621 = vpack.c.b16 %v3485, %v3484
        %v3622 = vpack.c.b16 %v3487, %v3486
        %v3623 = vpack.c.b16 %v3489, %v3488
        %v3624 = vpack.c.b16 %v3491, %v3490
        %v3625 = vpack.c.b16 %v3493, %v3492
        %v3626 = vpack.c.b16 %v3495, %v3494
        %v3627 = vpack.c.b16 %v3497, %v3496
        %v3628 = vpack.c.b16 %v3499, %v3498
        %v3629 = vpack.c.b16 %v3501, %v3500
        %3758 = vmatprep.subr.bf16.mxu0 0
        %3759 = vmatpush1.bf16.msra.mxu0 %v3502
        %3760 = vmatprep.subr.bf16.mxu0 0
        %3761 = vmatpush1.bf16.msra.mxu0 %v3503
        %3762 = vmatprep.subr.bf16.mxu0 0
        %3763 = vmatpush1.bf16.msra.mxu0 %v3504
        %3764 = vmatprep.subr.bf16.mxu0 0
        %3765 = vmatpush1.bf16.msra.mxu0 %v3505
        %3766 = vmatprep.subr.bf16.mxu0 0
        %3767 = vmatpush1.bf16.msra.mxu0 %v3506
        %3768 = vmatprep.subr.bf16.mxu0 0
        %3769 = vmatpush1.bf16.msra.mxu0 %v3507
        %3770 = vmatprep.subr.bf16.mxu0 0
        %3771 = vmatpush1.bf16.msra.mxu0 %v3508
        %3772 = vmatprep.subr.bf16.mxu0 0
        %3773 = vmatpush1.bf16.msra.mxu0 %v3509
        %3774 = vmatprep.subr.bf16.mxu0 0
        %3775 = vmatpush1.bf16.msra.mxu0 %v3510
        %3776 = vmatprep.subr.bf16.mxu0 0
        %3777 = vmatpush1.bf16.msra.mxu0 %v3511
        %3778 = vmatprep.subr.bf16.mxu0 0
        %3779 = vmatpush1.bf16.msra.mxu0 %v3512
        %3780 = vmatprep.subr.bf16.mxu0 0
        %3781 = vmatpush1.bf16.msra.mxu0 %v3513
        %3782 = vmatprep.subr.bf16.mxu0 0
        %3783 = vmatpush1.bf16.msra.mxu0 %v3514
        %3784 = vmatprep.subr.bf16.mxu0 0
        %3785 = vmatpush1.bf16.msra.mxu0 %v3515
        %3786 = vmatprep.subr.bf16.mxu0 0
        %3787 = vmatpush1.bf16.msra.mxu0 %v3516
        %3788 = vmatprep.subr.bf16.mxu0 0
        %3789 = vmatpush1.bf16.msra.mxu0 %v3517
        %3790 = vmatprep.mubr.bf16.mxu0 %v2712
        %3791 = vmatmul.mubr.bf16.gmra.mrb[0].mxu0 %v2711
        %v3792 = vpop.f32.mrb[0].mxu0
        %v3793 = vadd.f32 %v2988, %v3792
        %v3794 = vpop.f32.mrb[0].mxu0
        %v3795 = vpop.f32.mrb[0].mxu0
        %v3796 = vadd.f32 %v2988, %v3795
        %v3797 = vpop.f32.mrb[0].mxu0
        %3798 = vdwg.mxu0
        %3799 = vmatprep.subr.bf16.mxu0 0
        %3800 = vmatpush1.bf16.msra.mxu0 %v3518
        %3801 = vmatprep.subr.bf16.mxu0 0
        %3802 = vmatpush1.bf16.msra.mxu0 %v3519
        %3803 = vmatprep.subr.bf16.mxu0 0
        %3804 = vmatpush1.bf16.msra.mxu0 %v3520
        %3805 = vmatprep.subr.bf16.mxu0 0
        %3806 = vmatpush1.bf16.msra.mxu0 %v3521
        %3807 = vmatprep.subr.bf16.mxu0 0
        %3808 = vmatpush1.bf16.msra.mxu0 %v3522
        %3809 = vmatprep.subr.bf16.mxu0 0
        %3810 = vmatpush1.bf16.msra.mxu0 %v3523
        %3811 = vmatprep.subr.bf16.mxu0 0
        %3812 = vmatpush1.bf16.msra.mxu0 %v3524
        %3813 = vmatprep.subr.bf16.mxu0 0
        %3814 = vmatpush1.bf16.msra.mxu0 %v3525
        %3815 = vmatprep.subr.bf16.mxu0 0
        %3816 = vmatpush1.bf16.msra.mxu0 %v3526
        %3817 = vmatprep.subr.bf16.mxu0 0
        %3818 = vmatpush1.bf16.msra.mxu0 %v3527
        %3819 = vmatprep.subr.bf16.mxu0 0
        %3820 = vmatpush1.bf16.msra.mxu0 %v3528
        %3821 = vmatprep.subr.bf16.mxu0 0
        %3822 = vmatpush1.bf16.msra.mxu0 %v3529
        %3823 = vmatprep.subr.bf16.mxu0 0
        %3824 = vmatpush1.bf16.msra.mxu0 %v3530
        %3825 = vmatprep.subr.bf16.mxu0 0
        %3826 = vmatpush1.bf16.msra.mxu0 %v3531
        %3827 = vmatprep.subr.bf16.mxu0 0
        %3828 = vmatpush1.bf16.msra.mxu0 %v3532
        %3829 = vmatprep.subr.bf16.mxu0 0
        %3830 = vmatpush1.bf16.msra.mxu0 %v3533
        %3831 = vmatprep.mubr.bf16.mxu0 %v2714
        %3832 = vmatmul.mubr.bf16.gmra.mrb[0].mxu0 %v2713
        %v3833 = vpop.f32.mrb[0].mxu0
        %v3834 = vadd.f32 %v3793, %v3833
        %v3835 = vpop.f32.mrb[0].mxu0
        %v3836 = vpop.f32.mrb[0].mxu0
        %v3837 = vadd.f32 %v3796, %v3836
        %v3838 = vpop.f32.mrb[0].mxu0
        %3839 = vdwg.mxu0
        %3840 = vmatprep.subr.bf16.mxu0 0
        %3841 = vmatpush1.bf16.msra.mxu0 %v3534
        %3842 = vmatprep.subr.bf16.mxu0 0
        %3843 = vmatpush1.bf16.msra.mxu0 %v3535
        %3844 = vmatprep.subr.bf16.mxu0 0
        %3845 = vmatpush1.bf16.msra.mxu0 %v3536
        %3846 = vmatprep.subr.bf16.mxu0 0
        %3847 = vmatpush1.bf16.msra.mxu0 %v3537
        %3848 = vmatprep.subr.bf16.mxu0 0
        %3849 = vmatpush1.bf16.msra.mxu0 %v3538
        %3850 = vmatprep.subr.bf16.mxu0 0
        %3851 = vmatpush1.bf16.msra.mxu0 %v3539
        %3852 = vmatprep.subr.bf16.mxu0 0
        %3853 = vmatpush1.bf16.msra.mxu0 %v3540
        %3854 = vmatprep.subr.bf16.mxu0 0
        %3855 = vmatpush1.bf16.msra.mxu0 %v3541
        %3856 = vmatprep.subr.bf16.mxu0 0
        %3857 = vmatpush1.bf16.msra.mxu0 %v3542
        %3858 = vmatprep.subr.bf16.mxu0 0
        %3859 = vmatpush1.bf16.msra.mxu0 %v3543
        %3860 = vmatprep.subr.bf16.mxu0 0
        %3861 = vmatpush1.bf16.msra.mxu0 %v3544
        %3862 = vmatprep.subr.bf16.mxu0 0
        %3863 = vmatpush1.bf16.msra.mxu0 %v3545
        %3864 = vmatprep.subr.bf16.mxu0 0
        %3865 = vmatpush1.bf16.msra.mxu0 %v3546
        %3866 = vmatprep.subr.bf16.mxu0 0
        %3867 = vmatpush1.bf16.msra.mxu0 %v3547
        %3868 = vmatprep.subr.bf16.mxu0 0
        %3869 = vmatpush1.bf16.msra.mxu0 %v3548
        %3870 = vmatprep.subr.bf16.mxu0 0
        %3871 = vmatpush1.bf16.msra.mxu0 %v3549
        %3872 = vmatprep.mubr.bf16.mxu0 %v2716
        %3873 = vmatmul.mubr.bf16.gmra.mrb[0].mxu0 %v2715
        %v3874 = vpop.f32.mrb[0].mxu0
        %v3875 = vadd.f32 %v3834, %v3874
        %v3876 = vpop.f32.mrb[0].mxu0
        %v3877 = vpop.f32.mrb[0].mxu0
        %v3878 = vadd.f32 %v3837, %v3877
        %v3879 = vpop.f32.mrb[0].mxu0
        %3880 = vdwg.mxu0
        %3881 = vmatprep.subr.bf16.mxu0 0
        %3882 = vmatpush1.bf16.msra.mxu0 %v3550
        %3883 = vmatprep.subr.bf16.mxu0 0
        %3884 = vmatpush1.bf16.msra.mxu0 %v3551
        %3885 = vmatprep.subr.bf16.mxu0 0
        %3886 = vmatpush1.bf16.msra.mxu0 %v3552
        %3887 = vmatprep.subr.bf16.mxu0 0
        %3888 = vmatpush1.bf16.msra.mxu0 %v3553
        %3889 = vmatprep.subr.bf16.mxu0 0
        %3890 = vmatpush1.bf16.msra.mxu0 %v3554
        %3891 = vmatprep.subr.bf16.mxu0 0
        %3892 = vmatpush1.bf16.msra.mxu0 %v3555
        %3893 = vmatprep.subr.bf16.mxu0 0
        %3894 = vmatpush1.bf16.msra.mxu0 %v3556
        %3895 = vmatprep.subr.bf16.mxu0 0
        %3896 = vmatpush1.bf16.msra.mxu0 %v3557
        %3897 = vmatprep.subr.bf16.mxu0 0
        %3898 = vmatpush1.bf16.msra.mxu0 %v3558
        %3899 = vmatprep.subr.bf16.mxu0 0
        %3900 = vmatpush1.bf16.msra.mxu0 %v3559
        %3901 = vmatprep.subr.bf16.mxu0 0
        %3902 = vmatpush1.bf16.msra.mxu0 %v3560
        %3903 = vmatprep.subr.bf16.mxu0 0
        %3904 = vmatpush1.bf16.msra.mxu0 %v3561
        %3905 = vmatprep.subr.bf16.mxu0 0
        %3906 = vmatpush1.bf16.msra.mxu0 %v3562
        %3907 = vmatprep.subr.bf16.mxu0 0
        %3908 = vmatpush1.bf16.msra.mxu0 %v3563
        %3909 = vmatprep.subr.bf16.mxu0 0
        %3910 = vmatpush1.bf16.msra.mxu0 %v3564
        %3911 = vmatprep.subr.bf16.mxu0 0
        %3912 = vmatpush1.bf16.msra.mxu0 %v3565
        %3913 = vmatprep.mubr.bf16.mxu0 %v2718
        %3914 = vmatmul.mubr.bf16.gmra.mrb[0].mxu0 %v2717
        %v3915 = vpop.f32.mrb[0].mxu0
        %v3916 = vadd.f32 %v3875, %v3915
        %v3917 = vpop.f32.mrb[0].mxu0
        %v3918 = vpop.f32.mrb[0].mxu0
        %v3919 = vadd.f32 %v3878, %v3918
        %v3920 = vpop.f32.mrb[0].mxu0
        %3921 = vdwg.mxu0
        %3922 = vmatprep.subr.bf16.mxu0 0
        %3923 = vmatpush1.bf16.msra.mxu0 %v3566
        %3924 = vmatprep.subr.bf16.mxu0 0
        %3925 = vmatpush1.bf16.msra.mxu0 %v3567
        %3926 = vmatprep.subr.bf16.mxu0 0
        %3927 = vmatpush1.bf16.msra.mxu0 %v3568
        %3928 = vmatprep.subr.bf16.mxu0 0
        %3929 = vmatpush1.bf16.msra.mxu0 %v3569
        %3930 = vmatprep.subr.bf16.mxu0 0
        %3931 = vmatpush1.bf16.msra.mxu0 %v3570
        %3932 = vmatprep.subr.bf16.mxu0 0
        %3933 = vmatpush1.bf16.msra.mxu0 %v3571
        %3934 = vmatprep.subr.bf16.mxu0 0
        %3935 = vmatpush1.bf16.msra.mxu0 %v3572
        %3936 = vmatprep.subr.bf16.mxu0 0
        %3937 = vmatpush1.bf16.msra.mxu0 %v3573
        %3938 = vmatprep.subr.bf16.mxu0 0
        %3939 = vmatpush1.bf16.msra.mxu0 %v3574
        %3940 = vmatprep.subr.bf16.mxu0 0
        %3941 = vmatpush1.bf16.msra.mxu0 %v3575
        %3942 = vmatprep.subr.bf16.mxu0 0
        %3943 = vmatpush1.bf16.msra.mxu0 %v3576
        %3944 = vmatprep.subr.bf16.mxu0 0
        %3945 = vmatpush1.bf16.msra.mxu0 %v3577
        %3946 = vmatprep.subr.bf16.mxu0 0
        %3947 = vmatpush1.bf16.msra.mxu0 %v3578
        %3948 = vmatprep.subr.bf16.mxu0 0
        %3949 = vmatpush1.bf16.msra.mxu0 %v3579
        %3950 = vmatprep.subr.bf16.mxu0 0
        %3951 = vmatpush1.bf16.msra.mxu0 %v3580
        %3952 = vmatprep.subr.bf16.mxu0 0
        %3953 = vmatpush1.bf16.msra.mxu0 %v3581
        %3954 = vmatprep.mubr.bf16.mxu0 %v2720
        %3955 = vmatmul.mubr.bf16.gmra.mrb[0].mxu0 %v2719
        %v3956 = vpop.f32.mrb[0].mxu0
        %v3957 = vadd.f32 %v3916, %v3956
        %v3958 = vpop.f32.mrb[0].mxu0
        %v3959 = vpop.f32.mrb[0].mxu0
        %v3960 = vadd.f32 %v3919, %v3959
        %v3961 = vpop.f32.mrb[0].mxu0
        %3962 = vdwg.mxu0
        %3963 = vmatprep.subr.bf16.mxu0 0
        %3964 = vmatpush1.bf16.msra.mxu0 %v3582
        %3965 = vmatprep.subr.bf16.mxu0 0
        %3966 = vmatpush1.bf16.msra.mxu0 %v3583
        %3967 = vmatprep.subr.bf16.mxu0 0
        %3968 = vmatpush1.bf16.msra.mxu0 %v3584
        %3969 = vmatprep.subr.bf16.mxu0 0
        %3970 = vmatpush1.bf16.msra.mxu0 %v3585
        %3971 = vmatprep.subr.bf16.mxu0 0
        %3972 = vmatpush1.bf16.msra.mxu0 %v3586
        %3973 = vmatprep.subr.bf16.mxu0 0
        %3974 = vmatpush1.bf16.msra.mxu0 %v3587
        %3975 = vmatprep.subr.bf16.mxu0 0
        %3976 = vmatpush1.bf16.msra.mxu0 %v3588
        %3977 = vmatprep.subr.bf16.mxu0 0
        %3978 = vmatpush1.bf16.msra.mxu0 %v3589
        %3979 = vmatprep.subr.bf16.mxu0 0
        %3980 = vmatpush1.bf16.msra.mxu0 %v3590
        %3981 = vmatprep.subr.bf16.mxu0 0
        %3982 = vmatpush1.bf16.msra.mxu0 %v3591
        %3983 = vmatprep.subr.bf16.mxu0 0
        %3984 = vmatpush1.bf16.msra.mxu0 %v3592
        %3985 = vmatprep.subr.bf16.mxu0 0
        %3986 = vmatpush1.bf16.msra.mxu0 %v3593
        %3987 = vmatprep.subr.bf16.mxu0 0
        %3988 = vmatpush1.bf16.msra.mxu0 %v3594
        %3989 = vmatprep.subr.bf16.mxu0 0
        %3990 = vmatpush1.bf16.msra.mxu0 %v3595
        %3991 = vmatprep.subr.bf16.mxu0 0
        %3992 = vmatpush1.bf16.msra.mxu0 %v3596
        %3993 = vmatprep.subr.bf16.mxu0 0
        %3994 = vmatpush1.bf16.msra.mxu0 %v3597
        %3995 = vmatprep.mubr.bf16.mxu0 %v2722
        %3996 = vmatmul.mubr.bf16.gmra.mrb[0].mxu0 %v2721
        %v3997 = vpop.f32.mrb[0].mxu0
        %v3998 = vadd.f32 %v3957, %v3997
        %v3999 = vpop.f32.mrb[0].mxu0
        %v4000 = vpop.f32.mrb[0].mxu0
        %v4001 = vadd.f32 %v3960, %v4000
        %v4002 = vpop.f32.mrb[0].mxu0
        %4003 = vdwg.mxu0
        %4004 = vmatprep.subr.bf16.mxu0 0
        %4005 = vmatpush1.bf16.msra.mxu0 %v3598
        %4006 = vmatprep.subr.bf16.mxu0 0
        %4007 = vmatpush1.bf16.msra.mxu0 %v3599
        %4008 = vmatprep.subr.bf16.mxu0 0
        %4009 = vmatpush1.bf16.msra.mxu0 %v3600
        %4010 = vmatprep.subr.bf16.mxu0 0
        %4011 = vmatpush1.bf16.msra.mxu0 %v3601
        %4012 = vmatprep.subr.bf16.mxu0 0
        %4013 = vmatpush1.bf16.msra.mxu0 %v3602
        %4014 = vmatprep.subr.bf16.mxu0 0
        %4015 = vmatpush1.bf16.msra.mxu0 %v3603
        %4016 = vmatprep.subr.bf16.mxu0 0
        %4017 = vmatpush1.bf16.msra.mxu0 %v3604
        %4018 = vmatprep.subr.bf16.mxu0 0
        %4019 = vmatpush1.bf16.msra.mxu0 %v3605
        %4020 = vmatprep.subr.bf16.mxu0 0
        %4021 = vmatpush1.bf16.msra.mxu0 %v3606
        %4022 = vmatprep.subr.bf16.mxu0 0
        %4023 = vmatpush1.bf16.msra.mxu0 %v3607
        %4024 = vmatprep.subr.bf16.mxu0 0
        %4025 = vmatpush1.bf16.msra.mxu0 %v3608
        %4026 = vmatprep.subr.bf16.mxu0 0
        %4027 = vmatpush1.bf16.msra.mxu0 %v3609
        %4028 = vmatprep.subr.bf16.mxu0 0
        %4029 = vmatpush1.bf16.msra.mxu0 %v3610
        %4030 = vmatprep.subr.bf16.mxu0 0
        %4031 = vmatpush1.bf16.msra.mxu0 %v3611
        %4032 = vmatprep.subr.bf16.mxu0 0
        %4033 = vmatpush1.bf16.msra.mxu0 %v3612
        %4034 = vmatprep.subr.bf16.mxu0 0
        %4035 = vmatpush1.bf16.msra.mxu0 %v3613
        %4036 = vmatprep.mubr.bf16.mxu0 %v2724
        %4037 = vmatmul.mubr.bf16.gmra.mrb[0].mxu0 %v2723
        %v4038 = vpop.f32.mrb[0].mxu0
        %v4039 = vadd.f32 %v3998, %v4038
        %v4040 = vpop.f32.mrb[0].mxu0
        %v4041 = vpop.f32.mrb[0].mxu0
        %v4042 = vadd.f32 %v4001, %v4041
        %v4043 = vpop.f32.mrb[0].mxu0
        %4044 = vdwg.mxu0
        %4045 = vmatprep.subr.bf16.mxu0 0
        %4046 = vmatpush1.bf16.msra.mxu0 %v3614
        %4047 = vmatprep.subr.bf16.mxu0 0
        %4048 = vmatpush1.bf16.msra.mxu0 %v3615
        %4049 = vmatprep.subr.bf16.mxu0 0
        %4050 = vmatpush1.bf16.msra.mxu0 %v3616
        %4051 = vmatprep.subr.bf16.mxu0 0
        %4052 = vmatpush1.bf16.msra.mxu0 %v3617
        %4053 = vmatprep.subr.bf16.mxu0 0
        %4054 = vmatpush1.bf16.msra.mxu0 %v3618
        %4055 = vmatprep.subr.bf16.mxu0 0
        %4056 = vmatpush1.bf16.msra.mxu0 %v3619
        %4057 = vmatprep.subr.bf16.mxu0 0
        %4058 = vmatpush1.bf16.msra.mxu0 %v3620
        %4059 = vmatprep.subr.bf16.mxu0 0
        %4060 = vmatpush1.bf16.msra.mxu0 %v3621
        %4061 = vmatprep.subr.bf16.mxu0 0
        %4062 = vmatpush1.bf16.msra.mxu0 %v3622
        %4063 = vmatprep.subr.bf16.mxu0 0
        %4064 = vmatpush1.bf16.msra.mxu0 %v3623
        %4065 = vmatprep.subr.bf16.mxu0 0
        %4066 = vmatpush1.bf16.msra.mxu0 %v3624
        %4067 = vmatprep.subr.bf16.mxu0 0
        %4068 = vmatpush1.bf16.msra.mxu0 %v3625
        %4069 = vmatprep.subr.bf16.mxu0 0
        %4070 = vmatpush1.bf16.msra.mxu0 %v3626
        %4071 = vmatprep.subr.bf16.mxu0 0
        %4072 = vmatpush1.bf16.msra.mxu0 %v3627
        %4073 = vmatprep.subr.bf16.mxu0 0
        %4074 = vmatpush1.bf16.msra.mxu0 %v3628
        %4075 = vmatprep.subr.bf16.mxu0 0
        %4076 = vmatpush1.bf16.msra.mxu0 %v3629
        %4077 = vmatprep.mubr.bf16.mxu0 %v2726
        %4078 = vmatmul.mubr.bf16.gmra.mrb[0].mxu0 %v2725
        %v4079 = vpop.f32.mrb[0].mxu0
        %v4080 = vadd.f32 %v4039, %v4079
        %v4081 = vpop.f32.mrb[0].mxu0
        %v4082 = vpop.f32.mrb[0].mxu0
        %v4083 = vadd.f32 %v4042, %v4082
        %v4084 = vpop.f32.mrb[0].mxu0
        %4085 = vdwg.mxu0
        %v4086 = vadd.f32 %v2053, %v4080
        %v4087 = vadd.f32 %v2054, %v4083
        %v4088 = vsel %vm1056, %v4086, 0.0
        %4089 = vadd.xlane.f32.xlu0 %v4088
        %v4090 = vpop.xlane.xlu0 %4089
        %v4091 = vsel %vm1056, %v4087, 0.0
        %4092 = vadd.xlane.f32.xlu0 %v4091
        %v4093 = vpop.xlane.xlu0 %4092
        %v4094 = vmul.f32 %v4090, %v2016
        %v4095 = vmul.f32 %v4093, %v2016
        %v4096 = vsub.f32 %v4086, %v4094
        %v4097 = vsub.f32 %v4087, %v4095
        %v4098 = vmul.f32 %v4096, %v4096
        %v4099 = vmul.f32 %v4097, %v4097
        %v4100 = vsel %vm1056, %v4098, 0.0
        %4101 = vadd.xlane.f32.xlu0 %v4100
        %v4102 = vpop.xlane.xlu0 %4101
        %v4103 = vsel %vm1056, %v4099, 0.0
        %4104 = vadd.xlane.f32.xlu0 %v4103
        %v4105 = vpop.xlane.xlu0 %4104
        %v4106 = vmul.f32 %v4102, %v2016
        %v4107 = vmul.f32 %v4105, %v2016
        %v4108 = vadd.f32 %v4106, 1e-05
        %v4109 = vadd.f32 %v4107, 1e-05
        %v4110 = vrsqrt.pop %v4108
        %v4111 = vrsqrt.pop %v4109
        %v4112 = vmul.f32 %v4096, %v4110
        %v4113 = vmul.f32 %v4097, %v4111
        %v4114 = vld [vmem:[%s854] sm:$0x1]
        %v4116 = vlaneseq
        %v4117 = vshrl.u32 %v4116, 7
        %v4118 = vsub.s32 0, %v4117
        %v4119 = vrot.slane %v4114, %v4118
        %v4121 = vmul.f32 %v4112, %v4119
        %v4122 = vmul.f32 %v4113, %v4119
        %v4123 = vld [vmem:[%s857] sm:$0x1]
        %v4125 = vlaneseq
        %v4126 = vshrl.u32 %v4125, 7
        %v4127 = vsub.s32 0, %v4126
        %v4128 = vrot.slane %v4123, %v4127
        %v4130 = vadd.f32 %v4121, %v4128
        %v4131 = vadd.f32 %v4122, %v4128
        %4132 = vst.msk [vmem:[#allocation2] sm:$0xff] %vm1056, %v4130
        %4133 = vst.msk [vmem:[#allocation2 + $0x8] sm:$0xff] %vm1056, %v4131
        %p4134 = scmp.eq.s32.totalorder %s40, 1
        // Predicated region
        $region109: #{transformer_forward.1} parent=103 // pred_check
          %p4135 = pneg %p4134
        $region110: #{transformer_forward.1} parent=103 // pred_check_branch
          %4137 = sbr.rel (%p4135) target = $region112
        $region111: #{transformer_forward.1} parent=103 // pred_region
          %v4138 = vpack.c.bf16 %v4130, %v4130
          %v4139 = vld [vmem:[%s19] sm:$0xf]
          %v4140 = vld [vmem:[%s19 + $0x4] sm:$0xf]
          %v4141 = vld [vmem:[%s19 + $0x8] sm:$0xf]
          %v4142 = vld [vmem:[%s19 + $0xc] sm:$0xf]
          %v4143 = vld [vmem:[%s20] sm:$0x1]
          %v4148 = vunpack.c.l.b16 %v4139
          %v4149 = vunpack.c.l.b16 %v4140
          %v4150 = vunpack.c.l.b16 %v4141
          %v4151 = vunpack.c.l.b16 %v4142
          %v4152 = vpack.c.b16 %v4149, %v4148
          %v4153 = vpack.c.b16 %v4151, %v4150
          %v4157 = vsel %vm1056, %v4138, 0
          %4159 = vmatprep.subr.bf16.mxu0 0
          %4160 = vmatpush1.bf16.msra.mxu0 %v4152
          %4161 = vmatprep.subr.bf16.mxu0 0
          %4162 = vmatpush1.bf16.msra.mxu0 %v4153
          %4163 = vmatprep.subr.bf16.mxu0 0
          %4164 = vmatpush1.bf16.msra.mxu0 0
          %4165 = vmatprep.subr.bf16.mxu0 0
          %4166 = vmatpush1.bf16.msra.mxu0 0
          %4167 = vmatprep.subr.bf16.mxu0 0
          %4168 = vmatpush1.bf16.msra.mxu0 0
          %4169 = vmatprep.subr.bf16.mxu0 0
          %4170 = vmatpush1.bf16.msra.mxu0 0
          %4171 = vmatprep.subr.bf16.mxu0 0
          %4172 = vmatpush1.bf16.msra.mxu0 0
          %4173 = vmatprep.subr.bf16.mxu0 0
          %4174 = vmatpush1.bf16.msra.mxu0 0
          %4175 = vmatprep.subr.bf16.mxu0 0
          %4176 = vmatpush1.bf16.msra.mxu0 0
          %4177 = vmatprep.subr.bf16.mxu0 0
          %4178 = vmatpush1.bf16.msra.mxu0 0
          %4179 = vmatprep.subr.bf16.mxu0 0
          %4180 = vmatpush1.bf16.msra.mxu0 0
          %4181 = vmatprep.subr.bf16.mxu0 0
          %4182 = vmatpush1.bf16.msra.mxu0 0
          %4183 = vmatprep.subr.bf16.mxu0 0
          %4184 = vmatpush1.bf16.msra.mxu0 0
          %4185 = vmatprep.subr.bf16.mxu0 0
          %4186 = vmatpush1.bf16.msra.mxu0 0
          %4187 = vmatprep.subr.bf16.mxu0 0
          %4188 = vmatpush1.bf16.msra.mxu0 0
          %4189 = vmatprep.subr.bf16.mxu0 0
          %4190 = vmatpush1.bf16.msra.mxu0 0
          %4191 = vmatprep.mubr.bf16.mxu0 0
          %4192 = vmatmul.mubr.bf16.gmra.mrb[0].mxu0 %v4157
          %v4193 = vpop.f32.mrb[0].mxu0
          %v4194 = vadd.f32 %v4143, %v4193
          %v4195 = vpop.f32.mrb[0].mxu0
          %v4196 = vpop.f32.mrb[0].mxu0
          %v4197 = vpop.f32.mrb[0].mxu0
          %4198 = vdwg.mxu0
          %vm4199 = vcmask 32768
          %4200 = vst.msk [vmem:[%s808] sm:$0x1] %vm4199, %v4194
        $region112: #{transformer_forward.1} parent=103 // pred_fallthru
          _
        %s4201 = sand.u32 %s561, 1
        %s4202 = scalar_lea.sflag [#allocation4], %s4201
        %s4203 = sand.u32 %s561, 1
        %s4204 = scalar_lea.vmem [#allocation3], %s4203
        // Predicated region
        $region113: #{transformer_forward.1} parent=103 // pred_check
          %p4205 = pneg %p571
        $region114: #{transformer_forward.1} parent=103 // pred_check_branch
          %4207 = sbr.rel (%p4205) target = $region116
        $region115: #{transformer_forward.1} parent=103 // pred_region
          %s4209 = ssub.s32 16, 16
          %4210 = vsyncadd %s4202, %s4209
          %s4211 = smul.addr %s39, 16
          %s4212 = scalar_lea.hbm %s21, %s4211
          %s4214 = sshll.u32 %s4204, 4
          %s4215 = int_to_ptr.vmem [resolvable:$true] %s4214
          %4217 = dma.vmem_to_hbm [thread:$0]  %s4215, 16, %s4212, %s4202
        $region116: #{transformer_forward.1} parent=103 // pred_fallthru
          _
      $region104: #{transformer_forward.1} parent=5 // pred_fallthru
        _
      %p4218 = scmp.le.s32.totalorder 2, %s30
      // Predicated region
      $region117: #{transformer_forward.1} parent=5 // pred_check
        %p4219 = pneg %p4218
      $region118: #{transformer_forward.1} parent=5 // pred_check_branch
        %4221 = sbr.rel (%p4219) target = $region120
      $region119: #{transformer_forward.1} parent=5 // pred_region
        %s4222 = ssub.s32 %s30, 2
        // Predicated region
        $region121: #{transformer_forward.1} parent=119 // pred_check
          %p4223 = pneg %p577
        $region122: #{transformer_forward.1} parent=119 // pred_check_branch
          %4225 = sbr.rel (%p4223) target = $region124
        $region123: #{transformer_forward.1} parent=119 // pred_region
          %s4226 = sand.u32 %s562, 1
          %s4227 = scalar_lea.sflag [#allocation4], %s4226
          %s4228 = sand.u32 %s562, 1
          %s4229 = scalar_lea.vmem [#allocation3], %s4228
          %4230 = dma.done %s4227, 16
        $region124: #{transformer_forward.1} parent=119 // pred_fallthru
          _
      $region120: #{transformer_forward.1} parent=5 // pred_fallthru
        _
    $region6: #{transformer_forward.1} parent=1 // loop_footer
      %s34 = sadd.s32 1, %s30
    $region7: #{transformer_forward.1} parent=1 // loop_footer_branch
      %29 = sbr.rel target = $region3
    $region8: #{transformer_forward.1} parent=1 // loop_exit
      _
    %4231 = vsyncpa [#allocation4], 1
    %s4232 = scalar_lea.sflag [#allocation4], 1
    %4233 = vsyncpa %s4232, 1

</llo_original>
